<compile_context>
chip_gen: v6e
topology: v6e:2x2x1
jax: 0.10.0
libtpu: 0.0.40
codegen_flags: <defaults>
</compile_context>

<pallas_src>
import jax
import jax.numpy as jnp
import numpy as np
from jax import lax
from jax.experimental import pallas as pl
from jax.experimental.pallas import tpu as pltpu

EPS = 1e-5
SLOPE = 0.01  # InPlaceABNSync default activation: leaky_relu(slope=0.01)

_LANE = 128


# ---------------- fused Pallas kernel ----------------

def _bottleneck_kernel(x_top_ref, x_c_ref, x_bot_ref,
                       w1_ref, b1_ref, w2_ref, b2_ref, w3_ref, b3_ref,
                       o_ref, t1p_ref, slab_ref):
    """Fused bottleneck on one (TH, W) row-tile of one image.

    t1p_ref scratch holds conv1 output for TH+2 rows (row halo) zero-padded by
    one column on each side of W.  conv2 is done by building an im2col slab
    (TH*W, 9*planes) in slab_ref and doing ONE matmul with K = 9*planes.
    BN is already folded into weights/biases.
    """
    TH, W, cin = x_c_ref.shape
    planes = w1_ref.shape[1]
    out_c = w3_ref.shape[1]
    cdt = t1p_ref.dtype                 # matmul-input dtype (bf16 fast path)

    ti = pl.program_id(1)
    nt = pl.num_programs(1)

    # ---- conv1 (1x1) + folded bn1 + ReLU: center + both halo rows, ONE matmul ----
    rows = jnp.concatenate([x_top_ref[...], x_c_ref[...], x_bot_ref[...]], axis=0)
    y1 = jnp.dot(rows.reshape((TH + 2) * W, cin).astype(cdt), w1_ref[...],
                 preferred_element_type=jnp.float32)
    t1 = jnp.maximum(y1 + b1_ref[...], 0.0).astype(cdt)   # leaky(0.01) -> ReLU == ReLU
    t1p_ref[:, 1:W + 1, :] = t1.reshape(TH + 2, W, planes)

    # Zero the W conv-padding columns every step (tiny; keeps each core's
    # persistent scratch correct under megacore grid sharding).
    zcol = jnp.zeros((TH + 2, 1, planes), cdt)
    t1p_ref[:, 0:1, :] = zcol
    t1p_ref[:, W + 1:W + 2, :] = zcol

    zrow = jnp.zeros((1, W + 2, planes), cdt)

    @pl.when(ti == 0)                 # top halo row is really zero conv padding
    def _():
        t1p_ref[0:1, :, :] = zrow

    @pl.when(ti == nt - 1)            # bottom halo row is zero conv padding
    def _():
        t1p_ref[TH + 1:TH + 2, :, :] = zrow

    # ---- conv2 (3x3, pad=1): im2col slab -> ONE wide-K matmul + bn2 + ReLU ----
    for k in range(9):                # static unroll; taps ordered (ky, kx, ci)
        dy, dx = divmod(k, 3)
        slab_ref[:, k * planes:(k + 1) * planes] = (
            t1p_ref[dy:dy + TH, dx:dx + W, :].reshape(TH * W, planes))
    y2 = jnp.dot(slab_ref[...], w2_ref[...], preferred_element_type=jnp.float32)
    y2 = jnp.maximum(y2 + b2_ref[...], 0.0).astype(cdt)

    # ---- conv3 (1x1) + folded bn3 (leaky 0.01) + residual add + ReLU ----
    y3 = jnp.dot(y2, w3_ref[...], preferred_element_type=jnp.float32) + b3_ref[...]
    y3 = jnp.where(y3 > 0, y3, SLOPE * y3)
    res = x_c_ref[...].reshape(TH * W, out_c).astype(jnp.float32)
    out = jnp.maximum(y3 + res, 0.0)
    o_ref[...] = out.reshape(TH, W, out_c).astype(o_ref.dtype)


# ---------------- wrapper ----------------

def _fold_bn(w, bn, eps=EPS):
    """Fold inference-mode BN (g, b, m, v) into conv weight + per-channel bias."""
    g, b, m, v = (p.reshape(-1).astype(jnp.float32) for p in bn)
    s = g * lax.rsqrt(v + eps)
    w_f = w.astype(jnp.float32) * s                  # scale output channels
    bias = (b - m * s).reshape(1, -1).astype(jnp.float32)
    return w_f, bias


def _pad_lane(c):
    return -(-c // _LANE) * _LANE


def _vmem_bytes(TH, W, cin, planes, out_c, in_bytes, out_bytes):
    """Rough per-step VMEM footprint: double-buffered pipelined blocks plus the
    persistent scratch, with minor dims padded to 128 lanes (Mosaic layout)."""
    x_c = 2 * TH * W * _pad_lane(cin) * in_bytes
    halo = 2 * 2 * 8 * W * _pad_lane(cin) * in_bytes        # two 1-row halos
    out = 2 * TH * W * _pad_lane(out_c) * out_bytes
    t1p = (TH + 2) * (W + 2) * _pad_lane(planes) * in_bytes
    slab = TH * W * _pad_lane(9 * planes) * in_bytes
    wts = 2 * (_pad_lane(planes) * cin + _pad_lane(planes) * 9 * planes
               + _pad_lane(out_c) * planes) * in_bytes
    return x_c + halo + out + t1p + slab + wts


def _pick_tile_height(H, W, cin, planes, out_c, in_bytes, out_bytes,
                      budget, max_rows=4096):
    """Largest divisor of H whose tile fits the VMEM budget (and ~<=4K rows/step)."""
    best = 1
    for d in range(1, H + 1):
        if H % d:
            continue
        if d * W > max(max_rows, W):
            continue
        if _vmem_bytes(d, W, cin, planes, out_c, in_bytes, out_bytes) <= budget:
            best = d
    return best


def bottleneck_forward(x_nhwc, w1, bn1, w2_hwio, bn2, w3, bn3,
                       *, compute_dtype=jnp.bfloat16, out_dtype=jnp.bfloat16):
    N, H, W, cin = x_nhwc.shape
    planes = w1.shape[1]
    out_c = w3.shape[1]
    assert cin == out_c, "downsample=None requires inplanes == planes*4"

    # Fold BN into weights/biases, cast matmul inputs to the compute dtype.
    w1f, b1 = _fold_bn(w1, bn1)
    w2f, b2 = _fold_bn(w2_hwio, bn2)
    w3f, b3 = _fold_bn(w3, bn3)
    xb = x_nhwc.astype(compute_dtype)
    w1b = w1f.astype(compute_dtype)                            # (cin, planes)
    w2b = w2f.reshape(9 * planes, planes).astype(compute_dtype)  # (ky*kx*ci, co)
    w3b = w3f.astype(compute_dtype)                            # (planes, out_c)

    in_bytes = jnp.dtype(compute_dtype).itemsize
    out_bytes = jnp.dtype(out_dtype).itemsize

    # Per-generation VMEM budget (v7x: 64 MiB total; v5e/v6e: 128 MiB).
    try:
        cap = int(getattr(pltpu.get_tpu_info(), "vmem_capacity_bytes",
                          64 * 1024 * 1024))
    except Exception:
        cap = 64 * 1024 * 1024
    vmem_limit = min(cap * 3 // 4, 100 * 1024 * 1024)
    budget = vmem_limit // 2

    TH = _pick_tile_height(H, W, cin, planes, out_c, in_bytes, out_bytes, budget)
    grid = (N, H // TH)

    def _full(shape):
        return pl.BlockSpec(shape, lambda n, i: (0,) * len(shape))

    x_c_spec = pl.BlockSpec((pl.Squeezed(), TH, W, cin),
                            lambda n, i: (n, i, 0, 0))
    # Halo rows: clamped at the image border, zeroed in-kernel (conv padding).
    x_top_spec = pl.BlockSpec((pl.Squeezed(), 1, W, cin),
                              lambda n, i: (n, jnp.maximum(i * TH - 1, 0), 0, 0))
    x_bot_spec = pl.BlockSpec((pl.Squeezed(), 1, W, cin),
                              lambda n, i: (n, jnp.minimum(i * TH + TH, H - 1), 0, 0))

    return pl.pallas_call(
        _bottleneck_kernel,
        out_shape=jax.ShapeDtypeStruct((N, H, W, out_c), out_dtype),
        grid=grid,
        in_specs=[x_top_spec, x_c_spec, x_bot_spec,
                  _full(w1b.shape), _full(b1.shape),
                  _full(w2b.shape), _full(b2.shape),
                  _full(w3b.shape), _full(b3.shape)],
        out_specs=pl.BlockSpec((pl.Squeezed(), TH, W, out_c),
                               lambda n, i: (n, i, 0, 0)),
        scratch_shapes=[pltpu.VMEM((TH + 2, W + 2, planes), compute_dtype),
                        pltpu.VMEM((TH * W, 9 * planes), compute_dtype)],
        compiler_params=pltpu.CompilerParams(
            dimension_semantics=("parallel", "parallel"),
            vmem_limit_bytes=vmem_limit),
    )(xb, xb, xb, w1b, b1, w2b, b2, w3b, b3)


# ---------------- references ----------------

def _abn_ref(y, g, b, m, v):
    """Inference BatchNorm + leaky_relu(0.01) (InPlaceABNSync), module semantics."""
    y = (y - m) * (g * lax.rsqrt(v + EPS)) + b
    return jnp.where(y > 0, y, SLOPE * y)


def bottleneck_ref(x, w1, bn1, w2_hwio, bn2, w3, bn3):
    """Pure f32 module-semantics reference (unfused BN, leaky+relu)."""
    dn = ('NHWC', 'HWIO', 'NHWC')
    hp = lax.Precision.HIGHEST
    y = lax.conv_general_dilated(x, w1.reshape(1, 1, *w1.shape), (1, 1), 'VALID',
                                 dimension_numbers=dn, precision=hp)
    y = jnp.maximum(_abn_ref(y, *bn1), 0.0)
    y = lax.conv_general_dilated(y, w2_hwio, (1, 1), ((1, 1), (1, 1)),
                                 dimension_numbers=dn, precision=hp)
    y = jnp.maximum(_abn_ref(y, *bn2), 0.0)
    y = lax.conv_general_dilated(y, w3.reshape(1, 1, *w3.shape), (1, 1), 'VALID',
                                 dimension_numbers=dn, precision=hp)
    y = _abn_ref(y, *bn3)
    return jnp.maximum(y + x, 0.0)


def bottleneck_matched_ref(x, w1b, b1, w2b_hwio, b2, w3b, b3):
    """Plain-JAX reference matching the kernel's numerics (folded bf16 weights,
    bf16 activations into each conv, f32 accumulation; f32 result)."""
    dn = ('NHWC', 'HWIO', 'NHWC')
    f32 = jnp.float32
    xb = x.astype(w1b.dtype)
    y = lax.conv_general_dilated(xb, w1b.reshape(1, 1, *w1b.shape), (1, 1), 'VALID',
                                 dimension_numbers=dn, preferred_element_type=f32)
    t1 = jnp.maximum(y + b1, 0.0).astype(w1b.dtype)
    y = lax.conv_general_dilated(t1, w2b_hwio, (1, 1), ((1, 1), (1, 1)),
                                 dimension_numbers=dn, preferred_element_type=f32)
    y2 = jnp.maximum(y + b2, 0.0).astype(w1b.dtype)
    y = lax.conv_general_dilated(y2, w3b.reshape(1, 1, *w3b.shape), (1, 1), 'VALID',
                                 dimension_numbers=dn, preferred_element_type=f32)
    y3 = y + b3
    y3 = jnp.where(y3 > 0, y3, SLOPE * y3)
    return jnp.maximum(y3 + xb.astype(f32), 0.0)


# ---------------- test ----------------

if __name__ == "__main__":
    key = jax.random.PRNGKey(0)
    N, H, W = 2, 16, 16
    inplanes, planes = 128, 32          # out = planes*4 == inplanes (downsample=None)
    out_c = planes * 4

    ks = jax.random.split(key, 8)

    def q(a):  # make inputs bf16-representable so both precisions share exact inputs
        return a.astype(jnp.bfloat16).astype(jnp.float32)

    x_nhwc = q(jax.random.normal(ks[0], (N, H, W, inplanes), jnp.float32))
    w1 = q(jax.random.normal(ks[1], (inplanes, planes), jnp.float32) * 0.2)
    w2_hwio = q(jax.random.normal(ks[2], (3, 3, planes, planes), jnp.float32) * 0.2)
    w3 = q(jax.random.normal(ks[3], (planes, out_c), jnp.float32) * 0.2)

    def bn_params(k, c):
        k1, k2, k3, k4 = jax.random.split(k, 4)
        g = jax.random.uniform(k1, (1, c), jnp.float32, 0.8, 1.2)
        b = jax.random.normal(k2, (1, c), jnp.float32) * 0.1
        m = jax.random.normal(k3, (1, c), jnp.float32) * 0.1
        v = jax.random.uniform(k4, (1, c), jnp.float32, 0.9, 1.1)
        return g, b, m, v

    bn1 = bn_params(ks[4], planes)
    bn2 = bn_params(ks[5], planes)
    bn3 = bn_params(ks[6], out_c)

    # Fused Pallas kernel (bf16 MXU inputs, f32 accumulation, bf16 output).
    out = jax.block_until_ready(
        bottleneck_forward(x_nhwc, w1, bn1, w2_hwio, bn2, w3, bn3))
    assert out.shape == (N, H, W, out_c)
    assert out.dtype == jnp.bfloat16
    out_f32 = np.asarray(out).astype(np.float32)

    # 1) Tight check vs a plain-JAX reference with matched (bf16) conv numerics;
    #    tolerance covers the final bf16 output rounding of the kernel.
    w1f, b1f = _fold_bn(w1, bn1)
    w2f, b2f = _fold_bn(w2_hwio, bn2)
    w3f, b3f = _fold_bn(w3, bn3)
    matched = jax.block_until_ready(
        bottleneck_matched_ref(x_nhwc,
                               w1f.astype(jnp.bfloat16), b1f,
                               w2f.astype(jnp.bfloat16), b2f,
                               w3f.astype(jnp.bfloat16), b3f))
    assert np.allclose(out_f32, np.asarray(matched), rtol=1e-2, atol=1e-1)

    # 2) Semantic sanity vs the pure-f32 module reference (difference is only
    #    the bf16 matmul inputs / bf16 output of the fast path).
    ref = jax.block_until_ready(bottleneck_ref(x_nhwc, w1, bn1, w2_hwio, bn2, w3, bn3))
    err = out_f32 - np.asarray(ref)
    rel_rms = float(np.sqrt(np.mean(err ** 2)) / np.sqrt(np.mean(np.asarray(ref) ** 2)))
    assert rel_rms < 2.5e-2, rel_rms

    print("KERNEL_OK")
</pallas_src>

<mosaic_0001>
module attributes {stable_mosaic.version = 11 : i64} {
  func.func @_bottleneck_kernel(%arg0: i32, %arg1: i32, %arg2: memref<1x1x16x128xbf16, #tpu.memory_space<vmem>>, %arg3: memref<1x16x16x128xbf16, #tpu.memory_space<vmem>>, %arg4: memref<1x1x16x128xbf16, #tpu.memory_space<vmem>>, %arg5: memref<128x32xbf16, #tpu.memory_space<vmem>>, %arg6: memref<1x32xf32, #tpu.memory_space<vmem>>, %arg7: memref<288x32xbf16, #tpu.memory_space<vmem>>, %arg8: memref<1x32xf32, #tpu.memory_space<vmem>>, %arg9: memref<32x128xbf16, #tpu.memory_space<vmem>>, %arg10: memref<1x128xf32, #tpu.memory_space<vmem>>, %arg11: memref<1x16x16x128xbf16, #tpu.memory_space<vmem>>, %arg12: memref<18x18x32xbf16, #tpu.memory_space<vmem>>, %arg13: memref<256x288xbf16, #tpu.memory_space<vmem>>) attributes {dimension_semantics = [#tpu.dimension_semantics<parallel>, #tpu.dimension_semantics<parallel>], iteration_bounds = array<i64: 2, 1>, scalar_prefetch = 0 : i64, scratch_operands = 2 : i64, tpu.core_type = #tpu.core_type<tc>, window_params = [{transform_indices = @transform_0, window_bounds = array<i64: 1, 1, 16, 128>}, {transform_indices = @transform_1, window_bounds = array<i64: 1, 16, 16, 128>}, {transform_indices = @transform_2, window_bounds = array<i64: 1, 1, 16, 128>}, {pipeline_mode = #tpu.pipeline_mode<synchronous>, transform_indices = @transform_3, window_bounds = array<i64: 128, 32>}, {pipeline_mode = #tpu.pipeline_mode<synchronous>, transform_indices = @transform_4, window_bounds = array<i64: 1, 32>}, {pipeline_mode = #tpu.pipeline_mode<synchronous>, transform_indices = @transform_5, window_bounds = array<i64: 288, 32>}, {pipeline_mode = #tpu.pipeline_mode<synchronous>, transform_indices = @transform_6, window_bounds = array<i64: 1, 32>}, {pipeline_mode = #tpu.pipeline_mode<synchronous>, transform_indices = @transform_7, window_bounds = array<i64: 32, 128>}, {pipeline_mode = #tpu.pipeline_mode<synchronous>, transform_indices = @transform_8, window_bounds = array<i64: 1, 128>}, {transform_indices = @transform_9, window_bounds = array<i64: 1, 16, 16, 128>}]} {
    %c0 = arith.constant 0 : index
    %c0_0 = arith.constant 0 : index
    %c0_1 = arith.constant 0 : index
    %c0_2 = arith.constant 0 : index
    %0 = vector.load %arg2[%c0, %c0_0, %c0_1, %c0_2] : memref<1x1x16x128xbf16, #tpu.memory_space<vmem>>, vector<1x1x16x128xbf16>
    %1 = vector.shape_cast %0 : vector<1x1x16x128xbf16> to vector<1x16x128xbf16>
    %c0_3 = arith.constant 0 : index
    %c0_4 = arith.constant 0 : index
    %c0_5 = arith.constant 0 : index
    %c0_6 = arith.constant 0 : index
    %2 = vector.load %arg3[%c0_3, %c0_4, %c0_5, %c0_6] : memref<1x16x16x128xbf16, #tpu.memory_space<vmem>>, vector<1x16x16x128xbf16>
    %3 = vector.shape_cast %2 : vector<1x16x16x128xbf16> to vector<16x16x128xbf16>
    %c0_7 = arith.constant 0 : index
    %c0_8 = arith.constant 0 : index
    %c0_9 = arith.constant 0 : index
    %c0_10 = arith.constant 0 : index
    %4 = vector.load %arg4[%c0_7, %c0_8, %c0_9, %c0_10] : memref<1x1x16x128xbf16, #tpu.memory_space<vmem>>, vector<1x1x16x128xbf16>
    %5 = vector.shape_cast %4 : vector<1x1x16x128xbf16> to vector<1x16x128xbf16>
    %6 = tpu.concatenate %1, %3, %5 in 0 : vector<1x16x128xbf16>, vector<16x16x128xbf16>, vector<1x16x128xbf16> -> vector<18x16x128xbf16>
    %7 = vector.shape_cast %6 : vector<18x16x128xbf16> to vector<288x128xbf16>
    %c0_11 = arith.constant 0 : index
    %c0_12 = arith.constant 0 : index
    %8 = vector.load %arg5[%c0_11, %c0_12] : memref<128x32xbf16, #tpu.memory_space<vmem>>, vector<128x32xbf16>
    %cst = arith.constant dense<0.000000e+00> : vector<288x32xf32>
    %9 = tpu.matmul %7, %8, %cst {dimension_numbers = #tpu.dot_dimension_numbers<[1], [0], [0], [1], [0, 0, 1, 1], [], []>} : vector<288x128xbf16>, vector<128x32xbf16>, vector<288x32xf32> -> vector<288x32xf32>
    %c0_13 = arith.constant 0 : index
    %c0_14 = arith.constant 0 : index
    %10 = vector.load %arg6[%c0_13, %c0_14] : memref<1x32xf32, #tpu.memory_space<vmem>>, vector<1x32xf32>
    %11 = vector.broadcast %10 : vector<1x32xf32> to vector<288x32xf32>
    %12 = arith.addf %9, %11 : vector<288x32xf32>
    %cst_15 = arith.constant 0.000000e+00 : f32
    %13 = vector.broadcast %cst_15 : f32 to vector<288x32xf32>
    %14 = arith.maximumf %12, %13 : vector<288x32xf32>
    %15 = arith.truncf %14 : vector<288x32xf32> to vector<288x32xbf16>
    %16 = vector.shape_cast %15 : vector<288x32xbf16> to vector<18x16x32xbf16>
    %c0_16 = arith.constant 0 : index
    %c1 = arith.constant 1 : index
    %c0_17 = arith.constant 0 : index
    %17 = vector.load %arg12[%c0_16, %c1, %c0_17] : memref<18x18x32xbf16, #tpu.memory_space<vmem>>, vector<18x16x32xbf16>
    tpu.vector_store %arg12[%c0_16, %c1, %c0_17], %16 {strides = array<i32>} : memref<18x18x32xbf16, #tpu.memory_space<vmem>>, vector<18x16x32xbf16>,
    %cst_18 = arith.constant 0.000000e+00 : bf16
    %18 = vector.broadcast %cst_18 : bf16 to vector<18x1x32xbf16>
    %c0_19 = arith.constant 0 : index
    %c0_20 = arith.constant 0 : index
    %c0_21 = arith.constant 0 : index
    %19 = vector.load %arg12[%c0_19, %c0_20, %c0_21] : memref<18x18x32xbf16, #tpu.memory_space<vmem>>, vector<18x1x32xbf16>
    tpu.vector_store %arg12[%c0_19, %c0_20, %c0_21], %18 {strides = array<i32>} : memref<18x18x32xbf16, #tpu.memory_space<vmem>>, vector<18x1x32xbf16>,
    %c0_22 = arith.constant 0 : index
    %c17 = arith.constant 17 : index
    %c0_23 = arith.constant 0 : index
    %20 = vector.load %arg12[%c0_22, %c17, %c0_23] : memref<18x18x32xbf16, #tpu.memory_space<vmem>>, vector<18x1x32xbf16>
    tpu.vector_store %arg12[%c0_22, %c17, %c0_23], %18 {strides = array<i32>} : memref<18x18x32xbf16, #tpu.memory_space<vmem>>, vector<18x1x32xbf16>,
    %cst_24 = arith.constant 0.000000e+00 : bf16
    %21 = vector.broadcast %cst_24 : bf16 to vector<1x18x32xbf16>
    %c0_i32 = arith.constant 0 : i32
    %22 = arith.cmpi eq, %arg1, %c0_i32 : i32
    %23 = arith.extui %22 : i1 to i32
    %c0_i32_25 = arith.constant 0 : i32
    %24 = arith.cmpi ne, %23, %c0_i32_25 : i32
    scf.if %24 {
      %c0_88 = arith.constant 0 : index
      %c0_89 = arith.constant 0 : index
      %c0_90 = arith.constant 0 : index
      %86 = vector.load %arg12[%c0_88, %c0_89, %c0_90] : memref<18x18x32xbf16, #tpu.memory_space<vmem>>, vector<1x18x32xbf16>
      tpu.vector_store %arg12[%c0_88, %c0_89, %c0_90], %21 {strides = array<i32>} : memref<18x18x32xbf16, #tpu.memory_space<vmem>>, vector<1x18x32xbf16>,
    } else {
    }
    %c0_i32_26 = arith.constant 0 : i32
    %25 = arith.cmpi eq, %arg1, %c0_i32_26 : i32
    %26 = arith.extui %25 : i1 to i32
    %c0_i32_27 = arith.constant 0 : i32
    %27 = arith.cmpi ne, %26, %c0_i32_27 : i32
    scf.if %27 {
      %c17_88 = arith.constant 17 : index
      %c0_89 = arith.constant 0 : index
      %c0_90 = arith.constant 0 : index
      %86 = vector.load %arg12[%c17_88, %c0_89, %c0_90] : memref<18x18x32xbf16, #tpu.memory_space<vmem>>, vector<1x18x32xbf16>
      tpu.vector_store %arg12[%c17_88, %c0_89, %c0_90], %21 {strides = array<i32>} : memref<18x18x32xbf16, #tpu.memory_space<vmem>>, vector<1x18x32xbf16>,
    } else {
    }
    %c0_28 = arith.constant 0 : index
    %c0_29 = arith.constant 0 : index
    %c0_30 = arith.constant 0 : index
    %28 = vector.load %arg12[%c0_28, %c0_29, %c0_30] : memref<18x18x32xbf16, #tpu.memory_space<vmem>>, vector<16x16x32xbf16>
    %29 = vector.shape_cast %28 : vector<16x16x32xbf16> to vector<256x32xbf16>
    %c0_31 = arith.constant 0 : index
    %c0_32 = arith.constant 0 : index
    %30 = vector.load %arg13[%c0_31, %c0_32] : memref<256x288xbf16, #tpu.memory_space<vmem>>, vector<256x32xbf16>
    tpu.vector_store %arg13[%c0_31, %c0_32], %29 {strides = array<i32>} : memref<256x288xbf16, #tpu.memory_space<vmem>>, vector<256x32xbf16>,
    %c0_33 = arith.constant 0 : index
    %c1_34 = arith.constant 1 : index
    %c0_35 = arith.constant 0 : index
    %31 = vector.load %arg12[%c0_33, %c1_34, %c0_35] : memref<18x18x32xbf16, #tpu.memory_space<vmem>>, vector<16x16x32xbf16>
    %32 = vector.shape_cast %31 : vector<16x16x32xbf16> to vector<256x32xbf16>
    %c0_36 = arith.constant 0 : index
    %c32 = arith.constant 32 : index
    %33 = vector.load %arg13[%c0_36, %c32] : memref<256x288xbf16, #tpu.memory_space<vmem>>, vector<256x32xbf16>
    tpu.vector_store %arg13[%c0_36, %c32], %32 {strides = array<i32>} : memref<256x288xbf16, #tpu.memory_space<vmem>>, vector<256x32xbf16>,
    %c0_37 = arith.constant 0 : index
    %c2 = arith.constant 2 : index
    %c0_38 = arith.constant 0 : index
    %34 = vector.load %arg12[%c0_37, %c2, %c0_38] : memref<18x18x32xbf16, #tpu.memory_space<vmem>>, vector<16x16x32xbf16>
    %35 = vector.shape_cast %34 : vector<16x16x32xbf16> to vector<256x32xbf16>
    %c0_39 = arith.constant 0 : index
    %c64 = arith.constant 64 : index
    %36 = vector.load %arg13[%c0_39, %c64] : memref<256x288xbf16, #tpu.memory_space<vmem>>, vector<256x32xbf16>
    tpu.vector_store %arg13[%c0_39, %c64], %35 {strides = array<i32>} : memref<256x288xbf16, #tpu.memory_space<vmem>>, vector<256x32xbf16>,
    %c1_40 = arith.constant 1 : index
    %c0_41 = arith.constant 0 : index
    %c0_42 = arith.constant 0 : index
    %37 = vector.load %arg12[%c1_40, %c0_41, %c0_42] : memref<18x18x32xbf16, #tpu.memory_space<vmem>>, vector<16x16x32xbf16>
    %38 = vector.shape_cast %37 : vector<16x16x32xbf16> to vector<256x32xbf16>
    %c0_43 = arith.constant 0 : index
    %c96 = arith.constant 96 : index
    %39 = vector.load %arg13[%c0_43, %c96] : memref<256x288xbf16, #tpu.memory_space<vmem>>, vector<256x32xbf16>
    tpu.vector_store %arg13[%c0_43, %c96], %38 {strides = array<i32>} : memref<256x288xbf16, #tpu.memory_space<vmem>>, vector<256x32xbf16>,
    %c1_44 = arith.constant 1 : index
    %c1_45 = arith.constant 1 : index
    %c0_46 = arith.constant 0 : index
    %40 = vector.load %arg12[%c1_44, %c1_45, %c0_46] : memref<18x18x32xbf16, #tpu.memory_space<vmem>>, vector<16x16x32xbf16>
    %41 = vector.shape_cast %40 : vector<16x16x32xbf16> to vector<256x32xbf16>
    %c0_47 = arith.constant 0 : index
    %c128 = arith.constant 128 : index
    %42 = vector.load %arg13[%c0_47, %c128] : memref<256x288xbf16, #tpu.memory_space<vmem>>, vector<256x32xbf16>
    tpu.vector_store %arg13[%c0_47, %c128], %41 {strides = array<i32>} : memref<256x288xbf16, #tpu.memory_space<vmem>>, vector<256x32xbf16>,
    %c1_48 = arith.constant 1 : index
    %c2_49 = arith.constant 2 : index
    %c0_50 = arith.constant 0 : index
    %43 = vector.load %arg12[%c1_48, %c2_49, %c0_50] : memref<18x18x32xbf16, #tpu.memory_space<vmem>>, vector<16x16x32xbf16>
    %44 = vector.shape_cast %43 : vector<16x16x32xbf16> to vector<256x32xbf16>
    %c0_51 = arith.constant 0 : index
    %c160 = arith.constant 160 : index
    %45 = vector.load %arg13[%c0_51, %c160] : memref<256x288xbf16, #tpu.memory_space<vmem>>, vector<256x32xbf16>
    tpu.vector_store %arg13[%c0_51, %c160], %44 {strides = array<i32>} : memref<256x288xbf16, #tpu.memory_space<vmem>>, vector<256x32xbf16>,
    %c2_52 = arith.constant 2 : index
    %c0_53 = arith.constant 0 : index
    %c0_54 = arith.constant 0 : index
    %46 = vector.load %arg12[%c2_52, %c0_53, %c0_54] : memref<18x18x32xbf16, #tpu.memory_space<vmem>>, vector<16x16x32xbf16>
    %47 = vector.shape_cast %46 : vector<16x16x32xbf16> to vector<256x32xbf16>
    %c0_55 = arith.constant 0 : index
    %c192 = arith.constant 192 : index
    %48 = vector.load %arg13[%c0_55, %c192] : memref<256x288xbf16, #tpu.memory_space<vmem>>, vector<256x32xbf16>
    tpu.vector_store %arg13[%c0_55, %c192], %47 {strides = array<i32>} : memref<256x288xbf16, #tpu.memory_space<vmem>>, vector<256x32xbf16>,
    %c2_56 = arith.constant 2 : index
    %c1_57 = arith.constant 1 : index
    %c0_58 = arith.constant 0 : index
    %49 = vector.load %arg12[%c2_56, %c1_57, %c0_58] : memref<18x18x32xbf16, #tpu.memory_space<vmem>>, vector<16x16x32xbf16>
    %50 = vector.shape_cast %49 : vector<16x16x32xbf16> to vector<256x32xbf16>
    %c0_59 = arith.constant 0 : index
    %c224 = arith.constant 224 : index
    %51 = vector.load %arg13[%c0_59, %c224] : memref<256x288xbf16, #tpu.memory_space<vmem>>, vector<256x32xbf16>
    tpu.vector_store %arg13[%c0_59, %c224], %50 {strides = array<i32>} : memref<256x288xbf16, #tpu.memory_space<vmem>>, vector<256x32xbf16>,
    %c2_60 = arith.constant 2 : index
    %c2_61 = arith.constant 2 : index
    %c0_62 = arith.constant 0 : index
    %52 = vector.load %arg12[%c2_60, %c2_61, %c0_62] : memref<18x18x32xbf16, #tpu.memory_space<vmem>>, vector<16x16x32xbf16>
    %53 = vector.shape_cast %52 : vector<16x16x32xbf16> to vector<256x32xbf16>
    %c0_63 = arith.constant 0 : index
    %c256 = arith.constant 256 : index
    %54 = vector.load %arg13[%c0_63, %c256] : memref<256x288xbf16, #tpu.memory_space<vmem>>, vector<256x32xbf16>
    tpu.vector_store %arg13[%c0_63, %c256], %53 {strides = array<i32>} : memref<256x288xbf16, #tpu.memory_space<vmem>>, vector<256x32xbf16>,
    %c0_64 = arith.constant 0 : index
    %c0_65 = arith.constant 0 : index
    %55 = vector.load %arg13[%c0_64, %c0_65] : memref<256x288xbf16, #tpu.memory_space<vmem>>, vector<256x288xbf16>
    %c0_66 = arith.constant 0 : index
    %c0_67 = arith.constant 0 : index
    %56 = vector.load %arg7[%c0_66, %c0_67] : memref<288x32xbf16, #tpu.memory_space<vmem>>, vector<288x32xbf16>
    %cst_68 = arith.constant dense<0.000000e+00> : vector<256x32xf32>
    %57 = tpu.matmul %55, %56, %cst_68 {dimension_numbers = #tpu.dot_dimension_numbers<[1], [0], [0], [1], [0, 0, 1, 1], [], []>} : vector<256x288xbf16>, vector<288x32xbf16>, vector<256x32xf32> -> vector<256x32xf32>
    %c0_69 = arith.constant 0 : index
    %c0_70 = arith.constant 0 : index
    %58 = vector.load %arg8[%c0_69, %c0_70] : memref<1x32xf32, #tpu.memory_space<vmem>>, vector<1x32xf32>
    %59 = vector.broadcast %58 : vector<1x32xf32> to vector<256x32xf32>
    %60 = arith.addf %57, %59 : vector<256x32xf32>
    %cst_71 = arith.constant 0.000000e+00 : f32
    %61 = vector.broadcast %cst_71 : f32 to vector<256x32xf32>
    %62 = arith.maximumf %60, %61 : vector<256x32xf32>
    %63 = arith.truncf %62 : vector<256x32xf32> to vector<256x32xbf16>
    %c0_72 = arith.constant 0 : index
    %c0_73 = arith.constant 0 : index
    %64 = vector.load %arg9[%c0_72, %c0_73] : memref<32x128xbf16, #tpu.memory_space<vmem>>, vector<32x128xbf16>
    %cst_74 = arith.constant dense<0.000000e+00> : vector<256x128xf32>
    %65 = tpu.matmul %63, %64, %cst_74 {dimension_numbers = #tpu.dot_dimension_numbers<[1], [0], [0], [1], [0, 0, 1, 1], [], []>} : vector<256x32xbf16>, vector<32x128xbf16>, vector<256x128xf32> -> vector<256x128xf32>
    %c0_75 = arith.constant 0 : index
    %c0_76 = arith.constant 0 : index
    %66 = vector.load %arg10[%c0_75, %c0_76] : memref<1x128xf32, #tpu.memory_space<vmem>>, vector<1x128xf32>
    %67 = vector.broadcast %66 : vector<1x128xf32> to vector<256x128xf32>
    %68 = arith.addf %65, %67 : vector<256x128xf32>
    %cst_77 = arith.constant 0.000000e+00 : f32
    %69 = vector.broadcast %cst_77 : f32 to vector<256x128xf32>
    %70 = arith.cmpf ogt, %68, %69 : vector<256x128xf32>
    %cst_78 = arith.constant 0.00999999977 : f32
    %71 = vector.broadcast %cst_78 : f32 to vector<256x128xf32>
    %72 = arith.mulf %71, %68 : vector<256x128xf32>
    %73 = arith.select %70, %68, %72 : vector<256x128xi1>, vector<256x128xf32>
    %c0_79 = arith.constant 0 : index
    %c0_80 = arith.constant 0 : index
    %c0_81 = arith.constant 0 : index
    %c0_82 = arith.constant 0 : index
    %74 = vector.load %arg3[%c0_79, %c0_80, %c0_81, %c0_82] : memref<1x16x16x128xbf16, #tpu.memory_space<vmem>>, vector<1x16x16x128xbf16>
    %75 = vector.shape_cast %74 : vector<1x16x16x128xbf16> to vector<16x16x128xbf16>
    %76 = vector.shape_cast %75 : vector<16x16x128xbf16> to vector<256x128xbf16>
    %77 = arith.extf %76 : vector<256x128xbf16> to vector<256x128xf32>
    %78 = arith.addf %73, %77 : vector<256x128xf32>
    %cst_83 = arith.constant 0.000000e+00 : f32
    %79 = vector.broadcast %cst_83 : f32 to vector<256x128xf32>
    %80 = arith.maximumf %78, %79 : vector<256x128xf32>
    %81 = vector.shape_cast %80 : vector<256x128xf32> to vector<16x16x128xf32>
    %82 = arith.truncf %81 : vector<16x16x128xf32> to vector<16x16x128xbf16>
    %c0_84 = arith.constant 0 : index
    %c0_85 = arith.constant 0 : index
    %c0_86 = arith.constant 0 : index
    %c0_87 = arith.constant 0 : index
    %83 = vector.load %arg11[%c0_84, %c0_85, %c0_86, %c0_87] : memref<1x16x16x128xbf16, #tpu.memory_space<vmem>>, vector<1x16x16x128xbf16>
    %84 = vector.shape_cast %83 : vector<1x16x16x128xbf16> to vector<16x16x128xbf16>
    %85 = vector.shape_cast %82 : vector<16x16x128xbf16> to vector<1x16x16x128xbf16>
    tpu.vector_store %arg11[%c0_84, %c0_85, %c0_86, %c0_87], %85 {strides = array<i32>} : memref<1x16x16x128xbf16, #tpu.memory_space<vmem>>, vector<1x16x16x128xbf16>,
    return
  }
  func.func @transform_0(%arg0: i32, %arg1: i32) -> (i32, i32, i32, i32) {
    %c16_i32 = arith.constant 16 : i32
    %0 = arith.muli %arg1, %c16_i32 : i32
    %c1_i32 = arith.constant 1 : i32
    %1 = arith.subi %0, %c1_i32 : i32
    %c0_i32 = arith.constant 0 : i32
    %2 = arith.maxsi %1, %c0_i32 : i32
    %c0_i32_0 = arith.constant 0 : i32
    %c0_i32_1 = arith.constant 0 : i32
    %c0_i32_2 = arith.constant 0 : i32
    return %arg0, %2, %c0_i32_0, %c0_i32_1 : i32, i32, i32, i32
  }
  func.func @transform_1(%arg0: i32, %arg1: i32) -> (i32, i32, i32, i32) {
    %c0_i32 = arith.constant 0 : i32
    %c0_i32_0 = arith.constant 0 : i32
    %c0_i32_1 = arith.constant 0 : i32
    return %arg0, %arg1, %c0_i32, %c0_i32_0 : i32, i32, i32, i32
  }
  func.func @transform_2(%arg0: i32, %arg1: i32) -> (i32, i32, i32, i32) {
    %c16_i32 = arith.constant 16 : i32
    %0 = arith.muli %arg1, %c16_i32 : i32
    %c16_i32_0 = arith.constant 16 : i32
    %1 = arith.addi %0, %c16_i32_0 : i32
    %c15_i32 = arith.constant 15 : i32
    %2 = arith.minsi %1, %c15_i32 : i32
    %c0_i32 = arith.constant 0 : i32
    %c0_i32_1 = arith.constant 0 : i32
    %c0_i32_2 = arith.constant 0 : i32
    return %arg0, %2, %c0_i32, %c0_i32_1 : i32, i32, i32, i32
  }
  func.func @transform_3(%arg0: i32, %arg1: i32) -> (i32, i32) {
    %c0_i32 = arith.constant 0 : i32
    %c0_i32_0 = arith.constant 0 : i32
    %c0_i32_1 = arith.constant 0 : i32
    return %c0_i32, %c0_i32_0 : i32, i32
  }
  func.func @transform_4(%arg0: i32, %arg1: i32) -> (i32, i32) {
    %c0_i32 = arith.constant 0 : i32
    %c0_i32_0 = arith.constant 0 : i32
    %c0_i32_1 = arith.constant 0 : i32
    return %c0_i32, %c0_i32_0 : i32, i32
  }
  func.func @transform_5(%arg0: i32, %arg1: i32) -> (i32, i32) {
    %c0_i32 = arith.constant 0 : i32
    %c0_i32_0 = arith.constant 0 : i32
    %c0_i32_1 = arith.constant 0 : i32
    return %c0_i32, %c0_i32_0 : i32, i32
  }
  func.func @transform_6(%arg0: i32, %arg1: i32) -> (i32, i32) {
    %c0_i32 = arith.constant 0 : i32
    %c0_i32_0 = arith.constant 0 : i32
    %c0_i32_1 = arith.constant 0 : i32
    return %c0_i32, %c0_i32_0 : i32, i32
  }
  func.func @transform_7(%arg0: i32, %arg1: i32) -> (i32, i32) {
    %c0_i32 = arith.constant 0 : i32
    %c0_i32_0 = arith.constant 0 : i32
    %c0_i32_1 = arith.constant 0 : i32
    return %c0_i32, %c0_i32_0 : i32, i32
  }
  func.func @transform_8(%arg0: i32, %arg1: i32) -> (i32, i32) {
    %c0_i32 = arith.constant 0 : i32
    %c0_i32_0 = arith.constant 0 : i32
    %c0_i32_1 = arith.constant 0 : i32
    return %c0_i32, %c0_i32_0 : i32, i32
  }
  func.func @transform_9(%arg0: i32, %arg1: i32) -> (i32, i32, i32, i32) {
    %c0_i32 = arith.constant 0 : i32
    %c0_i32_0 = arith.constant 0 : i32
    %c0_i32_1 = arith.constant 0 : i32
    return %arg0, %arg1, %c0_i32, %c0_i32_0 : i32, i32, i32, i32
  }
}

</mosaic_0001>

<llo_original>
// kernel: tpu_custom_call.1
$region0: #{tpu_custom_call.1}
  #allocation0 [shape = 'u32[]', space=smem, size = 0x4, offset = 0x4, fixed_abs, tag = 'smem constant byte address 0x4 - core index']
  #allocation1 [shape = 'u32[144,128]{1,0:T(1,128)}', space=vmem, size = 0x12000, scoped, tag = 'internal scratch']
  #allocation2 [shape = 'bf16[18,18,32]{2,1,0:T(8,128)(2,1)}', space=vmem, size = 0x1b000, scoped, tag = 'scratch operand']
  #allocation3 [shape = 'bf16[256,288]{1,0:T(8,128)(2,1)}', space=vmem, size = 0x30000, scoped, tag = 'scratch operand']
  %s0 = inlined_call_operand.vmem [shape: bf16[2,16,16,128], index: 0, kind: input, shape index: {}]
  %s1 = inlined_call_operand.hbm [shape: bf16[2,16,16,128], index: 1, kind: input, shape index: {}]
  %s2 = inlined_call_operand.hbm [shape: bf16[2,16,16,128], index: 2, kind: input, shape index: {}]
  %s3 = inlined_call_operand.vmem [shape: bf16[128,32], index: 3, kind: input, shape index: {}]
  %s4 = inlined_call_operand.vmem [shape: f32[1,32], index: 4, kind: input, shape index: {}]
  %s5 = inlined_call_operand.vmem [shape: bf16[288,32], index: 5, kind: input, shape index: {}]
  %s6 = inlined_call_operand.vmem [shape: f32[1,32], index: 6, kind: input, shape index: {}]
  %s7 = inlined_call_operand.vmem [shape: bf16[32,128], index: 7, kind: input, shape index: {}]
  %s8 = inlined_call_operand.vmem [shape: f32[1,128], index: 8, kind: input, shape index: {}]
  %s9 = inlined_call_operand.hbm [shape: bf16[2,16,16,128], index: 9, kind: output, shape index: {}]
  %s10 = sld [smem:[#allocation0]]
  $region81: #{tpu_custom_call.1} parent=0
    _
  %s12 = ssub.s32 1, %s10
  %s13 = scalar_select 0, %s12, %s10
  $region1: #{tpu_custom_call.1} parent=0
    #allocation4 [shape = 'u8[131072]{0}', space=vmem, size = 0x20000, scoped, tag = 'input window, operand 1']
    #allocation5 [shape = 's32[2]{0}', space=sflag, size = 0x8, scoped, tag = 'scoped memory for tpu_custom_call.1']
    #allocation6 [shape = 's32[2]{0}', space=sflag, size = 0x8, scoped, tag = 'scoped memory for tpu_custom_call.1']
    #allocation7 [shape = 'u8[8192]{0}', space=vmem, size = 0x2000, scoped, tag = 'input window, operand 2']
    #allocation8 [shape = 's32[2]{0}', space=sflag, size = 0x8, scoped, tag = 'scoped memory for tpu_custom_call.1']
    #allocation9 [shape = 'u8[131072]{0}', space=vmem, size = 0x20000, scoped, tag = 'output window, operand 0']
    %14 = vsyncpa [#allocation5], 0
    %s15 = scalar_lea.sflag [#allocation5], 1
    %16 = vsyncpa %s15, 0
    %17 = vsyncpa [#allocation8], 0
    %s18 = scalar_lea.sflag [#allocation8], 1
    %19 = vsyncpa %s18, 0
    %20 = vsyncpa [#allocation6], 0
    %s21 = scalar_lea.sflag [#allocation6], 1
    %22 = vsyncpa %s21, 0
    loop: start=0, step=1, limit=4
    $region2: #{tpu_custom_call.1} parent=1 // loop_pre_header
      _
    $region3: #{tpu_custom_call.1} parent=1 // loop_header
      %s24 = sphi 0, %s28
      %p25 = scmp.ge.s32.totalorder %s24, 4
      %s31 = sphi 0, %s43
      %s32 = sphi 0, %s39
      %s33 = sphi 0, %s31
      %s34 = sphi 0, %s32
      %s35 = sphi 0, %s33
      %s36 = sphi 0, %s34
      %s56 = sphi 0, %s58
      %s59 = sphi 0, %s56
      %s60 = sphi 0, %s59
      %s76 = sphi 0, %s60
      %s84 = sphi 0, %s86
      %s87 = sphi 0, %s84
      %s88 = sphi 0, %s87
      %s104 = sphi 0, %s88
      %s120 = sphi 0, %s122
      %s123 = sphi 0, %s120
      %s124 = sphi 0, %s123
      %s140 = sphi 0, %s124
      %s144 = sphi 0, %s144
      %s146 = sphi 0, %s144
      %s147 = sphi 0, %s146
      %s161 = sphi 0, %s147
      %s165 = sphi 0, %s165
      %s167 = sphi 0, %s165
      %s168 = sphi 0, %s167
      %s182 = sphi 0, %s168
      %s186 = sphi 0, %s186
      %s188 = sphi 0, %s186
      %s189 = sphi 0, %s188
      %s203 = sphi 0, %s189
      %s207 = sphi 0, %s207
      %s209 = sphi 0, %s207
      %s210 = sphi 0, %s209
      %s224 = sphi 0, %s210
      %s228 = sphi 0, %s228
      %s230 = sphi 0, %s228
      %s231 = sphi 0, %s230
      %s245 = sphi 0, %s231
      %s249 = sphi 0, %s249
      %s251 = sphi 0, %s249
      %s252 = sphi 0, %s251
      %s266 = sphi 0, %s252
      %s274 = sphi 0, %s276
      %s277 = sphi 0, %s274
      %s278 = sphi 0, %s277
      %s294 = sphi 0, %s278
    $region4: #{tpu_custom_call.1} parent=1 // loop_header_branch
      %27 = sbr.rel (%p25) target = $region8
    $region5: #{tpu_custom_call.1} parent=1 // loop_body
      %s29 = ssub.s32 %s24, 1
      %s30 = ssub.s32 %s24, 2
      %s37 = sadd.s32 1, %s32
      %p38 = scmp.ge.s32.totalorder %s37, 1
      %s39 = scalar_select %p38, 0, %s37
      %s40 = sadd.s32 1, %s31
      %s41 = scalar_select %p38, %s40, %s31
      %p42 = scmp.ge.s32.totalorder %s41, 2
      %s43 = scalar_select %p42, 0, %s41
      %s44 = smul.u32 %s32, 16
      %s45 = ssub.s32 %s44, 1
      %p46 = scmp.gt.s32.totalorder %s45, 0
      %s47 = scalar_select %p46, %s45, 0
      %s48 = smul.u32 %s39, 16
      %s49 = ssub.s32 %s48, 1
      %p50 = scmp.gt.s32.totalorder %s49, 0
      %s51 = scalar_select %p50, %s49, 0
      %s52 = ssub.s32 %s31, %s43
      %s53 = ssub.s32 %s47, %s51
      %s54 = sor.u32 %s52, %s53
      %p55 = scmp.eq.s32.totalorder %s54, 0
      %s57 = sadd.s32 %s56, 1
      %s58 = scalar_select %p55, %s56, %s57
      %p61 = pneg %p55
      %p62 = scmp.eq.s32.totalorder %s24, 1
      %p63 = por %p61, %p62
      %p64 = scmp.ne.s32.totalorder %s56, %s59
      %p65 = scmp.eq.s32.totalorder %s24, 0
      %p66 = por %p64, %p65
      %p67 = scmp.ne.s32.totalorder %s56, %s59
      %p68 = scmp.eq.s32.totalorder %s29, 1
      %p69 = por %p67, %p68
      %p70 = scmp.ne.s32.totalorder %s59, %s60
      %p71 = scmp.eq.s32.totalorder %s29, 0
      %p72 = por %p70, %p71
      %p73 = scmp.ne.s32.totalorder %s59, %s60
      %p74 = scmp.eq.s32.totalorder %s30, 1
      %p75 = por %p73, %p74
      %p77 = scmp.ne.s32.totalorder %s60, %s76
      %p78 = scmp.eq.s32.totalorder %s30, 0
      %p79 = por %p77, %p78
      %s80 = ssub.s32 %s31, %s43
      %s81 = ssub.s32 %s32, %s39
      %s82 = sor.u32 %s80, %s81
      %p83 = scmp.eq.s32.totalorder %s82, 0
      %s85 = sadd.s32 %s84, 1
      %s86 = scalar_select %p83, %s84, %s85
      %p89 = pneg %p83
      %p90 = scmp.eq.s32.totalorder %s24, 1
      %p91 = por %p89, %p90
      %p92 = scmp.ne.s32.totalorder %s84, %s87
      %p93 = scmp.eq.s32.totalorder %s24, 0
      %p94 = por %p92, %p93
      %p95 = scmp.ne.s32.totalorder %s84, %s87
      %p96 = scmp.eq.s32.totalorder %s29, 1
      %p97 = por %p95, %p96
      %p98 = scmp.ne.s32.totalorder %s87, %s88
      %p99 = scmp.eq.s32.totalorder %s29, 0
      %p100 = por %p98, %p99
      %p101 = scmp.ne.s32.totalorder %s87, %s88
      %p102 = scmp.eq.s32.totalorder %s30, 1
      %p103 = por %p101, %p102
      %p105 = scmp.ne.s32.totalorder %s88, %s104
      %p106 = scmp.eq.s32.totalorder %s30, 0
      %p107 = por %p105, %p106
      %s108 = smul.u32 %s32, 16
      %s109 = sadd.s32 %s108, 16
      %p110 = scmp.lt.s32.totalorder %s109, 15
      %s111 = scalar_select %p110, %s109, 15
      %s112 = smul.u32 %s39, 16
      %s113 = sadd.s32 %s112, 16
      %p114 = scmp.lt.s32.totalorder %s113, 15
      %s115 = scalar_select %p114, %s113, 15
      %s116 = ssub.s32 %s31, %s43
      %s117 = ssub.s32 %s111, %s115
      %s118 = sor.u32 %s116, %s117
      %p119 = scmp.eq.s32.totalorder %s118, 0
      %s121 = sadd.s32 %s120, 1
      %s122 = scalar_select %p119, %s120, %s121
      %p125 = pneg %p119
      %p126 = scmp.eq.s32.totalorder %s24, 1
      %p127 = por %p125, %p126
      %p128 = scmp.ne.s32.totalorder %s120, %s123
      %p129 = scmp.eq.s32.totalorder %s24, 0
      %p130 = por %p128, %p129
      %p131 = scmp.ne.s32.totalorder %s120, %s123
      %p132 = scmp.eq.s32.totalorder %s29, 1
      %p133 = por %p131, %p132
      %p134 = scmp.ne.s32.totalorder %s123, %s124
      %p135 = scmp.eq.s32.totalorder %s29, 0
      %p136 = por %p134, %p135
      %p137 = scmp.ne.s32.totalorder %s123, %s124
      %p138 = scmp.eq.s32.totalorder %s30, 1
      %p139 = por %p137, %p138
      %p141 = scmp.ne.s32.totalorder %s124, %s140
      %p142 = scmp.eq.s32.totalorder %s30, 0
      %p143 = por %p141, %p142
      %s145 = sadd.s32 %s144, 1
      %p148 = scmp.eq.s32.totalorder %s24, 1
      %p149 = scmp.ne.s32.totalorder %s144, %s146
      %p150 = scmp.eq.s32.totalorder %s24, 0
      %p151 = por %p149, %p150
      %p152 = scmp.ne.s32.totalorder %s144, %s146
      %p153 = scmp.eq.s32.totalorder %s29, 1
      %p154 = por %p152, %p153
      %p155 = scmp.ne.s32.totalorder %s146, %s147
      %p156 = scmp.eq.s32.totalorder %s29, 0
      %p157 = por %p155, %p156
      %p158 = scmp.ne.s32.totalorder %s146, %s147
      %p159 = scmp.eq.s32.totalorder %s30, 1
      %p160 = por %p158, %p159
      %p162 = scmp.ne.s32.totalorder %s147, %s161
      %p163 = scmp.eq.s32.totalorder %s30, 0
      %p164 = por %p162, %p163
      %s166 = sadd.s32 %s165, 1
      %p169 = scmp.eq.s32.totalorder %s24, 1
      %p170 = scmp.ne.s32.totalorder %s165, %s167
      %p171 = scmp.eq.s32.totalorder %s24, 0
      %p172 = por %p170, %p171
      %p173 = scmp.ne.s32.totalorder %s165, %s167
      %p174 = scmp.eq.s32.totalorder %s29, 1
      %p175 = por %p173, %p174
      %p176 = scmp.ne.s32.totalorder %s167, %s168
      %p177 = scmp.eq.s32.totalorder %s29, 0
      %p178 = por %p176, %p177
      %p179 = scmp.ne.s32.totalorder %s167, %s168
      %p180 = scmp.eq.s32.totalorder %s30, 1
      %p181 = por %p179, %p180
      %p183 = scmp.ne.s32.totalorder %s168, %s182
      %p184 = scmp.eq.s32.totalorder %s30, 0
      %p185 = por %p183, %p184
      %s187 = sadd.s32 %s186, 1
      %p190 = scmp.eq.s32.totalorder %s24, 1
      %p191 = scmp.ne.s32.totalorder %s186, %s188
      %p192 = scmp.eq.s32.totalorder %s24, 0
      %p193 = por %p191, %p192
      %p194 = scmp.ne.s32.totalorder %s186, %s188
      %p195 = scmp.eq.s32.totalorder %s29, 1
      %p196 = por %p194, %p195
      %p197 = scmp.ne.s32.totalorder %s188, %s189
      %p198 = scmp.eq.s32.totalorder %s29, 0
      %p199 = por %p197, %p198
      %p200 = scmp.ne.s32.totalorder %s188, %s189
      %p201 = scmp.eq.s32.totalorder %s30, 1
      %p202 = por %p200, %p201
      %p204 = scmp.ne.s32.totalorder %s189, %s203
      %p205 = scmp.eq.s32.totalorder %s30, 0
      %p206 = por %p204, %p205
      %s208 = sadd.s32 %s207, 1
      %p211 = scmp.eq.s32.totalorder %s24, 1
      %p212 = scmp.ne.s32.totalorder %s207, %s209
      %p213 = scmp.eq.s32.totalorder %s24, 0
      %p214 = por %p212, %p213
      %p215 = scmp.ne.s32.totalorder %s207, %s209
      %p216 = scmp.eq.s32.totalorder %s29, 1
      %p217 = por %p215, %p216
      %p218 = scmp.ne.s32.totalorder %s209, %s210
      %p219 = scmp.eq.s32.totalorder %s29, 0
      %p220 = por %p218, %p219
      %p221 = scmp.ne.s32.totalorder %s209, %s210
      %p222 = scmp.eq.s32.totalorder %s30, 1
      %p223 = por %p221, %p222
      %p225 = scmp.ne.s32.totalorder %s210, %s224
      %p226 = scmp.eq.s32.totalorder %s30, 0
      %p227 = por %p225, %p226
      %s229 = sadd.s32 %s228, 1
      %p232 = scmp.eq.s32.totalorder %s24, 1
      %p233 = scmp.ne.s32.totalorder %s228, %s230
      %p234 = scmp.eq.s32.totalorder %s24, 0
      %p235 = por %p233, %p234
      %p236 = scmp.ne.s32.totalorder %s228, %s230
      %p237 = scmp.eq.s32.totalorder %s29, 1
      %p238 = por %p236, %p237
      %p239 = scmp.ne.s32.totalorder %s230, %s231
      %p240 = scmp.eq.s32.totalorder %s29, 0
      %p241 = por %p239, %p240
      %p242 = scmp.ne.s32.totalorder %s230, %s231
      %p243 = scmp.eq.s32.totalorder %s30, 1
      %p244 = por %p242, %p243
      %p246 = scmp.ne.s32.totalorder %s231, %s245
      %p247 = scmp.eq.s32.totalorder %s30, 0
      %p248 = por %p246, %p247
      %s250 = sadd.s32 %s249, 1
      %p253 = scmp.eq.s32.totalorder %s24, 1
      %p254 = scmp.ne.s32.totalorder %s249, %s251
      %p255 = scmp.eq.s32.totalorder %s24, 0
      %p256 = por %p254, %p255
      %p257 = scmp.ne.s32.totalorder %s249, %s251
      %p258 = scmp.eq.s32.totalorder %s29, 1
      %p259 = por %p257, %p258
      %p260 = scmp.ne.s32.totalorder %s251, %s252
      %p261 = scmp.eq.s32.totalorder %s29, 0
      %p262 = por %p260, %p261
      %p263 = scmp.ne.s32.totalorder %s251, %s252
      %p264 = scmp.eq.s32.totalorder %s30, 1
      %p265 = por %p263, %p264
      %p267 = scmp.ne.s32.totalorder %s252, %s266
      %p268 = scmp.eq.s32.totalorder %s30, 0
      %p269 = por %p267, %p268
      %s270 = ssub.s32 %s31, %s43
      %s271 = ssub.s32 %s32, %s39
      %s272 = sor.u32 %s270, %s271
      %p273 = scmp.eq.s32.totalorder %s272, 0
      %s275 = sadd.s32 %s274, 1
      %s276 = scalar_select %p273, %s274, %s275
      %p279 = pneg %p273
      %p280 = scmp.eq.s32.totalorder %s24, 1
      %p281 = por %p279, %p280
      %p282 = scmp.ne.s32.totalorder %s274, %s277
      %p283 = scmp.eq.s32.totalorder %s24, 0
      %p284 = por %p282, %p283
      %p285 = scmp.ne.s32.totalorder %s274, %s277
      %p286 = scmp.eq.s32.totalorder %s29, 1
      %p287 = por %p285, %p286
      %p288 = scmp.ne.s32.totalorder %s277, %s278
      %p289 = scmp.eq.s32.totalorder %s29, 0
      %p290 = por %p288, %p289
      %p291 = scmp.ne.s32.totalorder %s277, %s278
      %p292 = scmp.eq.s32.totalorder %s30, 1
      %p293 = por %p291, %p292
      %p295 = scmp.ne.s32.totalorder %s278, %s294
      %p296 = scmp.eq.s32.totalorder %s30, 0
      %p297 = por %p295, %p296
      %p298 = scmp.le.s32.totalorder 1, %s24
      %p299 = scmp.lt.s32.totalorder %s24, 3
      %p300 = pnand %p298, %p299
      %p301 = pneg %p300
      // Predicated region
      $region9: #{tpu_custom_call.1} parent=5 // pred_check
        _
      $region10: #{tpu_custom_call.1} parent=5 // pred_check_branch
        %303 = sbr.rel (%p300) target = $region12
      $region11: #{tpu_custom_call.1} parent=5 // pred_region
        %s304 = ssub.s32 %s24, 1
        // Predicated region
        $region13: #{tpu_custom_call.1} parent=11 // pred_check
          %p305 = pneg %p157
        $region14: #{tpu_custom_call.1} parent=11 // pred_check_branch
          %307 = sbr.rel (%p305) target = $region16
        $region15: #{tpu_custom_call.1} parent=11 // pred_region
          _
        $region16: #{tpu_custom_call.1} parent=11 // pred_fallthru
          _
        // Predicated region
        $region17: #{tpu_custom_call.1} parent=11 // pred_check
          %p308 = pneg %p178
        $region18: #{tpu_custom_call.1} parent=11 // pred_check_branch
          %310 = sbr.rel (%p308) target = $region20
        $region19: #{tpu_custom_call.1} parent=11 // pred_region
          _
        $region20: #{tpu_custom_call.1} parent=11 // pred_fallthru
          _
        // Predicated region
        $region21: #{tpu_custom_call.1} parent=11 // pred_check
          %p311 = pneg %p199
        $region22: #{tpu_custom_call.1} parent=11 // pred_check_branch
          %313 = sbr.rel (%p311) target = $region24
        $region23: #{tpu_custom_call.1} parent=11 // pred_region
          _
        $region24: #{tpu_custom_call.1} parent=11 // pred_fallthru
          _
        // Predicated region
        $region25: #{tpu_custom_call.1} parent=11 // pred_check
          %p314 = pneg %p220
        $region26: #{tpu_custom_call.1} parent=11 // pred_check_branch
          %316 = sbr.rel (%p314) target = $region28
        $region27: #{tpu_custom_call.1} parent=11 // pred_region
          _
        $region28: #{tpu_custom_call.1} parent=11 // pred_fallthru
          _
        // Predicated region
        $region29: #{tpu_custom_call.1} parent=11 // pred_check
          %p317 = pneg %p241
        $region30: #{tpu_custom_call.1} parent=11 // pred_check_branch
          %319 = sbr.rel (%p317) target = $region32
        $region31: #{tpu_custom_call.1} parent=11 // pred_region
          _
        $region32: #{tpu_custom_call.1} parent=11 // pred_fallthru
          _
        // Predicated region
        $region33: #{tpu_custom_call.1} parent=11 // pred_check
          %p320 = pneg %p262
        $region34: #{tpu_custom_call.1} parent=11 // pred_check_branch
          %322 = sbr.rel (%p320) target = $region36
        $region35: #{tpu_custom_call.1} parent=11 // pred_region
          _
        $region36: #{tpu_custom_call.1} parent=11 // pred_fallthru
          _
      $region12: #{tpu_custom_call.1} parent=5 // pred_fallthru
        _
      %p323 = scmp.lt.s32.totalorder %s24, 2
      // Predicated region
      $region37: #{tpu_custom_call.1} parent=5 // pred_check
        %p324 = pneg %p323
      $region38: #{tpu_custom_call.1} parent=5 // pred_check_branch
        %326 = sbr.rel (%p324) target = $region40
      $region39: #{tpu_custom_call.1} parent=5 // pred_region
        // Predicated region
        $region41: #{tpu_custom_call.1} parent=39 // pred_check
          %p327 = pneg %p66
        $region42: #{tpu_custom_call.1} parent=39 // pred_check_branch
          %329 = sbr.rel (%p327) target = $region44
        $region43: #{tpu_custom_call.1} parent=39 // pred_region
          %s330 = smul.u32 %s32, 16
          %s331 = ssub.s32 %s330, 1
          %p332 = scmp.gt.s32.totalorder %s331, 0
          %s333 = scalar_select %p332, %s331, 0
          %p334 = scmp.lt.s32.totalorder %s31, 1
          %s335 = scalar_select %p334, %s31, 1
          %p336 = scmp.lt.s32.totalorder %s333, 15
          %s337 = scalar_select %p336, %s333, 15
          %s338 = smul.addr %s337, 2
          %s339 = smul.addr %s335, 32
          %s340 = sadd.s32 %s338, %s339
          %s341 = smul.addr %s340, 4
          %s342 = scalar_lea.vmem %s0, %s341
          %s343 = smul.u32 %s32, 16
          %s344 = ssub.s32 %s343, 1
          %p345 = scmp.gt.s32.totalorder %s344, 0
          %s346 = scalar_select %p345, %s344, 0
        $region44: #{tpu_custom_call.1} parent=39 // pred_fallthru
          _
        // Predicated region
        $region45: #{tpu_custom_call.1} parent=39 // pred_check
          %p347 = pneg %p94
        $region46: #{tpu_custom_call.1} parent=39 // pred_check_branch
          %349 = sbr.rel (%p347) target = $region48
        $region47: #{tpu_custom_call.1} parent=39 // pred_region
          %s350 = sand.u32 %s84, 1
          %s351 = scalar_lea.sflag [#allocation5], %s350
          %s352 = sand.u32 %s84, 1
          %s353 = smul.addr %s352, 128
          %s354 = scalar_lea.vmem [#allocation4], %s353
          %s355 = smul.u32 16, %s32
          %s357 = ssub.s32 2048, 2048
          %358 = vsyncadd %s351, %s357
          %s359 = smul.addr %s355, 2
          %s360 = smul.addr %s31, 32
          %s361 = sadd.s32 %s359, %s360
          %s362 = smul.addr %s361, 64
          %s363 = scalar_lea.hbm %s1, %s362
          %s364 = sshll.u32 %s354, 4
          %s365 = int_to_ptr.vmem [resolvable:$true] %s364
          %370 = dma.hbm_to_vmem [thread:$0]  %s363, 2048, %s365, %s351, 64, 64, 4
        $region48: #{tpu_custom_call.1} parent=39 // pred_fallthru
          _
        // Predicated region
        $region49: #{tpu_custom_call.1} parent=39 // pred_check
          %p371 = pneg %p130
        $region50: #{tpu_custom_call.1} parent=39 // pred_check_branch
          %373 = sbr.rel (%p371) target = $region52
        $region51: #{tpu_custom_call.1} parent=39 // pred_region
          %s374 = sand.u32 %s120, 1
          %s375 = scalar_lea.sflag [#allocation8], %s374
          %s376 = sand.u32 %s120, 1
          %s377 = smul.addr %s376, 8
          %s378 = scalar_lea.vmem [#allocation7], %s377
          %s379 = smul.u32 %s32, 16
          %s380 = sadd.s32 %s379, 16
          %p381 = scmp.lt.s32.totalorder %s380, 15
          %s382 = scalar_select %p381, %s380, 15
          %s384 = ssub.s32 128, 128
          %385 = vsyncadd %s375, %s384
          %s386 = smul.addr %s382, 2
          %s387 = smul.addr %s31, 32
          %s388 = sadd.s32 %s386, %s387
          %s389 = smul.addr %s388, 64
          %s390 = scalar_lea.hbm %s2, %s389
          %s391 = sshll.u32 %s378, 4
          %s392 = int_to_ptr.vmem [resolvable:$true] %s391
          %397 = dma.hbm_to_vmem [thread:$0]  %s390, 128, %s392, %s375, 64, 64, 4
        $region52: #{tpu_custom_call.1} parent=39 // pred_fallthru
          _
      $region40: #{tpu_custom_call.1} parent=5 // pred_fallthru
        _
      %p398 = scmp.le.s32.totalorder 1, %s24
      %p399 = scmp.lt.s32.totalorder %s24, 3
      %p400 = pnand %p398, %p399
      %p401 = pneg %p400
      // Predicated region
      $region53: #{tpu_custom_call.1} parent=5 // pred_check
        _
      $region54: #{tpu_custom_call.1} parent=5 // pred_check_branch
        %403 = sbr.rel (%p400) target = $region56
      $region55: #{tpu_custom_call.1} parent=5 // pred_region
        %s404 = ssub.s32 %s24, 1
        %s405 = sand.u32 %s87, 1
        %s406 = scalar_lea.sflag [#allocation5], %s405
        %s407 = sand.u32 %s87, 1
        %s408 = smul.addr %s407, 128
        %s409 = scalar_lea.vmem [#allocation4], %s408
        // Predicated region
        $region57: #{tpu_custom_call.1} parent=55 // pred_check
          %p410 = pneg %p100
        $region58: #{tpu_custom_call.1} parent=55 // pred_check_branch
          %412 = sbr.rel (%p410) target = $region60
        $region59: #{tpu_custom_call.1} parent=55 // pred_region
          %413 = dma.done %s406, 2048
        $region60: #{tpu_custom_call.1} parent=55 // pred_fallthru
          _
        %s414 = sand.u32 %s123, 1
        %s415 = scalar_lea.sflag [#allocation8], %s414
        %s416 = sand.u32 %s123, 1
        %s417 = smul.addr %s416, 8
        %s418 = scalar_lea.vmem [#allocation7], %s417
        // Predicated region
        $region61: #{tpu_custom_call.1} parent=55 // pred_check
          %p419 = pneg %p136
        $region62: #{tpu_custom_call.1} parent=55 // pred_check_branch
          %421 = sbr.rel (%p419) target = $region64
        $region63: #{tpu_custom_call.1} parent=55 // pred_region
          %422 = dma.done %s415, 128
        $region64: #{tpu_custom_call.1} parent=55 // pred_fallthru
          _
        %s423 = smul.u32 %s34, 16
        %s424 = ssub.s32 %s423, 1
        %p425 = scmp.gt.s32.totalorder %s424, 0
        %s426 = scalar_select %p425, %s424, 0
        %p427 = scmp.lt.s32.totalorder %s33, 1
        %s428 = scalar_select %p427, %s33, 1
        %p429 = scmp.lt.s32.totalorder %s426, 15
        %s430 = scalar_select %p429, %s426, 15
        %s431 = smul.addr %s430, 2
        %s432 = smul.addr %s428, 32
        %s433 = sadd.s32 %s431, %s432
        %s434 = smul.addr %s433, 4
        %s435 = scalar_lea.vmem %s0, %s434
        %p436 = pneg %p72
        %p437 = pneg %p69
        %s438 = sand.u32 %s87, 1
        %s439 = scalar_lea.sflag [#allocation5], %s438
        %s440 = sand.u32 %s87, 1
        %s441 = smul.addr %s440, 128
        %s442 = scalar_lea.vmem [#allocation4], %s441
        %p443 = pneg %p100
        %p444 = pneg %p97
        %s445 = sand.u32 %s123, 1
        %s446 = scalar_lea.sflag [#allocation8], %s445
        %s447 = sand.u32 %s123, 1
        %s448 = smul.addr %s447, 8
        %s449 = scalar_lea.vmem [#allocation7], %s448
        %p450 = pneg %p136
        %p451 = pneg %p133
        %p452 = pneg %p157
        %p453 = pneg %p154
        %p454 = pneg %p178
        %p455 = pneg %p175
        %p456 = pneg %p199
        %p457 = pneg %p196
        %p458 = pneg %p220
        %p459 = pneg %p217
        %p460 = pneg %p241
        %p461 = pneg %p238
        %p462 = pneg %p262
        %p463 = pneg %p259
        %p464 = pneg %p290
        %p465 = pneg %p287
        %s466 = sand.u32 %s277, 1
        %s467 = scalar_lea.sflag [#allocation6], %s466
        %s468 = sand.u32 %s277, 1
        %s469 = smul.addr %s468, 128
        %s470 = scalar_lea.vmem [#allocation9], %s469
        %s471 = smul.u32 %s34, 16
        %s472 = ssub.s32 %s471, 1
        %p473 = scmp.gt.s32.totalorder %s472, 0
        %s474 = scalar_select %p473, %s472, 0
        %p475 = scmp.lt.s32.totalorder %s33, 1
        %s476 = scalar_select %p475, %s33, 1
        %p477 = scmp.lt.s32.totalorder %s474, 15
        %s478 = scalar_select %p477, %s474, 15
        %s479 = smul.addr %s478, 2
        %s480 = smul.addr %s476, 32
        %s481 = sadd.s32 %s479, %s480
        %s482 = smul.addr %s481, 4
        %s483 = scalar_lea.vmem %s0, %s482
        %s484 = smul.u32 %s34, 16
        %s485 = ssub.s32 %s484, 1
        %p486 = scmp.gt.s32.totalorder %s485, 0
        %s487 = scalar_select %p486, %s485, 0
        %s488 = smul.u32 16, %s34
        %s489 = smul.u32 %s34, 16
        %s490 = sadd.s32 %s489, 16
        %p491 = scmp.lt.s32.totalorder %s490, 15
        %s492 = scalar_select %p491, %s490, 15
        %s493 = smul.u32 16, %s34
        %v495 = vld [vmem:[%s483] sm:$0xf]
        %v496 = vld [vmem:[%s483 + $0x4] sm:$0xf]
        %v497 = vld [vmem:[%s409] sm:$0xf]
        %v498 = vld [vmem:[%s409 + $0x4] sm:$0xf]
        %v499 = vld [vmem:[%s409 + $0x8] sm:$0xf]
        %v500 = vld [vmem:[%s409 + $0xc] sm:$0xf]
        %v501 = vld [vmem:[%s409 + $0x10] sm:$0xf]
        %v502 = vld [vmem:[%s409 + $0x14] sm:$0xf]
        %v503 = vld [vmem:[%s409 + $0x18] sm:$0xf]
        %v504 = vld [vmem:[%s409 + $0x1c] sm:$0xf]
        %v505 = vld [vmem:[%s409 + $0x20] sm:$0xf]
        %v506 = vld [vmem:[%s409 + $0x24] sm:$0xf]
        %v507 = vld [vmem:[%s409 + $0x28] sm:$0xf]
        %v508 = vld [vmem:[%s409 + $0x2c] sm:$0xf]
        %v509 = vld [vmem:[%s409 + $0x30] sm:$0xf]
        %v510 = vld [vmem:[%s409 + $0x34] sm:$0xf]
        %v511 = vld [vmem:[%s409 + $0x38] sm:$0xf]
        %v512 = vld [vmem:[%s409 + $0x3c] sm:$0xf]
        %v513 = vld [vmem:[%s409 + $0x40] sm:$0xf]
        %v514 = vld [vmem:[%s409 + $0x44] sm:$0xf]
        %v515 = vld [vmem:[%s409 + $0x48] sm:$0xf]
        %v516 = vld [vmem:[%s409 + $0x4c] sm:$0xf]
        %v517 = vld [vmem:[%s409 + $0x50] sm:$0xf]
        %v518 = vld [vmem:[%s409 + $0x54] sm:$0xf]
        %v519 = vld [vmem:[%s409 + $0x58] sm:$0xf]
        %v520 = vld [vmem:[%s409 + $0x5c] sm:$0xf]
        %v521 = vld [vmem:[%s409 + $0x60] sm:$0xf]
        %v522 = vld [vmem:[%s409 + $0x64] sm:$0xf]
        %v523 = vld [vmem:[%s409 + $0x68] sm:$0xf]
        %v524 = vld [vmem:[%s409 + $0x6c] sm:$0xf]
        %v525 = vld [vmem:[%s409 + $0x70] sm:$0xf]
        %v526 = vld [vmem:[%s409 + $0x74] sm:$0xf]
        %v527 = vld [vmem:[%s409 + $0x78] sm:$0xf]
        %v528 = vld [vmem:[%s409 + $0x7c] sm:$0xf]
        %v529 = vld [vmem:[%s418] sm:$0xf]
        %v530 = vld [vmem:[%s418 + $0x4] sm:$0xf]
        %v531 = vld [vmem:[%s3] sm:$0xf]
        %v532 = vld [vmem:[%s3 + $0x4] sm:$0xf]
        %v533 = vld [vmem:[%s3 + $0x8] sm:$0xf]
        %v534 = vld [vmem:[%s3 + $0xc] sm:$0xf]
        %v535 = vld [vmem:[%s3 + $0x10] sm:$0xf]
        %v536 = vld [vmem:[%s3 + $0x14] sm:$0xf]
        %v537 = vld [vmem:[%s3 + $0x18] sm:$0xf]
        %v538 = vld [vmem:[%s3 + $0x1c] sm:$0xf]
        %v539 = vld [vmem:[%s3 + $0x20] sm:$0xf]
        %v540 = vld [vmem:[%s3 + $0x24] sm:$0xf]
        %v541 = vld [vmem:[%s3 + $0x28] sm:$0xf]
        %v542 = vld [vmem:[%s3 + $0x2c] sm:$0xf]
        %v543 = vld [vmem:[%s3 + $0x30] sm:$0xf]
        %v544 = vld [vmem:[%s3 + $0x34] sm:$0xf]
        %v545 = vld [vmem:[%s3 + $0x38] sm:$0xf]
        %v546 = vld [vmem:[%s3 + $0x3c] sm:$0xf]
        %v547 = vld [vmem:[%s4] sm:$0x1]
        %v549 = vlaneseq
        %v550 = vshrl.u32 %v549, 7
        %v551 = vsub.s32 0, %v550
        %v552 = vrot.slane %v547, %v551
        %v590 = vunpack.c.l.b16 %v495
        %v591 = vunpack.c.l.b16 %v496
        %v592 = vunpack.c.l.b16 %v497
        %v593 = vunpack.c.l.b16 %v498
        %v594 = vunpack.c.l.b16 %v499
        %v595 = vunpack.c.l.b16 %v500
        %v596 = vunpack.c.l.b16 %v501
        %v597 = vunpack.c.l.b16 %v502
        %v598 = vunpack.c.l.b16 %v503
        %v599 = vunpack.c.l.b16 %v504
        %v600 = vunpack.c.l.b16 %v505
        %v601 = vunpack.c.l.b16 %v506
        %v602 = vunpack.c.l.b16 %v507
        %v603 = vunpack.c.l.b16 %v508
        %v604 = vunpack.c.l.b16 %v509
        %v605 = vunpack.c.l.b16 %v510
        %v606 = vunpack.c.l.b16 %v511
        %v607 = vunpack.c.l.b16 %v512
        %v608 = vunpack.c.l.b16 %v513
        %v609 = vunpack.c.l.b16 %v514
        %v610 = vunpack.c.l.b16 %v515
        %v611 = vunpack.c.l.b16 %v516
        %v612 = vunpack.c.l.b16 %v517
        %v613 = vunpack.c.l.b16 %v518
        %v614 = vunpack.c.l.b16 %v519
        %v615 = vunpack.c.l.b16 %v520
        %v616 = vunpack.c.l.b16 %v521
        %v617 = vunpack.c.l.b16 %v522
        %v618 = vunpack.c.l.b16 %v523
        %v619 = vunpack.c.l.b16 %v524
        %v620 = vunpack.c.l.b16 %v525
        %v621 = vunpack.c.l.b16 %v526
        %v622 = vunpack.c.l.b16 %v527
        %v623 = vunpack.c.l.b16 %v528
        %v624 = vunpack.c.l.b16 %v529
        %v625 = vunpack.c.l.b16 %v530
        %v626 = vpack.c.b16 %v591, %v590
        %v627 = vpack.c.b16 %v593, %v592
        %v628 = vpack.c.b16 %v595, %v594
        %v629 = vpack.c.b16 %v597, %v596
        %v630 = vpack.c.b16 %v599, %v598
        %v631 = vpack.c.b16 %v601, %v600
        %v632 = vpack.c.b16 %v603, %v602
        %v633 = vpack.c.b16 %v605, %v604
        %v634 = vpack.c.b16 %v607, %v606
        %v635 = vpack.c.b16 %v609, %v608
        %v636 = vpack.c.b16 %v611, %v610
        %v637 = vpack.c.b16 %v613, %v612
        %v638 = vpack.c.b16 %v615, %v614
        %v639 = vpack.c.b16 %v617, %v616
        %v640 = vpack.c.b16 %v619, %v618
        %v641 = vpack.c.b16 %v621, %v620
        %v642 = vpack.c.b16 %v623, %v622
        %v643 = vpack.c.b16 %v625, %v624
        %v678 = vunpack.c.l.b16 %v531
        %v679 = vunpack.c.l.b16 %v532
        %v680 = vunpack.c.l.b16 %v533
        %v681 = vunpack.c.l.b16 %v534
        %v682 = vunpack.c.l.b16 %v535
        %v683 = vunpack.c.l.b16 %v536
        %v684 = vunpack.c.l.b16 %v537
        %v685 = vunpack.c.l.b16 %v538
        %v686 = vunpack.c.l.b16 %v539
        %v687 = vunpack.c.l.b16 %v540
        %v688 = vunpack.c.l.b16 %v541
        %v689 = vunpack.c.l.b16 %v542
        %v690 = vunpack.c.l.b16 %v543
        %v691 = vunpack.c.l.b16 %v544
        %v692 = vunpack.c.l.b16 %v545
        %v693 = vunpack.c.l.b16 %v546
        %v694 = vpack.c.b16 %v679, %v678
        %v695 = vpack.c.b16 %v681, %v680
        %v696 = vpack.c.b16 %v683, %v682
        %v697 = vpack.c.b16 %v685, %v684
        %v698 = vpack.c.b16 %v687, %v686
        %v699 = vpack.c.b16 %v689, %v688
        %v700 = vpack.c.b16 %v691, %v690
        %v701 = vpack.c.b16 %v693, %v692
        %710 = vmatprep.subr.bf16.mxu0 0
        %711 = vmatpush1.bf16.msra.mxu0 %v701
        %712 = vmatprep.subr.bf16.mxu0 0
        %713 = vmatpush1.bf16.msra.mxu0 %v700
        %714 = vmatprep.subr.bf16.mxu0 0
        %715 = vmatpush1.bf16.msra.mxu0 %v699
        %716 = vmatprep.subr.bf16.mxu0 0
        %717 = vmatpush1.bf16.msra.mxu0 %v698
        %718 = vmatprep.subr.bf16.mxu0 0
        %719 = vmatpush1.bf16.msra.mxu0 %v697
        %720 = vmatprep.subr.bf16.mxu0 0
        %721 = vmatpush1.bf16.msra.mxu0 %v696
        %722 = vmatprep.subr.bf16.mxu0 0
        %723 = vmatpush1.bf16.msra.mxu0 %v695
        %724 = vmatprep.subr.bf16.mxu0 0
        %725 = vmatpush1.bf16.msra.mxu0 %v694
        %726 = vmatprep.subr.bf16.mxu0 0
        %727 = vmatpush2.bf16.msra.mxu0 0
        %728 = vmatprep.subr.bf16.mxu0 0
        %729 = vmatpush2.bf16.msra.mxu0 0
        %730 = vmatprep.subr.bf16.mxu0 0
        %731 = vmatpush2.bf16.msra.mxu0 0
        %732 = vmatprep.subr.bf16.mxu0 0
        %733 = vmatpush2.bf16.msra.mxu0 0
        %734 = vmatprep.subr.bf16.mxu0 0
        %735 = vmatpush2.bf16.msra.mxu0 0
        %736 = vmatprep.subr.bf16.mxu0 0
        %737 = vmatpush2.bf16.msra.mxu0 0
        %738 = vmatprep.subr.bf16.mxu0 0
        %739 = vmatpush2.bf16.msra.mxu0 0
        %740 = vmatprep.subr.bf16.mxu0 0
        %741 = vmatpush2.bf16.msra.mxu0 0
        %742 = vmatprep.mubr.bf16.mxu0 0
        %743 = vmatmul.mubr.bf16.gmra.mxu0 %v626
        %v744 = vpop.f32.mrf.mxu0
        %v745 = vadd.f32 %v552, %v744
        %v746 = vpop.f32.mrf.mxu0
        %v747 = vpop.f32.mrf.mxu0
        %v748 = vadd.f32 %v552, %v747
        %v749 = vpop.f32.mrf.mxu0
        %750 = vmatprep.mubr.bf16.mxu0 0
        %751 = vmatmul.mubr.bf16.gmra.mxu0 %v627
        %v752 = vpop.f32.mrf.mxu0
        %v753 = vadd.f32 %v552, %v752
        %v754 = vpop.f32.mrf.mxu0
        %v755 = vpop.f32.mrf.mxu0
        %v756 = vadd.f32 %v552, %v755
        %v757 = vpop.f32.mrf.mxu0
        %758 = vmatprep.mubr.bf16.mxu0 0
        %759 = vmatmul.mubr.bf16.gmra.mxu0 %v628
        %v760 = vpop.f32.mrf.mxu0
        %v761 = vadd.f32 %v552, %v760
        %v762 = vpop.f32.mrf.mxu0
        %v763 = vpop.f32.mrf.mxu0
        %v764 = vadd.f32 %v552, %v763
        %v765 = vpop.f32.mrf.mxu0
        %766 = vmatprep.mubr.bf16.mxu0 0
        %767 = vmatmul.mubr.bf16.gmra.mxu0 %v629
        %v768 = vpop.f32.mrf.mxu0
        %v769 = vadd.f32 %v552, %v768
        %v770 = vpop.f32.mrf.mxu0
        %v771 = vpop.f32.mrf.mxu0
        %v772 = vadd.f32 %v552, %v771
        %v773 = vpop.f32.mrf.mxu0
        %774 = vmatprep.mubr.bf16.mxu0 0
        %775 = vmatmul.mubr.bf16.gmra.mxu0 %v630
        %v776 = vpop.f32.mrf.mxu0
        %v777 = vadd.f32 %v552, %v776
        %v778 = vpop.f32.mrf.mxu0
        %v779 = vpop.f32.mrf.mxu0
        %v780 = vadd.f32 %v552, %v779
        %v781 = vpop.f32.mrf.mxu0
        %782 = vmatprep.mubr.bf16.mxu0 0
        %783 = vmatmul.mubr.bf16.gmra.mxu0 %v631
        %v784 = vpop.f32.mrf.mxu0
        %v785 = vadd.f32 %v552, %v784
        %v786 = vpop.f32.mrf.mxu0
        %v787 = vpop.f32.mrf.mxu0
        %v788 = vadd.f32 %v552, %v787
        %v789 = vpop.f32.mrf.mxu0
        %790 = vmatprep.mubr.bf16.mxu0 0
        %791 = vmatmul.mubr.bf16.gmra.mxu0 %v632
        %v792 = vpop.f32.mrf.mxu0
        %v793 = vadd.f32 %v552, %v792
        %v794 = vpop.f32.mrf.mxu0
        %v795 = vpop.f32.mrf.mxu0
        %v796 = vadd.f32 %v552, %v795
        %v797 = vpop.f32.mrf.mxu0
        %798 = vmatprep.mubr.bf16.mxu0 0
        %799 = vmatmul.mubr.bf16.gmra.mxu0 %v633
        %v800 = vpop.f32.mrf.mxu0
        %v801 = vadd.f32 %v552, %v800
        %v802 = vpop.f32.mrf.mxu0
        %v803 = vpop.f32.mrf.mxu0
        %v804 = vadd.f32 %v552, %v803
        %v805 = vpop.f32.mrf.mxu0
        %806 = vmatprep.mubr.bf16.mxu0 0
        %807 = vmatmul.mubr.bf16.gmra.mxu0 %v634
        %v808 = vpop.f32.mrf.mxu0
        %v809 = vadd.f32 %v552, %v808
        %v810 = vpop.f32.mrf.mxu0
        %v811 = vpop.f32.mrf.mxu0
        %v812 = vadd.f32 %v552, %v811
        %v813 = vpop.f32.mrf.mxu0
        %814 = vmatprep.mubr.bf16.mxu0 0
        %815 = vmatmul.mubr.bf16.gmra.mxu0 %v635
        %v816 = vpop.f32.mrf.mxu0
        %v817 = vadd.f32 %v552, %v816
        %v818 = vpop.f32.mrf.mxu0
        %v819 = vpop.f32.mrf.mxu0
        %v820 = vadd.f32 %v552, %v819
        %v821 = vpop.f32.mrf.mxu0
        %822 = vmatprep.mubr.bf16.mxu0 0
        %823 = vmatmul.mubr.bf16.gmra.mxu0 %v636
        %v824 = vpop.f32.mrf.mxu0
        %v825 = vadd.f32 %v552, %v824
        %v826 = vpop.f32.mrf.mxu0
        %v827 = vpop.f32.mrf.mxu0
        %v828 = vadd.f32 %v552, %v827
        %v829 = vpop.f32.mrf.mxu0
        %830 = vmatprep.mubr.bf16.mxu0 0
        %831 = vmatmul.mubr.bf16.gmra.mxu0 %v637
        %v832 = vpop.f32.mrf.mxu0
        %v833 = vadd.f32 %v552, %v832
        %v834 = vpop.f32.mrf.mxu0
        %v835 = vpop.f32.mrf.mxu0
        %v836 = vadd.f32 %v552, %v835
        %v837 = vpop.f32.mrf.mxu0
        %838 = vmatprep.mubr.bf16.mxu0 0
        %839 = vmatmul.mubr.bf16.gmra.mxu0 %v638
        %v840 = vpop.f32.mrf.mxu0
        %v841 = vadd.f32 %v552, %v840
        %v842 = vpop.f32.mrf.mxu0
        %v843 = vpop.f32.mrf.mxu0
        %v844 = vadd.f32 %v552, %v843
        %v845 = vpop.f32.mrf.mxu0
        %846 = vmatprep.mubr.bf16.mxu0 0
        %847 = vmatmul.mubr.bf16.gmra.mxu0 %v639
        %v848 = vpop.f32.mrf.mxu0
        %v849 = vadd.f32 %v552, %v848
        %v850 = vpop.f32.mrf.mxu0
        %v851 = vpop.f32.mrf.mxu0
        %v852 = vadd.f32 %v552, %v851
        %v853 = vpop.f32.mrf.mxu0
        %854 = vmatprep.mubr.bf16.mxu0 0
        %855 = vmatmul.mubr.bf16.gmra.mxu0 %v640
        %v856 = vpop.f32.mrf.mxu0
        %v857 = vadd.f32 %v552, %v856
        %v858 = vpop.f32.mrf.mxu0
        %v859 = vpop.f32.mrf.mxu0
        %v860 = vadd.f32 %v552, %v859
        %v861 = vpop.f32.mrf.mxu0
        %862 = vmatprep.mubr.bf16.mxu0 0
        %863 = vmatmul.mubr.bf16.gmra.mxu0 %v641
        %v864 = vpop.f32.mrf.mxu0
        %v865 = vadd.f32 %v552, %v864
        %v866 = vpop.f32.mrf.mxu0
        %v867 = vpop.f32.mrf.mxu0
        %v868 = vadd.f32 %v552, %v867
        %v869 = vpop.f32.mrf.mxu0
        %870 = vmatprep.mubr.bf16.mxu0 0
        %871 = vmatmul.mubr.bf16.gmra.mxu0 %v642
        %v872 = vpop.f32.mrf.mxu0
        %v873 = vadd.f32 %v552, %v872
        %v874 = vpop.f32.mrf.mxu0
        %v875 = vpop.f32.mrf.mxu0
        %v876 = vadd.f32 %v552, %v875
        %v877 = vpop.f32.mrf.mxu0
        %878 = vmatprep.mubr.bf16.mxu0 0
        %879 = vmatmul.mubr.bf16.gmra.mxu0 %v643
        %v880 = vpop.f32.mrf.mxu0
        %v881 = vadd.f32 %v552, %v880
        %v882 = vpop.f32.mrf.mxu0
        %v883 = vpop.f32.mrf.mxu0
        %v884 = vadd.f32 %v552, %v883
        %v885 = vpop.f32.mrf.mxu0
        %886 = vdwg.mxu0
        %v887 = vmax.f32 %v745, 0.0
        %v888 = vmax.f32 %v748, 0.0
        %v889 = vmax.f32 %v753, 0.0
        %v890 = vmax.f32 %v756, 0.0
        %v891 = vmax.f32 %v761, 0.0
        %v892 = vmax.f32 %v764, 0.0
        %v893 = vmax.f32 %v769, 0.0
        %v894 = vmax.f32 %v772, 0.0
        %v895 = vmax.f32 %v777, 0.0
        %v896 = vmax.f32 %v780, 0.0
        %v897 = vmax.f32 %v785, 0.0
        %v898 = vmax.f32 %v788, 0.0
        %v899 = vmax.f32 %v793, 0.0
        %v900 = vmax.f32 %v796, 0.0
        %v901 = vmax.f32 %v801, 0.0
        %v902 = vmax.f32 %v804, 0.0
        %v903 = vmax.f32 %v809, 0.0
        %v904 = vmax.f32 %v812, 0.0
        %v905 = vmax.f32 %v817, 0.0
        %v906 = vmax.f32 %v820, 0.0
        %v907 = vmax.f32 %v825, 0.0
        %v908 = vmax.f32 %v828, 0.0
        %v909 = vmax.f32 %v833, 0.0
        %v910 = vmax.f32 %v836, 0.0
        %v911 = vmax.f32 %v841, 0.0
        %v912 = vmax.f32 %v844, 0.0
        %v913 = vmax.f32 %v849, 0.0
        %v914 = vmax.f32 %v852, 0.0
        %v915 = vmax.f32 %v857, 0.0
        %v916 = vmax.f32 %v860, 0.0
        %v917 = vmax.f32 %v865, 0.0
        %v918 = vmax.f32 %v868, 0.0
        %v919 = vmax.f32 %v873, 0.0
        %v920 = vmax.f32 %v876, 0.0
        %v921 = vmax.f32 %v881, 0.0
        %v922 = vmax.f32 %v884, 0.0
        %v923 = vpack.c.bf16 %v888, %v887
        %v924 = vpack.c.bf16 %v890, %v889
        %v925 = vpack.c.bf16 %v892, %v891
        %v926 = vpack.c.bf16 %v894, %v893
        %v927 = vpack.c.bf16 %v896, %v895
        %v928 = vpack.c.bf16 %v898, %v897
        %v929 = vpack.c.bf16 %v900, %v899
        %v930 = vpack.c.bf16 %v902, %v901
        %v931 = vpack.c.bf16 %v904, %v903
        %v932 = vpack.c.bf16 %v906, %v905
        %v933 = vpack.c.bf16 %v908, %v907
        %v934 = vpack.c.bf16 %v910, %v909
        %v935 = vpack.c.bf16 %v912, %v911
        %v936 = vpack.c.bf16 %v914, %v913
        %v937 = vpack.c.bf16 %v916, %v915
        %v938 = vpack.c.bf16 %v918, %v917
        %v939 = vpack.c.bf16 %v920, %v919
        %v940 = vpack.c.bf16 %v922, %v921
        %v959 = vunpack.c.l.b16 %v923
        %v960 = vunpack.c.h.b16 %v923
        %v961 = vunpack.c.l.b16 %v924
        %v962 = vunpack.c.h.b16 %v924
        %v963 = vunpack.c.l.b16 %v925
        %v964 = vunpack.c.h.b16 %v925
        %v965 = vunpack.c.l.b16 %v926
        %v966 = vunpack.c.h.b16 %v926
        %v967 = vunpack.c.l.b16 %v927
        %v968 = vunpack.c.h.b16 %v927
        %v969 = vunpack.c.l.b16 %v928
        %v970 = vunpack.c.h.b16 %v928
        %v971 = vunpack.c.l.b16 %v929
        %v972 = vunpack.c.h.b16 %v929
        %v973 = vunpack.c.l.b16 %v930
        %v974 = vunpack.c.h.b16 %v930
        %v975 = vunpack.c.l.b16 %v931
        %v976 = vunpack.c.h.b16 %v931
        %v977 = vunpack.c.l.b16 %v932
        %v978 = vunpack.c.h.b16 %v932
        %v979 = vunpack.c.l.b16 %v933
        %v980 = vunpack.c.h.b16 %v933
        %v981 = vunpack.c.l.b16 %v934
        %v982 = vunpack.c.h.b16 %v934
        %v983 = vunpack.c.l.b16 %v935
        %v984 = vunpack.c.h.b16 %v935
        %v985 = vunpack.c.l.b16 %v936
        %v986 = vunpack.c.h.b16 %v936
        %v987 = vunpack.c.l.b16 %v937
        %v988 = vunpack.c.h.b16 %v937
        %v989 = vunpack.c.l.b16 %v938
        %v990 = vunpack.c.h.b16 %v938
        %v991 = vunpack.c.l.b16 %v939
        %v992 = vunpack.c.h.b16 %v939
        %v993 = vunpack.c.l.b16 %v940
        %v994 = vunpack.c.h.b16 %v940
        %v995 = vpack.c.b16 %v959, %v959
        %v996 = vpack.c.b16 %v960, %v960
        %v997 = vpack.c.b16 %v961, %v961
        %v998 = vpack.c.b16 %v962, %v962
        %v999 = vpack.c.b16 %v963, %v963
        %v1000 = vpack.c.b16 %v964, %v964
        %v1001 = vpack.c.b16 %v965, %v965
        %v1002 = vpack.c.b16 %v966, %v966
        %v1003 = vpack.c.b16 %v967, %v967
        %v1004 = vpack.c.b16 %v968, %v968
        %v1005 = vpack.c.b16 %v969, %v969
        %v1006 = vpack.c.b16 %v970, %v970
        %v1007 = vpack.c.b16 %v971, %v971
        %v1008 = vpack.c.b16 %v972, %v972
        %v1009 = vpack.c.b16 %v973, %v973
        %v1010 = vpack.c.b16 %v974, %v974
        %v1011 = vpack.c.b16 %v975, %v975
        %v1012 = vpack.c.b16 %v976, %v976
        %v1013 = vpack.c.b16 %v977, %v977
        %v1014 = vpack.c.b16 %v978, %v978
        %v1015 = vpack.c.b16 %v979, %v979
        %v1016 = vpack.c.b16 %v980, %v980
        %v1017 = vpack.c.b16 %v981, %v981
        %v1018 = vpack.c.b16 %v982, %v982
        %v1019 = vpack.c.b16 %v983, %v983
        %v1020 = vpack.c.b16 %v984, %v984
        %v1021 = vpack.c.b16 %v985, %v985
        %v1022 = vpack.c.b16 %v986, %v986
        %v1023 = vpack.c.b16 %v987, %v987
        %v1024 = vpack.c.b16 %v988, %v988
        %v1025 = vpack.c.b16 %v989, %v989
        %v1026 = vpack.c.b16 %v990, %v990
        %v1027 = vpack.c.b16 %v991, %v991
        %v1028 = vpack.c.b16 %v992, %v992
        %v1029 = vpack.c.b16 %v993, %v993
        %v1030 = vpack.c.b16 %v994, %v994
        %vm1031 = vsmask.f32 256
        %vm1032 = vsmask.f32 4368
        %vm1033 = vmor %vm1031, %vm1032
        %v1035 = vshrl.u32 %v995, 16
        %v1037 = vrot.slane %v1035, 7
        %v1038 = vshll.u32 %v995, 16
        %v1040 = vor.u32 %v1037, %v1038
        %v1041 = vrot.slane %v1037, 4
        %v1043 = vshrl.u32 %v996, 16
        %v1045 = vrot.slane %v1043, 7
        %v1046 = vshll.u32 %v996, 16
        %v1048 = vor.u32 %v1045, %v1046
        %v1049 = vsel %vm1033, %v1041, %v1048
        %v1050 = vrot.slane %v1045, 4
        %v1052 = vshrl.u32 %v997, 16
        %v1054 = vrot.slane %v1052, 7
        %v1055 = vshll.u32 %v997, 16
        %v1057 = vor.u32 %v1054, %v1055
        %v1058 = vrot.slane %v1054, 4
        %v1060 = vshrl.u32 %v998, 16
        %v1062 = vrot.slane %v1060, 7
        %v1063 = vshll.u32 %v998, 16
        %v1065 = vor.u32 %v1062, %v1063
        %v1066 = vsel %vm1033, %v1058, %v1065
        %v1067 = vrot.slane %v1062, 4
        %v1069 = vshrl.u32 %v999, 16
        %v1071 = vrot.slane %v1069, 7
        %v1072 = vshll.u32 %v999, 16
        %v1074 = vor.u32 %v1071, %v1072
        %v1075 = vrot.slane %v1071, 4
        %v1077 = vshrl.u32 %v1000, 16
        %v1079 = vrot.slane %v1077, 7
        %v1080 = vshll.u32 %v1000, 16
        %v1082 = vor.u32 %v1079, %v1080
        %v1083 = vsel %vm1033, %v1075, %v1082
        %v1084 = vrot.slane %v1079, 4
        %v1086 = vshrl.u32 %v1001, 16
        %v1088 = vrot.slane %v1086, 7
        %v1089 = vshll.u32 %v1001, 16
        %v1091 = vor.u32 %v1088, %v1089
        %v1092 = vrot.slane %v1088, 4
        %v1094 = vshrl.u32 %v1002, 16
        %v1096 = vrot.slane %v1094, 7
        %v1097 = vshll.u32 %v1002, 16
        %v1099 = vor.u32 %v1096, %v1097
        %v1100 = vsel %vm1033, %v1092, %v1099
        %v1101 = vrot.slane %v1096, 4
        %v1103 = vshrl.u32 %v1003, 16
        %v1105 = vrot.slane %v1103, 7
        %v1106 = vshll.u32 %v1003, 16
        %v1108 = vor.u32 %v1105, %v1106
        %v1109 = vrot.slane %v1105, 4
        %v1111 = vshrl.u32 %v1004, 16
        %v1113 = vrot.slane %v1111, 7
        %v1114 = vshll.u32 %v1004, 16
        %v1116 = vor.u32 %v1113, %v1114
        %v1117 = vsel %vm1033, %v1109, %v1116
        %v1118 = vrot.slane %v1113, 4
        %v1120 = vshrl.u32 %v1005, 16
        %v1122 = vrot.slane %v1120, 7
        %v1123 = vshll.u32 %v1005, 16
        %v1125 = vor.u32 %v1122, %v1123
        %v1126 = vrot.slane %v1122, 4
        %v1128 = vshrl.u32 %v1006, 16
        %v1130 = vrot.slane %v1128, 7
        %v1131 = vshll.u32 %v1006, 16
        %v1133 = vor.u32 %v1130, %v1131
        %v1134 = vsel %vm1033, %v1126, %v1133
        %v1135 = vrot.slane %v1130, 4
        %v1137 = vshrl.u32 %v1007, 16
        %v1139 = vrot.slane %v1137, 7
        %v1140 = vshll.u32 %v1007, 16
        %v1142 = vor.u32 %v1139, %v1140
        %v1143 = vrot.slane %v1139, 4
        %v1145 = vshrl.u32 %v1008, 16
        %v1147 = vrot.slane %v1145, 7
        %v1148 = vshll.u32 %v1008, 16
        %v1150 = vor.u32 %v1147, %v1148
        %v1151 = vsel %vm1033, %v1143, %v1150
        %v1152 = vrot.slane %v1147, 4
        %v1154 = vshrl.u32 %v1009, 16
        %v1156 = vrot.slane %v1154, 7
        %v1157 = vshll.u32 %v1009, 16
        %v1159 = vor.u32 %v1156, %v1157
        %v1160 = vrot.slane %v1156, 4
        %v1162 = vshrl.u32 %v1010, 16
        %v1164 = vrot.slane %v1162, 7
        %v1165 = vshll.u32 %v1010, 16
        %v1167 = vor.u32 %v1164, %v1165
        %v1168 = vsel %vm1033, %v1160, %v1167
        %v1169 = vrot.slane %v1164, 4
        %v1171 = vshrl.u32 %v1011, 16
        %v1173 = vrot.slane %v1171, 7
        %v1174 = vshll.u32 %v1011, 16
        %v1176 = vor.u32 %v1173, %v1174
        %v1177 = vrot.slane %v1173, 4
        %v1179 = vshrl.u32 %v1012, 16
        %v1181 = vrot.slane %v1179, 7
        %v1182 = vshll.u32 %v1012, 16
        %v1184 = vor.u32 %v1181, %v1182
        %v1185 = vsel %vm1033, %v1177, %v1184
        %v1186 = vrot.slane %v1181, 4
        %v1188 = vshrl.u32 %v1013, 16
        %v1190 = vrot.slane %v1188, 7
        %v1191 = vshll.u32 %v1013, 16
        %v1193 = vor.u32 %v1190, %v1191
        %v1194 = vrot.slane %v1190, 4
        %v1196 = vshrl.u32 %v1014, 16
        %v1198 = vrot.slane %v1196, 7
        %v1199 = vshll.u32 %v1014, 16
        %v1201 = vor.u32 %v1198, %v1199
        %v1202 = vsel %vm1033, %v1194, %v1201
        %v1203 = vrot.slane %v1198, 4
        %v1205 = vshrl.u32 %v1015, 16
        %v1207 = vrot.slane %v1205, 7
        %v1208 = vshll.u32 %v1015, 16
        %v1210 = vor.u32 %v1207, %v1208
        %v1211 = vrot.slane %v1207, 4
        %v1213 = vshrl.u32 %v1016, 16
        %v1215 = vrot.slane %v1213, 7
        %v1216 = vshll.u32 %v1016, 16
        %v1218 = vor.u32 %v1215, %v1216
        %v1219 = vsel %vm1033, %v1211, %v1218
        %v1220 = vrot.slane %v1215, 4
        %v1222 = vshrl.u32 %v1017, 16
        %v1224 = vrot.slane %v1222, 7
        %v1225 = vshll.u32 %v1017, 16
        %v1227 = vor.u32 %v1224, %v1225
        %v1228 = vrot.slane %v1224, 4
        %v1230 = vshrl.u32 %v1018, 16
        %v1232 = vrot.slane %v1230, 7
        %v1233 = vshll.u32 %v1018, 16
        %v1235 = vor.u32 %v1232, %v1233
        %v1236 = vsel %vm1033, %v1228, %v1235
        %v1237 = vrot.slane %v1232, 4
        %v1239 = vshrl.u32 %v1019, 16
        %v1241 = vrot.slane %v1239, 7
        %v1242 = vshll.u32 %v1019, 16
        %v1244 = vor.u32 %v1241, %v1242
        %v1245 = vrot.slane %v1241, 4
        %v1247 = vshrl.u32 %v1020, 16
        %v1249 = vrot.slane %v1247, 7
        %v1250 = vshll.u32 %v1020, 16
        %v1252 = vor.u32 %v1249, %v1250
        %v1253 = vsel %vm1033, %v1245, %v1252
        %v1254 = vrot.slane %v1249, 4
        %v1256 = vshrl.u32 %v1021, 16
        %v1258 = vrot.slane %v1256, 7
        %v1259 = vshll.u32 %v1021, 16
        %v1261 = vor.u32 %v1258, %v1259
        %v1262 = vrot.slane %v1258, 4
        %v1264 = vshrl.u32 %v1022, 16
        %v1266 = vrot.slane %v1264, 7
        %v1267 = vshll.u32 %v1022, 16
        %v1269 = vor.u32 %v1266, %v1267
        %v1270 = vsel %vm1033, %v1262, %v1269
        %v1271 = vrot.slane %v1266, 4
        %v1273 = vshrl.u32 %v1023, 16
        %v1275 = vrot.slane %v1273, 7
        %v1276 = vshll.u32 %v1023, 16
        %v1278 = vor.u32 %v1275, %v1276
        %v1279 = vrot.slane %v1275, 4
        %v1281 = vshrl.u32 %v1024, 16
        %v1283 = vrot.slane %v1281, 7
        %v1284 = vshll.u32 %v1024, 16
        %v1286 = vor.u32 %v1283, %v1284
        %v1287 = vsel %vm1033, %v1279, %v1286
        %v1288 = vrot.slane %v1283, 4
        %v1290 = vshrl.u32 %v1025, 16
        %v1292 = vrot.slane %v1290, 7
        %v1293 = vshll.u32 %v1025, 16
        %v1295 = vor.u32 %v1292, %v1293
        %v1296 = vrot.slane %v1292, 4
        %v1298 = vshrl.u32 %v1026, 16
        %v1300 = vrot.slane %v1298, 7
        %v1301 = vshll.u32 %v1026, 16
        %v1303 = vor.u32 %v1300, %v1301
        %v1304 = vsel %vm1033, %v1296, %v1303
        %v1305 = vrot.slane %v1300, 4
        %v1307 = vshrl.u32 %v1027, 16
        %v1309 = vrot.slane %v1307, 7
        %v1310 = vshll.u32 %v1027, 16
        %v1312 = vor.u32 %v1309, %v1310
        %v1313 = vrot.slane %v1309, 4
        %v1315 = vshrl.u32 %v1028, 16
        %v1317 = vrot.slane %v1315, 7
        %v1318 = vshll.u32 %v1028, 16
        %v1320 = vor.u32 %v1317, %v1318
        %v1321 = vsel %vm1033, %v1313, %v1320
        %v1322 = vrot.slane %v1317, 4
        %v1324 = vshrl.u32 %v1029, 16
        %v1326 = vrot.slane %v1324, 7
        %v1327 = vshll.u32 %v1029, 16
        %v1329 = vor.u32 %v1326, %v1327
        %v1330 = vrot.slane %v1326, 4
        %v1332 = vshrl.u32 %v1030, 16
        %v1334 = vrot.slane %v1332, 7
        %v1335 = vshll.u32 %v1030, 16
        %v1337 = vor.u32 %v1334, %v1335
        %v1338 = vsel %vm1033, %v1330, %v1337
        %v1339 = vrot.slane %v1334, 4
        %vm1394 = vcmask 257024
        %vm1395 = vsmask.f32 7938
        %vm1396 = vmand %vm1394, %vm1395
        %v1397 = vld [vmem:[#allocation2] sm:$0xf]
        %v1398 = vsel %vm1396, %v1040, %v1397
        %1399 = vst [vmem:[#allocation2] sm:$0xf] %v1398
        %vm1400 = vcmask 257024
        %1401 = vst.msk [vmem:[#allocation2 + $0x4] sm:$0xf] %vm1400, %v1049
        %vm1402 = vcmask 253952
        %vm1403 = vmand %vm1402, %vm1031
        %v1404 = vld [vmem:[#allocation2 + $0x8] sm:$0x1]
        %v1405 = vsel %vm1403, %v1050, %v1404
        %1406 = vst [vmem:[#allocation2 + $0x8] sm:$0x1] %v1405
        %v1407 = vld [vmem:[#allocation2 + $0xc] sm:$0xf]
        %v1408 = vsel %vm1396, %v1057, %v1407
        %1409 = vst [vmem:[#allocation2 + $0xc] sm:$0xf] %v1408
        %1410 = vst.msk [vmem:[#allocation2 + $0x10] sm:$0xf] %vm1400, %v1066
        %v1411 = vld [vmem:[#allocation2 + $0x14] sm:$0x1]
        %v1412 = vsel %vm1403, %v1067, %v1411
        %1413 = vst [vmem:[#allocation2 + $0x14] sm:$0x1] %v1412
        %v1414 = vld [vmem:[#allocation2 + $0x18] sm:$0xf]
        %v1415 = vsel %vm1396, %v1074, %v1414
        %1416 = vst [vmem:[#allocation2 + $0x18] sm:$0xf] %v1415
        %1417 = vst.msk [vmem:[#allocation2 + $0x1c] sm:$0xf] %vm1400, %v1083
        %v1418 = vld [vmem:[#allocation2 + $0x20] sm:$0x1]
        %v1419 = vsel %vm1403, %v1084, %v1418
        %1420 = vst [vmem:[#allocation2 + $0x20] sm:$0x1] %v1419
        %v1421 = vld [vmem:[#allocation2 + $0x24] sm:$0xf]
        %v1422 = vsel %vm1396, %v1091, %v1421
        %1423 = vst [vmem:[#allocation2 + $0x24] sm:$0xf] %v1422
        %1424 = vst.msk [vmem:[#allocation2 + $0x28] sm:$0xf] %vm1400, %v1100
        %v1425 = vld [vmem:[#allocation2 + $0x2c] sm:$0x1]
        %v1426 = vsel %vm1403, %v1101, %v1425
        %1427 = vst [vmem:[#allocation2 + $0x2c] sm:$0x1] %v1426
        %v1428 = vld [vmem:[#allocation2 + $0x30] sm:$0xf]
        %v1429 = vsel %vm1396, %v1108, %v1428
        %1430 = vst [vmem:[#allocation2 + $0x30] sm:$0xf] %v1429
        %1431 = vst.msk [vmem:[#allocation2 + $0x34] sm:$0xf] %vm1400, %v1117
        %v1432 = vld [vmem:[#allocation2 + $0x38] sm:$0x1]
        %v1433 = vsel %vm1403, %v1118, %v1432
        %1434 = vst [vmem:[#allocation2 + $0x38] sm:$0x1] %v1433
        %v1435 = vld [vmem:[#allocation2 + $0x3c] sm:$0xf]
        %v1436 = vsel %vm1396, %v1125, %v1435
        %1437 = vst [vmem:[#allocation2 + $0x3c] sm:$0xf] %v1436
        %1438 = vst.msk [vmem:[#allocation2 + $0x40] sm:$0xf] %vm1400, %v1134
        %v1439 = vld [vmem:[#allocation2 + $0x44] sm:$0x1]
        %v1440 = vsel %vm1403, %v1135, %v1439
        %1441 = vst [vmem:[#allocation2 + $0x44] sm:$0x1] %v1440
        %v1442 = vld [vmem:[#allocation2 + $0x48] sm:$0xf]
        %v1443 = vsel %vm1396, %v1142, %v1442
        %1444 = vst [vmem:[#allocation2 + $0x48] sm:$0xf] %v1443
        %1445 = vst.msk [vmem:[#allocation2 + $0x4c] sm:$0xf] %vm1400, %v1151
        %v1446 = vld [vmem:[#allocation2 + $0x50] sm:$0x1]
        %v1447 = vsel %vm1403, %v1152, %v1446
        %1448 = vst [vmem:[#allocation2 + $0x50] sm:$0x1] %v1447
        %v1449 = vld [vmem:[#allocation2 + $0x54] sm:$0xf]
        %v1450 = vsel %vm1396, %v1159, %v1449
        %1451 = vst [vmem:[#allocation2 + $0x54] sm:$0xf] %v1450
        %1452 = vst.msk [vmem:[#allocation2 + $0x58] sm:$0xf] %vm1400, %v1168
        %v1453 = vld [vmem:[#allocation2 + $0x5c] sm:$0x1]
        %v1454 = vsel %vm1403, %v1169, %v1453
        %1455 = vst [vmem:[#allocation2 + $0x5c] sm:$0x1] %v1454
        %v1456 = vld [vmem:[#allocation2 + $0x60] sm:$0xf]
        %v1457 = vsel %vm1396, %v1176, %v1456
        %1458 = vst [vmem:[#allocation2 + $0x60] sm:$0xf] %v1457
        %1459 = vst.msk [vmem:[#allocation2 + $0x64] sm:$0xf] %vm1400, %v1185
        %v1460 = vld [vmem:[#allocation2 + $0x68] sm:$0x1]
        %v1461 = vsel %vm1403, %v1186, %v1460
        %1462 = vst [vmem:[#allocation2 + $0x68] sm:$0x1] %v1461
        %v1463 = vld [vmem:[#allocation2 + $0x6c] sm:$0xf]
        %v1464 = vsel %vm1396, %v1193, %v1463
        %1465 = vst [vmem:[#allocation2 + $0x6c] sm:$0xf] %v1464
        %1466 = vst.msk [vmem:[#allocation2 + $0x70] sm:$0xf] %vm1400, %v1202
        %v1467 = vld [vmem:[#allocation2 + $0x74] sm:$0x1]
        %v1468 = vsel %vm1403, %v1203, %v1467
        %1469 = vst [vmem:[#allocation2 + $0x74] sm:$0x1] %v1468
        %v1470 = vld [vmem:[#allocation2 + $0x78] sm:$0xf]
        %v1471 = vsel %vm1396, %v1210, %v1470
        %1472 = vst [vmem:[#allocation2 + $0x78] sm:$0xf] %v1471
        %1473 = vst.msk [vmem:[#allocation2 + $0x7c] sm:$0xf] %vm1400, %v1219
        %v1474 = vld [vmem:[#allocation2 + $0x80] sm:$0x1]
        %v1475 = vsel %vm1403, %v1220, %v1474
        %1476 = vst [vmem:[#allocation2 + $0x80] sm:$0x1] %v1475
        %v1477 = vld [vmem:[#allocation2 + $0x84] sm:$0xf]
        %v1478 = vsel %vm1396, %v1227, %v1477
        %1479 = vst [vmem:[#allocation2 + $0x84] sm:$0xf] %v1478
        %1480 = vst.msk [vmem:[#allocation2 + $0x88] sm:$0xf] %vm1400, %v1236
        %v1481 = vld [vmem:[#allocation2 + $0x8c] sm:$0x1]
        %v1482 = vsel %vm1403, %v1237, %v1481
        %1483 = vst [vmem:[#allocation2 + $0x8c] sm:$0x1] %v1482
        %v1484 = vld [vmem:[#allocation2 + $0x90] sm:$0xf]
        %v1485 = vsel %vm1396, %v1244, %v1484
        %1486 = vst [vmem:[#allocation2 + $0x90] sm:$0xf] %v1485
        %1487 = vst.msk [vmem:[#allocation2 + $0x94] sm:$0xf] %vm1400, %v1253
        %v1488 = vld [vmem:[#allocation2 + $0x98] sm:$0x1]
        %v1489 = vsel %vm1403, %v1254, %v1488
        %1490 = vst [vmem:[#allocation2 + $0x98] sm:$0x1] %v1489
        %v1491 = vld [vmem:[#allocation2 + $0x9c] sm:$0xf]
        %v1492 = vsel %vm1396, %v1261, %v1491
        %1493 = vst [vmem:[#allocation2 + $0x9c] sm:$0xf] %v1492
        %1494 = vst.msk [vmem:[#allocation2 + $0xa0] sm:$0xf] %vm1400, %v1270
        %v1495 = vld [vmem:[#allocation2 + $0xa4] sm:$0x1]
        %v1496 = vsel %vm1403, %v1271, %v1495
        %1497 = vst [vmem:[#allocation2 + $0xa4] sm:$0x1] %v1496
        %v1498 = vld [vmem:[#allocation2 + $0xa8] sm:$0xf]
        %v1499 = vsel %vm1396, %v1278, %v1498
        %1500 = vst [vmem:[#allocation2 + $0xa8] sm:$0xf] %v1499
        %1501 = vst.msk [vmem:[#allocation2 + $0xac] sm:$0xf] %vm1400, %v1287
        %v1502 = vld [vmem:[#allocation2 + $0xb0] sm:$0x1]
        %v1503 = vsel %vm1403, %v1288, %v1502
        %1504 = vst [vmem:[#allocation2 + $0xb0] sm:$0x1] %v1503
        %v1505 = vld [vmem:[#allocation2 + $0xb4] sm:$0xf]
        %v1506 = vsel %vm1396, %v1295, %v1505
        %1507 = vst [vmem:[#allocation2 + $0xb4] sm:$0xf] %v1506
        %1508 = vst.msk [vmem:[#allocation2 + $0xb8] sm:$0xf] %vm1400, %v1304
        %v1509 = vld [vmem:[#allocation2 + $0xbc] sm:$0x1]
        %v1510 = vsel %vm1403, %v1305, %v1509
        %1511 = vst [vmem:[#allocation2 + $0xbc] sm:$0x1] %v1510
        %v1512 = vld [vmem:[#allocation2 + $0xc0] sm:$0xf]
        %v1513 = vsel %vm1396, %v1312, %v1512
        %1514 = vst [vmem:[#allocation2 + $0xc0] sm:$0xf] %v1513
        %1515 = vst.msk [vmem:[#allocation2 + $0xc4] sm:$0xf] %vm1400, %v1321
        %v1516 = vld [vmem:[#allocation2 + $0xc8] sm:$0x1]
        %v1517 = vsel %vm1403, %v1322, %v1516
        %1518 = vst [vmem:[#allocation2 + $0xc8] sm:$0x1] %v1517
        %v1519 = vld [vmem:[#allocation2 + $0xcc] sm:$0xf]
        %v1520 = vsel %vm1396, %v1329, %v1519
        %1521 = vst [vmem:[#allocation2 + $0xcc] sm:$0xf] %v1520
        %1522 = vst.msk [vmem:[#allocation2 + $0xd0] sm:$0xf] %vm1400, %v1338
        %v1523 = vld [vmem:[#allocation2 + $0xd4] sm:$0x1]
        %v1524 = vsel %vm1403, %v1339, %v1523
        %1525 = vst [vmem:[#allocation2 + $0xd4] sm:$0x1] %v1524
        %v1526 = vld [vmem:[#allocation2] sm:$0x1]
        %v1527 = vsel %vm1403, 0, %v1526
        %1528 = vst [vmem:[#allocation2] sm:$0x1] %v1527
        %v1529 = vld [vmem:[#allocation2 + $0xc] sm:$0x1]
        %v1530 = vsel %vm1403, 0, %v1529
        %1531 = vst [vmem:[#allocation2 + $0xc] sm:$0x1] %v1530
        %v1532 = vld [vmem:[#allocation2 + $0x18] sm:$0x1]
        %v1533 = vsel %vm1403, 0, %v1532
        %1534 = vst [vmem:[#allocation2 + $0x18] sm:$0x1] %v1533
        %v1535 = vld [vmem:[#allocation2 + $0x24] sm:$0x1]
        %v1536 = vsel %vm1403, 0, %v1535
        %1537 = vst [vmem:[#allocation2 + $0x24] sm:$0x1] %v1536
        %v1538 = vld [vmem:[#allocation2 + $0x30] sm:$0x1]
        %v1539 = vsel %vm1403, 0, %v1538
        %1540 = vst [vmem:[#allocation2 + $0x30] sm:$0x1] %v1539
        %v1541 = vld [vmem:[#allocation2 + $0x3c] sm:$0x1]
        %v1542 = vsel %vm1403, 0, %v1541
        %1543 = vst [vmem:[#allocation2 + $0x3c] sm:$0x1] %v1542
        %v1544 = vld [vmem:[#allocation2 + $0x48] sm:$0x1]
        %v1545 = vsel %vm1403, 0, %v1544
        %1546 = vst [vmem:[#allocation2 + $0x48] sm:$0x1] %v1545
        %v1547 = vld [vmem:[#allocation2 + $0x54] sm:$0x1]
        %v1548 = vsel %vm1403, 0, %v1547
        %1549 = vst [vmem:[#allocation2 + $0x54] sm:$0x1] %v1548
        %v1550 = vld [vmem:[#allocation2 + $0x60] sm:$0x1]
        %v1551 = vsel %vm1403, 0, %v1550
        %1552 = vst [vmem:[#allocation2 + $0x60] sm:$0x1] %v1551
        %v1553 = vld [vmem:[#allocation2 + $0x6c] sm:$0x1]
        %v1554 = vsel %vm1403, 0, %v1553
        %1555 = vst [vmem:[#allocation2 + $0x6c] sm:$0x1] %v1554
        %v1556 = vld [vmem:[#allocation2 + $0x78] sm:$0x1]
        %v1557 = vsel %vm1403, 0, %v1556
        %1558 = vst [vmem:[#allocation2 + $0x78] sm:$0x1] %v1557
        %v1559 = vld [vmem:[#allocation2 + $0x84] sm:$0x1]
        %v1560 = vsel %vm1403, 0, %v1559
        %1561 = vst [vmem:[#allocation2 + $0x84] sm:$0x1] %v1560
        %v1562 = vld [vmem:[#allocation2 + $0x90] sm:$0x1]
        %v1563 = vsel %vm1403, 0, %v1562
        %1564 = vst [vmem:[#allocation2 + $0x90] sm:$0x1] %v1563
        %v1565 = vld [vmem:[#allocation2 + $0x9c] sm:$0x1]
        %v1566 = vsel %vm1403, 0, %v1565
        %1567 = vst [vmem:[#allocation2 + $0x9c] sm:$0x1] %v1566
        %v1568 = vld [vmem:[#allocation2 + $0xa8] sm:$0x1]
        %v1569 = vsel %vm1403, 0, %v1568
        %1570 = vst [vmem:[#allocation2 + $0xa8] sm:$0x1] %v1569
        %v1571 = vld [vmem:[#allocation2 + $0xb4] sm:$0x1]
        %v1572 = vsel %vm1403, 0, %v1571
        %1573 = vst [vmem:[#allocation2 + $0xb4] sm:$0x1] %v1572
        %v1574 = vld [vmem:[#allocation2 + $0xc0] sm:$0x1]
        %v1575 = vsel %vm1403, 0, %v1574
        %1576 = vst [vmem:[#allocation2 + $0xc0] sm:$0x1] %v1575
        %v1577 = vld [vmem:[#allocation2 + $0xcc] sm:$0x1]
        %v1578 = vsel %vm1403, 0, %v1577
        %1579 = vst [vmem:[#allocation2 + $0xcc] sm:$0x1] %v1578
        %vm1580 = vmand %vm1402, %vm1395
        %v1581 = vld [vmem:[#allocation2 + $0x8] sm:$0x1]
        %v1582 = vsel %vm1580, 0, %v1581
        %1583 = vst [vmem:[#allocation2 + $0x8] sm:$0x1] %v1582
        %v1584 = vld [vmem:[#allocation2 + $0x14] sm:$0x1]
        %v1585 = vsel %vm1580, 0, %v1584
        %1586 = vst [vmem:[#allocation2 + $0x14] sm:$0x1] %v1585
        %v1587 = vld [vmem:[#allocation2 + $0x20] sm:$0x1]
        %v1588 = vsel %vm1580, 0, %v1587
        %1589 = vst [vmem:[#allocation2 + $0x20] sm:$0x1] %v1588
        %v1590 = vld [vmem:[#allocation2 + $0x2c] sm:$0x1]
        %v1591 = vsel %vm1580, 0, %v1590
        %1592 = vst [vmem:[#allocation2 + $0x2c] sm:$0x1] %v1591
        %v1593 = vld [vmem:[#allocation2 + $0x38] sm:$0x1]
        %v1594 = vsel %vm1580, 0, %v1593
        %1595 = vst [vmem:[#allocation2 + $0x38] sm:$0x1] %v1594
        %v1596 = vld [vmem:[#allocation2 + $0x44] sm:$0x1]
        %v1597 = vsel %vm1580, 0, %v1596
        %1598 = vst [vmem:[#allocation2 + $0x44] sm:$0x1] %v1597
        %v1599 = vld [vmem:[#allocation2 + $0x50] sm:$0x1]
        %v1600 = vsel %vm1580, 0, %v1599
        %1601 = vst [vmem:[#allocation2 + $0x50] sm:$0x1] %v1600
        %v1602 = vld [vmem:[#allocation2 + $0x5c] sm:$0x1]
        %v1603 = vsel %vm1580, 0, %v1602
        %1604 = vst [vmem:[#allocation2 + $0x5c] sm:$0x1] %v1603
        %v1605 = vld [vmem:[#allocation2 + $0x68] sm:$0x1]
        %v1606 = vsel %vm1580, 0, %v1605
        %1607 = vst [vmem:[#allocation2 + $0x68] sm:$0x1] %v1606
        %v1608 = vld [vmem:[#allocation2 + $0x74] sm:$0x1]
        %v1609 = vsel %vm1580, 0, %v1608
        %1610 = vst [vmem:[#allocation2 + $0x74] sm:$0x1] %v1609
        %v1611 = vld [vmem:[#allocation2 + $0x80] sm:$0x1]
        %v1612 = vsel %vm1580, 0, %v1611
        %1613 = vst [vmem:[#allocation2 + $0x80] sm:$0x1] %v1612
        %v1614 = vld [vmem:[#allocation2 + $0x8c] sm:$0x1]
        %v1615 = vsel %vm1580, 0, %v1614
        %1616 = vst [vmem:[#allocation2 + $0x8c] sm:$0x1] %v1615
        %v1617 = vld [vmem:[#allocation2 + $0x98] sm:$0x1]
        %v1618 = vsel %vm1580, 0, %v1617
        %1619 = vst [vmem:[#allocation2 + $0x98] sm:$0x1] %v1618
        %v1620 = vld [vmem:[#allocation2 + $0xa4] sm:$0x1]
        %v1621 = vsel %vm1580, 0, %v1620
        %1622 = vst [vmem:[#allocation2 + $0xa4] sm:$0x1] %v1621
        %v1623 = vld [vmem:[#allocation2 + $0xb0] sm:$0x1]
        %v1624 = vsel %vm1580, 0, %v1623
        %1625 = vst [vmem:[#allocation2 + $0xb0] sm:$0x1] %v1624
        %v1626 = vld [vmem:[#allocation2 + $0xbc] sm:$0x1]
        %v1627 = vsel %vm1580, 0, %v1626
        %1628 = vst [vmem:[#allocation2 + $0xbc] sm:$0x1] %v1627
        %v1629 = vld [vmem:[#allocation2 + $0xc8] sm:$0x1]
        %v1630 = vsel %vm1580, 0, %v1629
        %1631 = vst [vmem:[#allocation2 + $0xc8] sm:$0x1] %v1630
        %v1632 = vld [vmem:[#allocation2 + $0xd4] sm:$0x1]
        %v1633 = vsel %vm1580, 0, %v1632
        %1634 = vst [vmem:[#allocation2 + $0xd4] sm:$0x1] %v1633
        %p1635 = scmp.eq.s32.totalorder %s34, 0
        // Predicated region
        $region65: #{tpu_custom_call.1} parent=55 // pred_check
          %p1636 = pneg %p1635
        $region66: #{tpu_custom_call.1} parent=55 // pred_check_branch
          %1638 = sbr.rel (%p1636) target = $region68
        $region67: #{tpu_custom_call.1} parent=55 // pred_region
          %1639 = vst.msk [vmem:[#allocation2] sm:$0xf] %vm1400, 0
          %1640 = vst.msk [vmem:[#allocation2 + $0x4] sm:$0xf] %vm1400, 0
          %vm1641 = vcmask 253952
          %1642 = vst.msk [vmem:[#allocation2 + $0x8] sm:$0x1] %vm1641, 0
          %s1643 = scalar_lea.vmem [#allocation2], 204
          %1644 = vst.msk [vmem:[%s1643] sm:$0xf] %vm1400, 0
          %1645 = vst.msk [vmem:[%s1643 + $0x4] sm:$0xf] %vm1400, 0
          %1646 = vst.msk [vmem:[%s1643 + $0x8] sm:$0x1] %vm1641, 0
        $region68: #{tpu_custom_call.1} parent=55 // pred_fallthru
          _
        %v1647 = vld [vmem:[#allocation2] sm:$0xf]
        %v1648 = vld [vmem:[#allocation2 + $0x4] sm:$0xf]
        %v1649 = vld [vmem:[#allocation2 + $0xc] sm:$0xf]
        %v1650 = vld [vmem:[#allocation2 + $0x10] sm:$0xf]
        %v1651 = vld [vmem:[#allocation2 + $0x18] sm:$0xf]
        %v1652 = vld [vmem:[#allocation2 + $0x1c] sm:$0xf]
        %v1653 = vld [vmem:[#allocation2 + $0x24] sm:$0xf]
        %v1654 = vld [vmem:[#allocation2 + $0x28] sm:$0xf]
        %v1655 = vld [vmem:[#allocation2 + $0x30] sm:$0xf]
        %v1656 = vld [vmem:[#allocation2 + $0x34] sm:$0xf]
        %v1657 = vld [vmem:[#allocation2 + $0x3c] sm:$0xf]
        %v1658 = vld [vmem:[#allocation2 + $0x40] sm:$0xf]
        %v1659 = vld [vmem:[#allocation2 + $0x48] sm:$0xf]
        %v1660 = vld [vmem:[#allocation2 + $0x4c] sm:$0xf]
        %v1661 = vld [vmem:[#allocation2 + $0x54] sm:$0xf]
        %v1662 = vld [vmem:[#allocation2 + $0x58] sm:$0xf]
        %v1663 = vld [vmem:[#allocation2 + $0x60] sm:$0xf]
        %v1664 = vld [vmem:[#allocation2 + $0x64] sm:$0xf]
        %v1665 = vld [vmem:[#allocation2 + $0x6c] sm:$0xf]
        %v1666 = vld [vmem:[#allocation2 + $0x70] sm:$0xf]
        %v1667 = vld [vmem:[#allocation2 + $0x78] sm:$0xf]
        %v1668 = vld [vmem:[#allocation2 + $0x7c] sm:$0xf]
        %v1669 = vld [vmem:[#allocation2 + $0x84] sm:$0xf]
        %v1670 = vld [vmem:[#allocation2 + $0x88] sm:$0xf]
        %v1671 = vld [vmem:[#allocation2 + $0x90] sm:$0xf]
        %v1672 = vld [vmem:[#allocation2 + $0x94] sm:$0xf]
        %v1673 = vld [vmem:[#allocation2 + $0x9c] sm:$0xf]
        %v1674 = vld [vmem:[#allocation2 + $0xa0] sm:$0xf]
        %v1675 = vld [vmem:[#allocation2 + $0xa8] sm:$0xf]
        %v1676 = vld [vmem:[#allocation2 + $0xac] sm:$0xf]
        %v1677 = vld [vmem:[#allocation2 + $0xb4] sm:$0xf]
        %v1678 = vld [vmem:[#allocation2 + $0xb8] sm:$0xf]
        %1679 = vst.msk [vmem:[#allocation3] sm:$0xf] %vm1400, %v1647
        %1680 = vst.msk [vmem:[#allocation3 + $0xc] sm:$0xf] %vm1400, %v1648
        %1681 = vst.msk [vmem:[#allocation3 + $0x18] sm:$0xf] %vm1400, %v1649
        %1682 = vst.msk [vmem:[#allocation3 + $0x24] sm:$0xf] %vm1400, %v1650
        %1683 = vst.msk [vmem:[#allocation3 + $0x30] sm:$0xf] %vm1400, %v1651
        %1684 = vst.msk [vmem:[#allocation3 + $0x3c] sm:$0xf] %vm1400, %v1652
        %1685 = vst.msk [vmem:[#allocation3 + $0x48] sm:$0xf] %vm1400, %v1653
        %1686 = vst.msk [vmem:[#allocation3 + $0x54] sm:$0xf] %vm1400, %v1654
        %1687 = vst.msk [vmem:[#allocation3 + $0x60] sm:$0xf] %vm1400, %v1655
        %1688 = vst.msk [vmem:[#allocation3 + $0x6c] sm:$0xf] %vm1400, %v1656
        %1689 = vst.msk [vmem:[#allocation3 + $0x78] sm:$0xf] %vm1400, %v1657
        %1690 = vst.msk [vmem:[#allocation3 + $0x84] sm:$0xf] %vm1400, %v1658
        %1691 = vst.msk [vmem:[#allocation3 + $0x90] sm:$0xf] %vm1400, %v1659
        %1692 = vst.msk [vmem:[#allocation3 + $0x9c] sm:$0xf] %vm1400, %v1660
        %1693 = vst.msk [vmem:[#allocation3 + $0xa8] sm:$0xf] %vm1400, %v1661
        %1694 = vst.msk [vmem:[#allocation3 + $0xb4] sm:$0xf] %vm1400, %v1662
        %1695 = vst.msk [vmem:[#allocation3 + $0xc0] sm:$0xf] %vm1400, %v1663
        %1696 = vst.msk [vmem:[#allocation3 + $0xcc] sm:$0xf] %vm1400, %v1664
        %1697 = vst.msk [vmem:[#allocation3 + $0xd8] sm:$0xf] %vm1400, %v1665
        %1698 = vst.msk [vmem:[#allocation3 + $0xe4] sm:$0xf] %vm1400, %v1666
        %1699 = vst.msk [vmem:[#allocation3 + $0xf0] sm:$0xf] %vm1400, %v1667
        %1700 = vst.msk [vmem:[#allocation3 + $0xfc] sm:$0xf] %vm1400, %v1668
        %1701 = vst.msk [vmem:[#allocation3 + $0x108] sm:$0xf] %vm1400, %v1669
        %1702 = vst.msk [vmem:[#allocation3 + $0x114] sm:$0xf] %vm1400, %v1670
        %1703 = vst.msk [vmem:[#allocation3 + $0x120] sm:$0xf] %vm1400, %v1671
        %1704 = vst.msk [vmem:[#allocation3 + $0x12c] sm:$0xf] %vm1400, %v1672
        %1705 = vst.msk [vmem:[#allocation3 + $0x138] sm:$0xf] %vm1400, %v1673
        %1706 = vst.msk [vmem:[#allocation3 + $0x144] sm:$0xf] %vm1400, %v1674
        %1707 = vst.msk [vmem:[#allocation3 + $0x150] sm:$0xf] %vm1400, %v1675
        %1708 = vst.msk [vmem:[#allocation3 + $0x15c] sm:$0xf] %vm1400, %v1676
        %1709 = vst.msk [vmem:[#allocation3 + $0x168] sm:$0xf] %vm1400, %v1677
        %1710 = vst.msk [vmem:[#allocation3 + $0x174] sm:$0xf] %vm1400, %v1678
        %v1711 = vld [vmem:[#allocation2] sm:$0xf]
        %v1712 = vld [vmem:[#allocation2 + $0x4] sm:$0xf]
        %v1713 = vld [vmem:[#allocation2 + $0x8] sm:$0x1]
        %v1714 = vld [vmem:[#allocation2 + $0xc] sm:$0xf]
        %v1715 = vld [vmem:[#allocation2 + $0x10] sm:$0xf]
        %v1716 = vld [vmem:[#allocation2 + $0x14] sm:$0x1]
        %v1717 = vld [vmem:[#allocation2 + $0x18] sm:$0xf]
        %v1718 = vld [vmem:[#allocation2 + $0x1c] sm:$0xf]
        %v1719 = vld [vmem:[#allocation2 + $0x20] sm:$0x1]
        %v1720 = vld [vmem:[#allocation2 + $0x24] sm:$0xf]
        %v1721 = vld [vmem:[#allocation2 + $0x28] sm:$0xf]
        %v1722 = vld [vmem:[#allocation2 + $0x2c] sm:$0x1]
        %v1723 = vld [vmem:[#allocation2 + $0x30] sm:$0xf]
        %v1724 = vld [vmem:[#allocation2 + $0x34] sm:$0xf]
        %v1725 = vld [vmem:[#allocation2 + $0x38] sm:$0x1]
        %v1726 = vld [vmem:[#allocation2 + $0x3c] sm:$0xf]
        %v1727 = vld [vmem:[#allocation2 + $0x40] sm:$0xf]
        %v1728 = vld [vmem:[#allocation2 + $0x44] sm:$0x1]
        %v1729 = vld [vmem:[#allocation2 + $0x48] sm:$0xf]
        %v1730 = vld [vmem:[#allocation2 + $0x4c] sm:$0xf]
        %v1731 = vld [vmem:[#allocation2 + $0x50] sm:$0x1]
        %v1732 = vld [vmem:[#allocation2 + $0x54] sm:$0xf]
        %v1733 = vld [vmem:[#allocation2 + $0x58] sm:$0xf]
        %v1734 = vld [vmem:[#allocation2 + $0x5c] sm:$0x1]
        %v1735 = vld [vmem:[#allocation2 + $0x60] sm:$0xf]
        %v1736 = vld [vmem:[#allocation2 + $0x64] sm:$0xf]
        %v1737 = vld [vmem:[#allocation2 + $0x68] sm:$0x1]
        %v1738 = vld [vmem:[#allocation2 + $0x6c] sm:$0xf]
        %v1739 = vld [vmem:[#allocation2 + $0x70] sm:$0xf]
        %v1740 = vld [vmem:[#allocation2 + $0x74] sm:$0x1]
        %v1741 = vld [vmem:[#allocation2 + $0x78] sm:$0xf]
        %v1742 = vld [vmem:[#allocation2 + $0x7c] sm:$0xf]
        %v1743 = vld [vmem:[#allocation2 + $0x80] sm:$0x1]
        %v1744 = vld [vmem:[#allocation2 + $0x84] sm:$0xf]
        %v1745 = vld [vmem:[#allocation2 + $0x88] sm:$0xf]
        %v1746 = vld [vmem:[#allocation2 + $0x8c] sm:$0x1]
        %v1747 = vld [vmem:[#allocation2 + $0x90] sm:$0xf]
        %v1748 = vld [vmem:[#allocation2 + $0x94] sm:$0xf]
        %v1749 = vld [vmem:[#allocation2 + $0x98] sm:$0x1]
        %v1750 = vld [vmem:[#allocation2 + $0x9c] sm:$0xf]
        %v1751 = vld [vmem:[#allocation2 + $0xa0] sm:$0xf]
        %v1752 = vld [vmem:[#allocation2 + $0xa4] sm:$0x1]
        %v1753 = vld [vmem:[#allocation2 + $0xa8] sm:$0xf]
        %v1754 = vld [vmem:[#allocation2 + $0xac] sm:$0xf]
        %v1755 = vld [vmem:[#allocation2 + $0xb0] sm:$0x1]
        %v1756 = vld [vmem:[#allocation2 + $0xb4] sm:$0xf]
        %v1757 = vld [vmem:[#allocation2 + $0xb8] sm:$0xf]
        %v1758 = vld [vmem:[#allocation2 + $0xbc] sm:$0x1]
        %vm1759 = vsmask.f32 3328
        %vm1760 = vsmask.f32 7440
        %vm1761 = vmor %vm1759, %vm1760
        %v1763 = vshrl.u32 %v1711, 16
        %v1765 = vrot.slane %v1763, 4
        %v1766 = vshll.u32 %v1711, 16
        %v1768 = vrot.slane %v1766, 5
        %v1769 = vor.u32 %v1765, %v1768
        %v1770 = vrot.slane %v1769, 4
        %v1772 = vshll.u32 %v1712, 16
        %v1774 = vrot.slane %v1772, 5
        %v1775 = vsel %vm1761, %v1770, %v1774
        %v1776 = vshrl.u32 %v1712, 16
        %v1778 = vrot.slane %v1776, 4
        %v1779 = vor.u32 %v1778, %v1774
        %v1780 = vrot.slane %v1779, 4
        %v1782 = vshll.u32 %v1713, 16
        %v1784 = vrot.slane %v1782, 5
        %v1785 = vsel %vm1761, %v1780, %v1784
        %v1787 = vshrl.u32 %v1714, 16
        %v1789 = vrot.slane %v1787, 4
        %v1790 = vshll.u32 %v1714, 16
        %v1792 = vrot.slane %v1790, 5
        %v1793 = vor.u32 %v1789, %v1792
        %v1794 = vrot.slane %v1793, 4
        %v1796 = vshll.u32 %v1715, 16
        %v1798 = vrot.slane %v1796, 5
        %v1799 = vsel %vm1761, %v1794, %v1798
        %v1800 = vshrl.u32 %v1715, 16
        %v1802 = vrot.slane %v1800, 4
        %v1803 = vor.u32 %v1802, %v1798
        %v1804 = vrot.slane %v1803, 4
        %v1806 = vshll.u32 %v1716, 16
        %v1808 = vrot.slane %v1806, 5
        %v1809 = vsel %vm1761, %v1804, %v1808
        %v1811 = vshrl.u32 %v1717, 16
        %v1813 = vrot.slane %v1811, 4
        %v1814 = vshll.u32 %v1717, 16
        %v1816 = vrot.slane %v1814, 5
        %v1817 = vor.u32 %v1813, %v1816
        %v1818 = vrot.slane %v1817, 4
        %v1820 = vshll.u32 %v1718, 16
        %v1822 = vrot.slane %v1820, 5
        %v1823 = vsel %vm1761, %v1818, %v1822
        %v1824 = vshrl.u32 %v1718, 16
        %v1826 = vrot.slane %v1824, 4
        %v1827 = vor.u32 %v1826, %v1822
        %v1828 = vrot.slane %v1827, 4
        %v1830 = vshll.u32 %v1719, 16
        %v1832 = vrot.slane %v1830, 5
        %v1833 = vsel %vm1761, %v1828, %v1832
        %v1835 = vshrl.u32 %v1720, 16
        %v1837 = vrot.slane %v1835, 4
        %v1838 = vshll.u32 %v1720, 16
        %v1840 = vrot.slane %v1838, 5
        %v1841 = vor.u32 %v1837, %v1840
        %v1842 = vrot.slane %v1841, 4
        %v1844 = vshll.u32 %v1721, 16
        %v1846 = vrot.slane %v1844, 5
        %v1847 = vsel %vm1761, %v1842, %v1846
        %v1848 = vshrl.u32 %v1721, 16
        %v1850 = vrot.slane %v1848, 4
        %v1851 = vor.u32 %v1850, %v1846
        %v1852 = vrot.slane %v1851, 4
        %v1854 = vshll.u32 %v1722, 16
        %v1856 = vrot.slane %v1854, 5
        %v1857 = vsel %vm1761, %v1852, %v1856
        %v1859 = vshrl.u32 %v1723, 16
        %v1861 = vrot.slane %v1859, 4
        %v1862 = vshll.u32 %v1723, 16
        %v1864 = vrot.slane %v1862, 5
        %v1865 = vor.u32 %v1861, %v1864
        %v1866 = vrot.slane %v1865, 4
        %v1868 = vshll.u32 %v1724, 16
        %v1870 = vrot.slane %v1868, 5
        %v1871 = vsel %vm1761, %v1866, %v1870
        %v1872 = vshrl.u32 %v1724, 16
        %v1874 = vrot.slane %v1872, 4
        %v1875 = vor.u32 %v1874, %v1870
        %v1876 = vrot.slane %v1875, 4
        %v1878 = vshll.u32 %v1725, 16
        %v1880 = vrot.slane %v1878, 5
        %v1881 = vsel %vm1761, %v1876, %v1880
        %v1883 = vshrl.u32 %v1726, 16
        %v1885 = vrot.slane %v1883, 4
        %v1886 = vshll.u32 %v1726, 16
        %v1888 = vrot.slane %v1886, 5
        %v1889 = vor.u32 %v1885, %v1888
        %v1890 = vrot.slane %v1889, 4
        %v1892 = vshll.u32 %v1727, 16
        %v1894 = vrot.slane %v1892, 5
        %v1895 = vsel %vm1761, %v1890, %v1894
        %v1896 = vshrl.u32 %v1727, 16
        %v1898 = vrot.slane %v1896, 4
        %v1899 = vor.u32 %v1898, %v1894
        %v1900 = vrot.slane %v1899, 4
        %v1902 = vshll.u32 %v1728, 16
        %v1904 = vrot.slane %v1902, 5
        %v1905 = vsel %vm1761, %v1900, %v1904
        %v1907 = vshrl.u32 %v1729, 16
        %v1909 = vrot.slane %v1907, 4
        %v1910 = vshll.u32 %v1729, 16
        %v1912 = vrot.slane %v1910, 5
        %v1913 = vor.u32 %v1909, %v1912
        %v1914 = vrot.slane %v1913, 4
        %v1916 = vshll.u32 %v1730, 16
        %v1918 = vrot.slane %v1916, 5
        %v1919 = vsel %vm1761, %v1914, %v1918
        %v1920 = vshrl.u32 %v1730, 16
        %v1922 = vrot.slane %v1920, 4
        %v1923 = vor.u32 %v1922, %v1918
        %v1924 = vrot.slane %v1923, 4
        %v1926 = vshll.u32 %v1731, 16
        %v1928 = vrot.slane %v1926, 5
        %v1929 = vsel %vm1761, %v1924, %v1928
        %v1931 = vshrl.u32 %v1732, 16
        %v1933 = vrot.slane %v1931, 4
        %v1934 = vshll.u32 %v1732, 16
        %v1936 = vrot.slane %v1934, 5
        %v1937 = vor.u32 %v1933, %v1936
        %v1938 = vrot.slane %v1937, 4
        %v1940 = vshll.u32 %v1733, 16
        %v1942 = vrot.slane %v1940, 5
        %v1943 = vsel %vm1761, %v1938, %v1942
        %v1944 = vshrl.u32 %v1733, 16
        %v1946 = vrot.slane %v1944, 4
        %v1947 = vor.u32 %v1946, %v1942
        %v1948 = vrot.slane %v1947, 4
        %v1950 = vshll.u32 %v1734, 16
        %v1952 = vrot.slane %v1950, 5
        %v1953 = vsel %vm1761, %v1948, %v1952
        %v1955 = vshrl.u32 %v1735, 16
        %v1957 = vrot.slane %v1955, 4
        %v1958 = vshll.u32 %v1735, 16
        %v1960 = vrot.slane %v1958, 5
        %v1961 = vor.u32 %v1957, %v1960
        %v1962 = vrot.slane %v1961, 4
        %v1964 = vshll.u32 %v1736, 16
        %v1966 = vrot.slane %v1964, 5
        %v1967 = vsel %vm1761, %v1962, %v1966
        %v1968 = vshrl.u32 %v1736, 16
        %v1970 = vrot.slane %v1968, 4
        %v1971 = vor.u32 %v1970, %v1966
        %v1972 = vrot.slane %v1971, 4
        %v1974 = vshll.u32 %v1737, 16
        %v1976 = vrot.slane %v1974, 5
        %v1977 = vsel %vm1761, %v1972, %v1976
        %v1979 = vshrl.u32 %v1738, 16
        %v1981 = vrot.slane %v1979, 4
        %v1982 = vshll.u32 %v1738, 16
        %v1984 = vrot.slane %v1982, 5
        %v1985 = vor.u32 %v1981, %v1984
        %v1986 = vrot.slane %v1985, 4
        %v1988 = vshll.u32 %v1739, 16
        %v1990 = vrot.slane %v1988, 5
        %v1991 = vsel %vm1761, %v1986, %v1990
        %v1992 = vshrl.u32 %v1739, 16
        %v1994 = vrot.slane %v1992, 4
        %v1995 = vor.u32 %v1994, %v1990
        %v1996 = vrot.slane %v1995, 4
        %v1998 = vshll.u32 %v1740, 16
        %v2000 = vrot.slane %v1998, 5
        %v2001 = vsel %vm1761, %v1996, %v2000
        %v2003 = vshrl.u32 %v1741, 16
        %v2005 = vrot.slane %v2003, 4
        %v2006 = vshll.u32 %v1741, 16
        %v2008 = vrot.slane %v2006, 5
        %v2009 = vor.u32 %v2005, %v2008
        %v2010 = vrot.slane %v2009, 4
        %v2012 = vshll.u32 %v1742, 16
        %v2014 = vrot.slane %v2012, 5
        %v2015 = vsel %vm1761, %v2010, %v2014
        %v2016 = vshrl.u32 %v1742, 16
        %v2018 = vrot.slane %v2016, 4
        %v2019 = vor.u32 %v2018, %v2014
        %v2020 = vrot.slane %v2019, 4
        %v2022 = vshll.u32 %v1743, 16
        %v2024 = vrot.slane %v2022, 5
        %v2025 = vsel %vm1761, %v2020, %v2024
        %v2027 = vshrl.u32 %v1744, 16
        %v2029 = vrot.slane %v2027, 4
        %v2030 = vshll.u32 %v1744, 16
        %v2032 = vrot.slane %v2030, 5
        %v2033 = vor.u32 %v2029, %v2032
        %v2034 = vrot.slane %v2033, 4
        %v2036 = vshll.u32 %v1745, 16
        %v2038 = vrot.slane %v2036, 5
        %v2039 = vsel %vm1761, %v2034, %v2038
        %v2040 = vshrl.u32 %v1745, 16
        %v2042 = vrot.slane %v2040, 4
        %v2043 = vor.u32 %v2042, %v2038
        %v2044 = vrot.slane %v2043, 4
        %v2046 = vshll.u32 %v1746, 16
        %v2048 = vrot.slane %v2046, 5
        %v2049 = vsel %vm1761, %v2044, %v2048
        %v2051 = vshrl.u32 %v1747, 16
        %v2053 = vrot.slane %v2051, 4
        %v2054 = vshll.u32 %v1747, 16
        %v2056 = vrot.slane %v2054, 5
        %v2057 = vor.u32 %v2053, %v2056
        %v2058 = vrot.slane %v2057, 4
        %v2060 = vshll.u32 %v1748, 16
        %v2062 = vrot.slane %v2060, 5
        %v2063 = vsel %vm1761, %v2058, %v2062
        %v2064 = vshrl.u32 %v1748, 16
        %v2066 = vrot.slane %v2064, 4
        %v2067 = vor.u32 %v2066, %v2062
        %v2068 = vrot.slane %v2067, 4
        %v2070 = vshll.u32 %v1749, 16
        %v2072 = vrot.slane %v2070, 5
        %v2073 = vsel %vm1761, %v2068, %v2072
        %v2075 = vshrl.u32 %v1750, 16
        %v2077 = vrot.slane %v2075, 4
        %v2078 = vshll.u32 %v1750, 16
        %v2080 = vrot.slane %v2078, 5
        %v2081 = vor.u32 %v2077, %v2080
        %v2082 = vrot.slane %v2081, 4
        %v2084 = vshll.u32 %v1751, 16
        %v2086 = vrot.slane %v2084, 5
        %v2087 = vsel %vm1761, %v2082, %v2086
        %v2088 = vshrl.u32 %v1751, 16
        %v2090 = vrot.slane %v2088, 4
        %v2091 = vor.u32 %v2090, %v2086
        %v2092 = vrot.slane %v2091, 4
        %v2094 = vshll.u32 %v1752, 16
        %v2096 = vrot.slane %v2094, 5
        %v2097 = vsel %vm1761, %v2092, %v2096
        %v2099 = vshrl.u32 %v1753, 16
        %v2101 = vrot.slane %v2099, 4
        %v2102 = vshll.u32 %v1753, 16
        %v2104 = vrot.slane %v2102, 5
        %v2105 = vor.u32 %v2101, %v2104
        %v2106 = vrot.slane %v2105, 4
        %v2108 = vshll.u32 %v1754, 16
        %v2110 = vrot.slane %v2108, 5
        %v2111 = vsel %vm1761, %v2106, %v2110
        %v2112 = vshrl.u32 %v1754, 16
        %v2114 = vrot.slane %v2112, 4
        %v2115 = vor.u32 %v2114, %v2110
        %v2116 = vrot.slane %v2115, 4
        %v2118 = vshll.u32 %v1755, 16
        %v2120 = vrot.slane %v2118, 5
        %v2121 = vsel %vm1761, %v2116, %v2120
        %v2123 = vshrl.u32 %v1756, 16
        %v2125 = vrot.slane %v2123, 4
        %v2126 = vshll.u32 %v1756, 16
        %v2128 = vrot.slane %v2126, 5
        %v2129 = vor.u32 %v2125, %v2128
        %v2130 = vrot.slane %v2129, 4
        %v2132 = vshll.u32 %v1757, 16
        %v2134 = vrot.slane %v2132, 5
        %v2135 = vsel %vm1761, %v2130, %v2134
        %v2136 = vshrl.u32 %v1757, 16
        %v2138 = vrot.slane %v2136, 4
        %v2139 = vor.u32 %v2138, %v2134
        %v2140 = vrot.slane %v2139, 4
        %v2142 = vshll.u32 %v1758, 16
        %v2144 = vrot.slane %v2142, 5
        %v2145 = vsel %vm1761, %v2140, %v2144
        %2146 = vrot.lane.b32.xlu0 %v1775, 32
        %v2147 = vpop.permute.xlu0 %2146
        %2148 = vrot.lane.b32.xlu0 %v1785, 32
        %v2149 = vpop.permute.xlu0 %2148
        %2150 = vrot.lane.b32.xlu0 %v1799, 32
        %v2151 = vpop.permute.xlu0 %2150
        %2152 = vrot.lane.b32.xlu0 %v1809, 32
        %v2153 = vpop.permute.xlu0 %2152
        %2154 = vrot.lane.b32.xlu0 %v1823, 32
        %v2155 = vpop.permute.xlu0 %2154
        %2156 = vrot.lane.b32.xlu0 %v1833, 32
        %v2157 = vpop.permute.xlu0 %2156
        %2158 = vrot.lane.b32.xlu0 %v1847, 32
        %v2159 = vpop.permute.xlu0 %2158
        %2160 = vrot.lane.b32.xlu0 %v1857, 32
        %v2161 = vpop.permute.xlu0 %2160
        %2162 = vrot.lane.b32.xlu0 %v1871, 32
        %v2163 = vpop.permute.xlu0 %2162
        %2164 = vrot.lane.b32.xlu0 %v1881, 32
        %v2165 = vpop.permute.xlu0 %2164
        %2166 = vrot.lane.b32.xlu0 %v1895, 32
        %v2167 = vpop.permute.xlu0 %2166
        %2168 = vrot.lane.b32.xlu0 %v1905, 32
        %v2169 = vpop.permute.xlu0 %2168
        %2170 = vrot.lane.b32.xlu0 %v1919, 32
        %v2171 = vpop.permute.xlu0 %2170
        %2172 = vrot.lane.b32.xlu0 %v1929, 32
        %v2173 = vpop.permute.xlu0 %2172
        %2174 = vrot.lane.b32.xlu0 %v1943, 32
        %v2175 = vpop.permute.xlu0 %2174
        %2176 = vrot.lane.b32.xlu0 %v1953, 32
        %v2177 = vpop.permute.xlu0 %2176
        %2178 = vrot.lane.b32.xlu0 %v1967, 32
        %v2179 = vpop.permute.xlu0 %2178
        %2180 = vrot.lane.b32.xlu0 %v1977, 32
        %v2181 = vpop.permute.xlu0 %2180
        %2182 = vrot.lane.b32.xlu0 %v1991, 32
        %v2183 = vpop.permute.xlu0 %2182
        %2184 = vrot.lane.b32.xlu0 %v2001, 32
        %v2185 = vpop.permute.xlu0 %2184
        %2186 = vrot.lane.b32.xlu0 %v2015, 32
        %v2187 = vpop.permute.xlu0 %2186
        %2188 = vrot.lane.b32.xlu0 %v2025, 32
        %v2189 = vpop.permute.xlu0 %2188
        %2190 = vrot.lane.b32.xlu0 %v2039, 32
        %v2191 = vpop.permute.xlu0 %2190
        %2192 = vrot.lane.b32.xlu0 %v2049, 32
        %v2193 = vpop.permute.xlu0 %2192
        %2194 = vrot.lane.b32.xlu0 %v2063, 32
        %v2195 = vpop.permute.xlu0 %2194
        %2196 = vrot.lane.b32.xlu0 %v2073, 32
        %v2197 = vpop.permute.xlu0 %2196
        %2198 = vrot.lane.b32.xlu0 %v2087, 32
        %v2199 = vpop.permute.xlu0 %2198
        %2200 = vrot.lane.b32.xlu0 %v2097, 32
        %v2201 = vpop.permute.xlu0 %2200
        %2202 = vrot.lane.b32.xlu0 %v2111, 32
        %v2203 = vpop.permute.xlu0 %2202
        %2204 = vrot.lane.b32.xlu0 %v2121, 32
        %v2205 = vpop.permute.xlu0 %2204
        %2206 = vrot.lane.b32.xlu0 %v2135, 32
        %v2207 = vpop.permute.xlu0 %2206
        %2208 = vrot.lane.b32.xlu0 %v2145, 32
        %v2209 = vpop.permute.xlu0 %2208
        %vm2242 = vcmask 519424
        %2243 = vst.msk [vmem:[#allocation3] sm:$0xf] %vm2242, %v2147
        %2244 = vst.msk [vmem:[#allocation3 + $0xc] sm:$0xf] %vm2242, %v2149
        %2245 = vst.msk [vmem:[#allocation3 + $0x18] sm:$0xf] %vm2242, %v2151
        %2246 = vst.msk [vmem:[#allocation3 + $0x24] sm:$0xf] %vm2242, %v2153
        %2247 = vst.msk [vmem:[#allocation3 + $0x30] sm:$0xf] %vm2242, %v2155
        %2248 = vst.msk [vmem:[#allocation3 + $0x3c] sm:$0xf] %vm2242, %v2157
        %2249 = vst.msk [vmem:[#allocation3 + $0x48] sm:$0xf] %vm2242, %v2159
        %2250 = vst.msk [vmem:[#allocation3 + $0x54] sm:$0xf] %vm2242, %v2161
        %2251 = vst.msk [vmem:[#allocation3 + $0x60] sm:$0xf] %vm2242, %v2163
        %2252 = vst.msk [vmem:[#allocation3 + $0x6c] sm:$0xf] %vm2242, %v2165
        %2253 = vst.msk [vmem:[#allocation3 + $0x78] sm:$0xf] %vm2242, %v2167
        %2254 = vst.msk [vmem:[#allocation3 + $0x84] sm:$0xf] %vm2242, %v2169
        %2255 = vst.msk [vmem:[#allocation3 + $0x90] sm:$0xf] %vm2242, %v2171
        %2256 = vst.msk [vmem:[#allocation3 + $0x9c] sm:$0xf] %vm2242, %v2173
        %2257 = vst.msk [vmem:[#allocation3 + $0xa8] sm:$0xf] %vm2242, %v2175
        %2258 = vst.msk [vmem:[#allocation3 + $0xb4] sm:$0xf] %vm2242, %v2177
        %2259 = vst.msk [vmem:[#allocation3 + $0xc0] sm:$0xf] %vm2242, %v2179
        %2260 = vst.msk [vmem:[#allocation3 + $0xcc] sm:$0xf] %vm2242, %v2181
        %2261 = vst.msk [vmem:[#allocation3 + $0xd8] sm:$0xf] %vm2242, %v2183
        %2262 = vst.msk [vmem:[#allocation3 + $0xe4] sm:$0xf] %vm2242, %v2185
        %2263 = vst.msk [vmem:[#allocation3 + $0xf0] sm:$0xf] %vm2242, %v2187
        %2264 = vst.msk [vmem:[#allocation3 + $0xfc] sm:$0xf] %vm2242, %v2189
        %2265 = vst.msk [vmem:[#allocation3 + $0x108] sm:$0xf] %vm2242, %v2191
        %2266 = vst.msk [vmem:[#allocation3 + $0x114] sm:$0xf] %vm2242, %v2193
        %2267 = vst.msk [vmem:[#allocation3 + $0x120] sm:$0xf] %vm2242, %v2195
        %2268 = vst.msk [vmem:[#allocation3 + $0x12c] sm:$0xf] %vm2242, %v2197
        %2269 = vst.msk [vmem:[#allocation3 + $0x138] sm:$0xf] %vm2242, %v2199
        %2270 = vst.msk [vmem:[#allocation3 + $0x144] sm:$0xf] %vm2242, %v2201
        %2271 = vst.msk [vmem:[#allocation3 + $0x150] sm:$0xf] %vm2242, %v2203
        %2272 = vst.msk [vmem:[#allocation3 + $0x15c] sm:$0xf] %vm2242, %v2205
        %2273 = vst.msk [vmem:[#allocation3 + $0x168] sm:$0xf] %vm2242, %v2207
        %2274 = vst.msk [vmem:[#allocation3 + $0x174] sm:$0xf] %vm2242, %v2209
        %v2275 = vld [vmem:[#allocation2] sm:$0xe]
        %v2276 = vld [vmem:[#allocation2 + $0x4] sm:$0xf]
        %v2277 = vld [vmem:[#allocation2 + $0x8] sm:$0x1]
        %v2278 = vld [vmem:[#allocation2 + $0xc] sm:$0xe]
        %v2279 = vld [vmem:[#allocation2 + $0x10] sm:$0xf]
        %v2280 = vld [vmem:[#allocation2 + $0x14] sm:$0x1]
        %v2281 = vld [vmem:[#allocation2 + $0x18] sm:$0xe]
        %v2282 = vld [vmem:[#allocation2 + $0x1c] sm:$0xf]
        %v2283 = vld [vmem:[#allocation2 + $0x20] sm:$0x1]
        %v2284 = vld [vmem:[#allocation2 + $0x24] sm:$0xe]
        %v2285 = vld [vmem:[#allocation2 + $0x28] sm:$0xf]
        %v2286 = vld [vmem:[#allocation2 + $0x2c] sm:$0x1]
        %v2287 = vld [vmem:[#allocation2 + $0x30] sm:$0xe]
        %v2288 = vld [vmem:[#allocation2 + $0x34] sm:$0xf]
        %v2289 = vld [vmem:[#allocation2 + $0x38] sm:$0x1]
        %v2290 = vld [vmem:[#allocation2 + $0x3c] sm:$0xe]
        %v2291 = vld [vmem:[#allocation2 + $0x40] sm:$0xf]
        %v2292 = vld [vmem:[#allocation2 + $0x44] sm:$0x1]
        %v2293 = vld [vmem:[#allocation2 + $0x48] sm:$0xe]
        %v2294 = vld [vmem:[#allocation2 + $0x4c] sm:$0xf]
        %v2295 = vld [vmem:[#allocation2 + $0x50] sm:$0x1]
        %v2296 = vld [vmem:[#allocation2 + $0x54] sm:$0xe]
        %v2297 = vld [vmem:[#allocation2 + $0x58] sm:$0xf]
        %v2298 = vld [vmem:[#allocation2 + $0x5c] sm:$0x1]
        %v2299 = vld [vmem:[#allocation2 + $0x60] sm:$0xe]
        %v2300 = vld [vmem:[#allocation2 + $0x64] sm:$0xf]
        %v2301 = vld [vmem:[#allocation2 + $0x68] sm:$0x1]
        %v2302 = vld [vmem:[#allocation2 + $0x6c] sm:$0xe]
        %v2303 = vld [vmem:[#allocation2 + $0x70] sm:$0xf]
        %v2304 = vld [vmem:[#allocation2 + $0x74] sm:$0x1]
        %v2305 = vld [vmem:[#allocation2 + $0x78] sm:$0xe]
        %v2306 = vld [vmem:[#allocation2 + $0x7c] sm:$0xf]
        %v2307 = vld [vmem:[#allocation2 + $0x80] sm:$0x1]
        %v2308 = vld [vmem:[#allocation2 + $0x84] sm:$0xe]
        %v2309 = vld [vmem:[#allocation2 + $0x88] sm:$0xf]
        %v2310 = vld [vmem:[#allocation2 + $0x8c] sm:$0x1]
        %v2311 = vld [vmem:[#allocation2 + $0x90] sm:$0xe]
        %v2312 = vld [vmem:[#allocation2 + $0x94] sm:$0xf]
        %v2313 = vld [vmem:[#allocation2 + $0x98] sm:$0x1]
        %v2314 = vld [vmem:[#allocation2 + $0x9c] sm:$0xe]
        %v2315 = vld [vmem:[#allocation2 + $0xa0] sm:$0xf]
        %v2316 = vld [vmem:[#allocation2 + $0xa4] sm:$0x1]
        %v2317 = vld [vmem:[#allocation2 + $0xa8] sm:$0xe]
        %v2318 = vld [vmem:[#allocation2 + $0xac] sm:$0xf]
        %v2319 = vld [vmem:[#allocation2 + $0xb0] sm:$0x1]
        %v2320 = vld [vmem:[#allocation2 + $0xb4] sm:$0xe]
        %v2321 = vld [vmem:[#allocation2 + $0xb8] sm:$0xf]
        %v2322 = vld [vmem:[#allocation2 + $0xbc] sm:$0x1]
        %vm2371 = vcmask 1042432
        %vm2372 = vcmask 1046532
        %vm2373 = vmor %vm2371, %vm2372
        %v2374 = vrot.slane %v2275, 5
        %v2375 = vrot.slane %v2374, 4
        %v2376 = vrot.slane %v2276, 5
        %v2377 = vsel %vm2373, %v2375, %v2376
        %v2378 = vrot.slane %v2376, 4
        %v2379 = vrot.slane %v2277, 5
        %v2380 = vsel %vm2373, %v2378, %v2379
        %v2381 = vrot.slane %v2278, 5
        %v2382 = vrot.slane %v2381, 4
        %v2383 = vrot.slane %v2279, 5
        %v2384 = vsel %vm2373, %v2382, %v2383
        %v2385 = vrot.slane %v2383, 4
        %v2386 = vrot.slane %v2280, 5
        %v2387 = vsel %vm2373, %v2385, %v2386
        %v2388 = vrot.slane %v2281, 5
        %v2389 = vrot.slane %v2388, 4
        %v2390 = vrot.slane %v2282, 5
        %v2391 = vsel %vm2373, %v2389, %v2390
        %v2392 = vrot.slane %v2390, 4
        %v2393 = vrot.slane %v2283, 5
        %v2394 = vsel %vm2373, %v2392, %v2393
        %v2395 = vrot.slane %v2284, 5
        %v2396 = vrot.slane %v2395, 4
        %v2397 = vrot.slane %v2285, 5
        %v2398 = vsel %vm2373, %v2396, %v2397
        %v2399 = vrot.slane %v2397, 4
        %v2400 = vrot.slane %v2286, 5
        %v2401 = vsel %vm2373, %v2399, %v2400
        %v2402 = vrot.slane %v2287, 5
        %v2403 = vrot.slane %v2402, 4
        %v2404 = vrot.slane %v2288, 5
        %v2405 = vsel %vm2373, %v2403, %v2404
        %v2406 = vrot.slane %v2404, 4
        %v2407 = vrot.slane %v2289, 5
        %v2408 = vsel %vm2373, %v2406, %v2407
        %v2409 = vrot.slane %v2290, 5
        %v2410 = vrot.slane %v2409, 4
        %v2411 = vrot.slane %v2291, 5
        %v2412 = vsel %vm2373, %v2410, %v2411
        %v2413 = vrot.slane %v2411, 4
        %v2414 = vrot.slane %v2292, 5
        %v2415 = vsel %vm2373, %v2413, %v2414
        %v2416 = vrot.slane %v2293, 5
        %v2417 = vrot.slane %v2416, 4
        %v2418 = vrot.slane %v2294, 5
        %v2419 = vsel %vm2373, %v2417, %v2418
        %v2420 = vrot.slane %v2418, 4
        %v2421 = vrot.slane %v2295, 5
        %v2422 = vsel %vm2373, %v2420, %v2421
        %v2423 = vrot.slane %v2296, 5
        %v2424 = vrot.slane %v2423, 4
        %v2425 = vrot.slane %v2297, 5
        %v2426 = vsel %vm2373, %v2424, %v2425
        %v2427 = vrot.slane %v2425, 4
        %v2428 = vrot.slane %v2298, 5
        %v2429 = vsel %vm2373, %v2427, %v2428
        %v2430 = vrot.slane %v2299, 5
        %v2431 = vrot.slane %v2430, 4
        %v2432 = vrot.slane %v2300, 5
        %v2433 = vsel %vm2373, %v2431, %v2432
        %v2434 = vrot.slane %v2432, 4
        %v2435 = vrot.slane %v2301, 5
        %v2436 = vsel %vm2373, %v2434, %v2435
        %v2437 = vrot.slane %v2302, 5
        %v2438 = vrot.slane %v2437, 4
        %v2439 = vrot.slane %v2303, 5
        %v2440 = vsel %vm2373, %v2438, %v2439
        %v2441 = vrot.slane %v2439, 4
        %v2442 = vrot.slane %v2304, 5
        %v2443 = vsel %vm2373, %v2441, %v2442
        %v2444 = vrot.slane %v2305, 5
        %v2445 = vrot.slane %v2444, 4
        %v2446 = vrot.slane %v2306, 5
        %v2447 = vsel %vm2373, %v2445, %v2446
        %v2448 = vrot.slane %v2446, 4
        %v2449 = vrot.slane %v2307, 5
        %v2450 = vsel %vm2373, %v2448, %v2449
        %v2451 = vrot.slane %v2308, 5
        %v2452 = vrot.slane %v2451, 4
        %v2453 = vrot.slane %v2309, 5
        %v2454 = vsel %vm2373, %v2452, %v2453
        %v2455 = vrot.slane %v2453, 4
        %v2456 = vrot.slane %v2310, 5
        %v2457 = vsel %vm2373, %v2455, %v2456
        %v2458 = vrot.slane %v2311, 5
        %v2459 = vrot.slane %v2458, 4
        %v2460 = vrot.slane %v2312, 5
        %v2461 = vsel %vm2373, %v2459, %v2460
        %v2462 = vrot.slane %v2460, 4
        %v2463 = vrot.slane %v2313, 5
        %v2464 = vsel %vm2373, %v2462, %v2463
        %v2465 = vrot.slane %v2314, 5
        %v2466 = vrot.slane %v2465, 4
        %v2467 = vrot.slane %v2315, 5
        %v2468 = vsel %vm2373, %v2466, %v2467
        %v2469 = vrot.slane %v2467, 4
        %v2470 = vrot.slane %v2316, 5
        %v2471 = vsel %vm2373, %v2469, %v2470
        %v2472 = vrot.slane %v2317, 5
        %v2473 = vrot.slane %v2472, 4
        %v2474 = vrot.slane %v2318, 5
        %v2475 = vsel %vm2373, %v2473, %v2474
        %v2476 = vrot.slane %v2474, 4
        %v2477 = vrot.slane %v2319, 5
        %v2478 = vsel %vm2373, %v2476, %v2477
        %v2479 = vrot.slane %v2320, 5
        %v2480 = vrot.slane %v2479, 4
        %v2481 = vrot.slane %v2321, 5
        %v2482 = vsel %vm2373, %v2480, %v2481
        %v2483 = vrot.slane %v2481, 4
        %v2484 = vrot.slane %v2322, 5
        %v2485 = vsel %vm2373, %v2483, %v2484
        %2486 = vrot.lane.b32.xlu0 %v2377, 64
        %v2487 = vpop.permute.xlu0 %2486
        %2488 = vrot.lane.b32.xlu0 %v2380, 64
        %v2489 = vpop.permute.xlu0 %2488
        %2490 = vrot.lane.b32.xlu0 %v2384, 64
        %v2491 = vpop.permute.xlu0 %2490
        %2492 = vrot.lane.b32.xlu0 %v2387, 64
        %v2493 = vpop.permute.xlu0 %2492
        %2494 = vrot.lane.b32.xlu0 %v2391, 64
        %v2495 = vpop.permute.xlu0 %2494
        %2496 = vrot.lane.b32.xlu0 %v2394, 64
        %v2497 = vpop.permute.xlu0 %2496
        %2498 = vrot.lane.b32.xlu0 %v2398, 64
        %v2499 = vpop.permute.xlu0 %2498
        %2500 = vrot.lane.b32.xlu0 %v2401, 64
        %v2501 = vpop.permute.xlu0 %2500
        %2502 = vrot.lane.b32.xlu0 %v2405, 64
        %v2503 = vpop.permute.xlu0 %2502
        %2504 = vrot.lane.b32.xlu0 %v2408, 64
        %v2505 = vpop.permute.xlu0 %2504
        %2506 = vrot.lane.b32.xlu0 %v2412, 64
        %v2507 = vpop.permute.xlu0 %2506
        %2508 = vrot.lane.b32.xlu0 %v2415, 64
        %v2509 = vpop.permute.xlu0 %2508
        %2510 = vrot.lane.b32.xlu0 %v2419, 64
        %v2511 = vpop.permute.xlu0 %2510
        %2512 = vrot.lane.b32.xlu0 %v2422, 64
        %v2513 = vpop.permute.xlu0 %2512
        %2514 = vrot.lane.b32.xlu0 %v2426, 64
        %v2515 = vpop.permute.xlu0 %2514
        %2516 = vrot.lane.b32.xlu0 %v2429, 64
        %v2517 = vpop.permute.xlu0 %2516
        %2518 = vrot.lane.b32.xlu0 %v2433, 64
        %v2519 = vpop.permute.xlu0 %2518
        %2520 = vrot.lane.b32.xlu0 %v2436, 64
        %v2521 = vpop.permute.xlu0 %2520
        %2522 = vrot.lane.b32.xlu0 %v2440, 64
        %v2523 = vpop.permute.xlu0 %2522
        %2524 = vrot.lane.b32.xlu0 %v2443, 64
        %v2525 = vpop.permute.xlu0 %2524
        %2526 = vrot.lane.b32.xlu0 %v2447, 64
        %v2527 = vpop.permute.xlu0 %2526
        %2528 = vrot.lane.b32.xlu0 %v2450, 64
        %v2529 = vpop.permute.xlu0 %2528
        %2530 = vrot.lane.b32.xlu0 %v2454, 64
        %v2531 = vpop.permute.xlu0 %2530
        %2532 = vrot.lane.b32.xlu0 %v2457, 64
        %v2533 = vpop.permute.xlu0 %2532
        %2534 = vrot.lane.b32.xlu0 %v2461, 64
        %v2535 = vpop.permute.xlu0 %2534
        %2536 = vrot.lane.b32.xlu0 %v2464, 64
        %v2537 = vpop.permute.xlu0 %2536
        %2538 = vrot.lane.b32.xlu0 %v2468, 64
        %v2539 = vpop.permute.xlu0 %2538
        %2540 = vrot.lane.b32.xlu0 %v2471, 64
        %v2541 = vpop.permute.xlu0 %2540
        %2542 = vrot.lane.b32.xlu0 %v2475, 64
        %v2543 = vpop.permute.xlu0 %2542
        %2544 = vrot.lane.b32.xlu0 %v2478, 64
        %v2545 = vpop.permute.xlu0 %2544
        %2546 = vrot.lane.b32.xlu0 %v2482, 64
        %v2547 = vpop.permute.xlu0 %2546
        %2548 = vrot.lane.b32.xlu0 %v2485, 64
        %v2549 = vpop.permute.xlu0 %2548
        %vm2582 = vcmask 781824
        %2583 = vst.msk [vmem:[#allocation3] sm:$0xf] %vm2582, %v2487
        %2584 = vst.msk [vmem:[#allocation3 + $0xc] sm:$0xf] %vm2582, %v2489
        %2585 = vst.msk [vmem:[#allocation3 + $0x18] sm:$0xf] %vm2582, %v2491
        %2586 = vst.msk [vmem:[#allocation3 + $0x24] sm:$0xf] %vm2582, %v2493
        %2587 = vst.msk [vmem:[#allocation3 + $0x30] sm:$0xf] %vm2582, %v2495
        %2588 = vst.msk [vmem:[#allocation3 + $0x3c] sm:$0xf] %vm2582, %v2497
        %2589 = vst.msk [vmem:[#allocation3 + $0x48] sm:$0xf] %vm2582, %v2499
        %2590 = vst.msk [vmem:[#allocation3 + $0x54] sm:$0xf] %vm2582, %v2501
        %2591 = vst.msk [vmem:[#allocation3 + $0x60] sm:$0xf] %vm2582, %v2503
        %2592 = vst.msk [vmem:[#allocation3 + $0x6c] sm:$0xf] %vm2582, %v2505
        %2593 = vst.msk [vmem:[#allocation3 + $0x78] sm:$0xf] %vm2582, %v2507
        %2594 = vst.msk [vmem:[#allocation3 + $0x84] sm:$0xf] %vm2582, %v2509
        %2595 = vst.msk [vmem:[#allocation3 + $0x90] sm:$0xf] %vm2582, %v2511
        %2596 = vst.msk [vmem:[#allocation3 + $0x9c] sm:$0xf] %vm2582, %v2513
        %2597 = vst.msk [vmem:[#allocation3 + $0xa8] sm:$0xf] %vm2582, %v2515
        %2598 = vst.msk [vmem:[#allocation3 + $0xb4] sm:$0xf] %vm2582, %v2517
        %2599 = vst.msk [vmem:[#allocation3 + $0xc0] sm:$0xf] %vm2582, %v2519
        %2600 = vst.msk [vmem:[#allocation3 + $0xcc] sm:$0xf] %vm2582, %v2521
        %2601 = vst.msk [vmem:[#allocation3 + $0xd8] sm:$0xf] %vm2582, %v2523
        %2602 = vst.msk [vmem:[#allocation3 + $0xe4] sm:$0xf] %vm2582, %v2525
        %2603 = vst.msk [vmem:[#allocation3 + $0xf0] sm:$0xf] %vm2582, %v2527
        %2604 = vst.msk [vmem:[#allocation3 + $0xfc] sm:$0xf] %vm2582, %v2529
        %2605 = vst.msk [vmem:[#allocation3 + $0x108] sm:$0xf] %vm2582, %v2531
        %2606 = vst.msk [vmem:[#allocation3 + $0x114] sm:$0xf] %vm2582, %v2533
        %2607 = vst.msk [vmem:[#allocation3 + $0x120] sm:$0xf] %vm2582, %v2535
        %2608 = vst.msk [vmem:[#allocation3 + $0x12c] sm:$0xf] %vm2582, %v2537
        %2609 = vst.msk [vmem:[#allocation3 + $0x138] sm:$0xf] %vm2582, %v2539
        %2610 = vst.msk [vmem:[#allocation3 + $0x144] sm:$0xf] %vm2582, %v2541
        %2611 = vst.msk [vmem:[#allocation3 + $0x150] sm:$0xf] %vm2582, %v2543
        %2612 = vst.msk [vmem:[#allocation3 + $0x15c] sm:$0xf] %vm2582, %v2545
        %2613 = vst.msk [vmem:[#allocation3 + $0x168] sm:$0xf] %vm2582, %v2547
        %2614 = vst.msk [vmem:[#allocation3 + $0x174] sm:$0xf] %vm2582, %v2549
        %s2615 = scalar_lea.vmem [#allocation2], 12
        %v2616 = vld [vmem:[%s2615] sm:$0xf]
        %v2617 = vld [vmem:[%s2615 + $0x4] sm:$0xf]
        %v2618 = vld [vmem:[%s2615 + $0xc] sm:$0xf]
        %v2619 = vld [vmem:[%s2615 + $0x10] sm:$0xf]
        %v2620 = vld [vmem:[%s2615 + $0x18] sm:$0xf]
        %v2621 = vld [vmem:[%s2615 + $0x1c] sm:$0xf]
        %v2622 = vld [vmem:[%s2615 + $0x24] sm:$0xf]
        %v2623 = vld [vmem:[%s2615 + $0x28] sm:$0xf]
        %v2624 = vld [vmem:[%s2615 + $0x30] sm:$0xf]
        %v2625 = vld [vmem:[%s2615 + $0x34] sm:$0xf]
        %v2626 = vld [vmem:[%s2615 + $0x3c] sm:$0xf]
        %v2627 = vld [vmem:[%s2615 + $0x40] sm:$0xf]
        %v2628 = vld [vmem:[%s2615 + $0x48] sm:$0xf]
        %v2629 = vld [vmem:[%s2615 + $0x4c] sm:$0xf]
        %v2630 = vld [vmem:[%s2615 + $0x54] sm:$0xf]
        %v2631 = vld [vmem:[%s2615 + $0x58] sm:$0xf]
        %v2632 = vld [vmem:[%s2615 + $0x60] sm:$0xf]
        %v2633 = vld [vmem:[%s2615 + $0x64] sm:$0xf]
        %v2634 = vld [vmem:[%s2615 + $0x6c] sm:$0xf]
        %v2635 = vld [vmem:[%s2615 + $0x70] sm:$0xf]
        %v2636 = vld [vmem:[%s2615 + $0x78] sm:$0xf]
        %v2637 = vld [vmem:[%s2615 + $0x7c] sm:$0xf]
        %v2638 = vld [vmem:[%s2615 + $0x84] sm:$0xf]
        %v2639 = vld [vmem:[%s2615 + $0x88] sm:$0xf]
        %v2640 = vld [vmem:[%s2615 + $0x90] sm:$0xf]
        %v2641 = vld [vmem:[%s2615 + $0x94] sm:$0xf]
        %v2642 = vld [vmem:[%s2615 + $0x9c] sm:$0xf]
        %v2643 = vld [vmem:[%s2615 + $0xa0] sm:$0xf]
        %v2644 = vld [vmem:[%s2615 + $0xa8] sm:$0xf]
        %v2645 = vld [vmem:[%s2615 + $0xac] sm:$0xf]
        %v2646 = vld [vmem:[%s2615 + $0xb4] sm:$0xf]
        %v2647 = vld [vmem:[%s2615 + $0xb8] sm:$0xf]
        %2680 = vrot.lane.b32.xlu0 %v2616, 96
        %v2681 = vpop.permute.xlu0 %2680
        %2682 = vrot.lane.b32.xlu0 %v2617, 96
        %v2683 = vpop.permute.xlu0 %2682
        %2684 = vrot.lane.b32.xlu0 %v2618, 96
        %v2685 = vpop.permute.xlu0 %2684
        %2686 = vrot.lane.b32.xlu0 %v2619, 96
        %v2687 = vpop.permute.xlu0 %2686
        %2688 = vrot.lane.b32.xlu0 %v2620, 96
        %v2689 = vpop.permute.xlu0 %2688
        %2690 = vrot.lane.b32.xlu0 %v2621, 96
        %v2691 = vpop.permute.xlu0 %2690
        %2692 = vrot.lane.b32.xlu0 %v2622, 96
        %v2693 = vpop.permute.xlu0 %2692
        %2694 = vrot.lane.b32.xlu0 %v2623, 96
        %v2695 = vpop.permute.xlu0 %2694
        %2696 = vrot.lane.b32.xlu0 %v2624, 96
        %v2697 = vpop.permute.xlu0 %2696
        %2698 = vrot.lane.b32.xlu0 %v2625, 96
        %v2699 = vpop.permute.xlu0 %2698
        %2700 = vrot.lane.b32.xlu0 %v2626, 96
        %v2701 = vpop.permute.xlu0 %2700
        %2702 = vrot.lane.b32.xlu0 %v2627, 96
        %v2703 = vpop.permute.xlu0 %2702
        %2704 = vrot.lane.b32.xlu0 %v2628, 96
        %v2705 = vpop.permute.xlu0 %2704
        %2706 = vrot.lane.b32.xlu0 %v2629, 96
        %v2707 = vpop.permute.xlu0 %2706
        %2708 = vrot.lane.b32.xlu0 %v2630, 96
        %v2709 = vpop.permute.xlu0 %2708
        %2710 = vrot.lane.b32.xlu0 %v2631, 96
        %v2711 = vpop.permute.xlu0 %2710
        %2712 = vrot.lane.b32.xlu0 %v2632, 96
        %v2713 = vpop.permute.xlu0 %2712
        %2714 = vrot.lane.b32.xlu0 %v2633, 96
        %v2715 = vpop.permute.xlu0 %2714
        %2716 = vrot.lane.b32.xlu0 %v2634, 96
        %v2717 = vpop.permute.xlu0 %2716
        %2718 = vrot.lane.b32.xlu0 %v2635, 96
        %v2719 = vpop.permute.xlu0 %2718
        %2720 = vrot.lane.b32.xlu0 %v2636, 96
        %v2721 = vpop.permute.xlu0 %2720
        %2722 = vrot.lane.b32.xlu0 %v2637, 96
        %v2723 = vpop.permute.xlu0 %2722
        %2724 = vrot.lane.b32.xlu0 %v2638, 96
        %v2725 = vpop.permute.xlu0 %2724
        %2726 = vrot.lane.b32.xlu0 %v2639, 96
        %v2727 = vpop.permute.xlu0 %2726
        %2728 = vrot.lane.b32.xlu0 %v2640, 96
        %v2729 = vpop.permute.xlu0 %2728
        %2730 = vrot.lane.b32.xlu0 %v2641, 96
        %v2731 = vpop.permute.xlu0 %2730
        %2732 = vrot.lane.b32.xlu0 %v2642, 96
        %v2733 = vpop.permute.xlu0 %2732
        %2734 = vrot.lane.b32.xlu0 %v2643, 96
        %v2735 = vpop.permute.xlu0 %2734
        %2736 = vrot.lane.b32.xlu0 %v2644, 96
        %v2737 = vpop.permute.xlu0 %2736
        %2738 = vrot.lane.b32.xlu0 %v2645, 96
        %v2739 = vpop.permute.xlu0 %2738
        %2740 = vrot.lane.b32.xlu0 %v2646, 96
        %v2741 = vpop.permute.xlu0 %2740
        %2742 = vrot.lane.b32.xlu0 %v2647, 96
        %v2743 = vpop.permute.xlu0 %2742
        %vm2776 = vcmask 1044224
        %2777 = vst.msk [vmem:[#allocation3] sm:$0xf] %vm2776, %v2681
        %2778 = vst.msk [vmem:[#allocation3 + $0xc] sm:$0xf] %vm2776, %v2683
        %2779 = vst.msk [vmem:[#allocation3 + $0x18] sm:$0xf] %vm2776, %v2685
        %2780 = vst.msk [vmem:[#allocation3 + $0x24] sm:$0xf] %vm2776, %v2687
        %2781 = vst.msk [vmem:[#allocation3 + $0x30] sm:$0xf] %vm2776, %v2689
        %2782 = vst.msk [vmem:[#allocation3 + $0x3c] sm:$0xf] %vm2776, %v2691
        %2783 = vst.msk [vmem:[#allocation3 + $0x48] sm:$0xf] %vm2776, %v2693
        %2784 = vst.msk [vmem:[#allocation3 + $0x54] sm:$0xf] %vm2776, %v2695
        %2785 = vst.msk [vmem:[#allocation3 + $0x60] sm:$0xf] %vm2776, %v2697
        %2786 = vst.msk [vmem:[#allocation3 + $0x6c] sm:$0xf] %vm2776, %v2699
        %2787 = vst.msk [vmem:[#allocation3 + $0x78] sm:$0xf] %vm2776, %v2701
        %2788 = vst.msk [vmem:[#allocation3 + $0x84] sm:$0xf] %vm2776, %v2703
        %2789 = vst.msk [vmem:[#allocation3 + $0x90] sm:$0xf] %vm2776, %v2705
        %2790 = vst.msk [vmem:[#allocation3 + $0x9c] sm:$0xf] %vm2776, %v2707
        %2791 = vst.msk [vmem:[#allocation3 + $0xa8] sm:$0xf] %vm2776, %v2709
        %2792 = vst.msk [vmem:[#allocation3 + $0xb4] sm:$0xf] %vm2776, %v2711
        %2793 = vst.msk [vmem:[#allocation3 + $0xc0] sm:$0xf] %vm2776, %v2713
        %2794 = vst.msk [vmem:[#allocation3 + $0xcc] sm:$0xf] %vm2776, %v2715
        %2795 = vst.msk [vmem:[#allocation3 + $0xd8] sm:$0xf] %vm2776, %v2717
        %2796 = vst.msk [vmem:[#allocation3 + $0xe4] sm:$0xf] %vm2776, %v2719
        %2797 = vst.msk [vmem:[#allocation3 + $0xf0] sm:$0xf] %vm2776, %v2721
        %2798 = vst.msk [vmem:[#allocation3 + $0xfc] sm:$0xf] %vm2776, %v2723
        %2799 = vst.msk [vmem:[#allocation3 + $0x108] sm:$0xf] %vm2776, %v2725
        %2800 = vst.msk [vmem:[#allocation3 + $0x114] sm:$0xf] %vm2776, %v2727
        %2801 = vst.msk [vmem:[#allocation3 + $0x120] sm:$0xf] %vm2776, %v2729
        %2802 = vst.msk [vmem:[#allocation3 + $0x12c] sm:$0xf] %vm2776, %v2731
        %2803 = vst.msk [vmem:[#allocation3 + $0x138] sm:$0xf] %vm2776, %v2733
        %2804 = vst.msk [vmem:[#allocation3 + $0x144] sm:$0xf] %vm2776, %v2735
        %2805 = vst.msk [vmem:[#allocation3 + $0x150] sm:$0xf] %vm2776, %v2737
        %2806 = vst.msk [vmem:[#allocation3 + $0x15c] sm:$0xf] %vm2776, %v2739
        %2807 = vst.msk [vmem:[#allocation3 + $0x168] sm:$0xf] %vm2776, %v2741
        %2808 = vst.msk [vmem:[#allocation3 + $0x174] sm:$0xf] %vm2776, %v2743
        %v2809 = vld [vmem:[%s2615] sm:$0xf]
        %v2810 = vld [vmem:[%s2615 + $0x4] sm:$0xf]
        %v2811 = vld [vmem:[%s2615 + $0x8] sm:$0x1]
        %v2812 = vld [vmem:[%s2615 + $0xc] sm:$0xf]
        %v2813 = vld [vmem:[%s2615 + $0x10] sm:$0xf]
        %v2814 = vld [vmem:[%s2615 + $0x14] sm:$0x1]
        %v2815 = vld [vmem:[%s2615 + $0x18] sm:$0xf]
        %v2816 = vld [vmem:[%s2615 + $0x1c] sm:$0xf]
        %v2817 = vld [vmem:[%s2615 + $0x20] sm:$0x1]
        %v2818 = vld [vmem:[%s2615 + $0x24] sm:$0xf]
        %v2819 = vld [vmem:[%s2615 + $0x28] sm:$0xf]
        %v2820 = vld [vmem:[%s2615 + $0x2c] sm:$0x1]
        %v2821 = vld [vmem:[%s2615 + $0x30] sm:$0xf]
        %v2822 = vld [vmem:[%s2615 + $0x34] sm:$0xf]
        %v2823 = vld [vmem:[%s2615 + $0x38] sm:$0x1]
        %v2824 = vld [vmem:[%s2615 + $0x3c] sm:$0xf]
        %v2825 = vld [vmem:[%s2615 + $0x40] sm:$0xf]
        %v2826 = vld [vmem:[%s2615 + $0x44] sm:$0x1]
        %v2827 = vld [vmem:[%s2615 + $0x48] sm:$0xf]
        %v2828 = vld [vmem:[%s2615 + $0x4c] sm:$0xf]
        %v2829 = vld [vmem:[%s2615 + $0x50] sm:$0x1]
        %v2830 = vld [vmem:[%s2615 + $0x54] sm:$0xf]
        %v2831 = vld [vmem:[%s2615 + $0x58] sm:$0xf]
        %v2832 = vld [vmem:[%s2615 + $0x5c] sm:$0x1]
        %v2833 = vld [vmem:[%s2615 + $0x60] sm:$0xf]
        %v2834 = vld [vmem:[%s2615 + $0x64] sm:$0xf]
        %v2835 = vld [vmem:[%s2615 + $0x68] sm:$0x1]
        %v2836 = vld [vmem:[%s2615 + $0x6c] sm:$0xf]
        %v2837 = vld [vmem:[%s2615 + $0x70] sm:$0xf]
        %v2838 = vld [vmem:[%s2615 + $0x74] sm:$0x1]
        %v2839 = vld [vmem:[%s2615 + $0x78] sm:$0xf]
        %v2840 = vld [vmem:[%s2615 + $0x7c] sm:$0xf]
        %v2841 = vld [vmem:[%s2615 + $0x80] sm:$0x1]
        %v2842 = vld [vmem:[%s2615 + $0x84] sm:$0xf]
        %v2843 = vld [vmem:[%s2615 + $0x88] sm:$0xf]
        %v2844 = vld [vmem:[%s2615 + $0x8c] sm:$0x1]
        %v2845 = vld [vmem:[%s2615 + $0x90] sm:$0xf]
        %v2846 = vld [vmem:[%s2615 + $0x94] sm:$0xf]
        %v2847 = vld [vmem:[%s2615 + $0x98] sm:$0x1]
        %v2848 = vld [vmem:[%s2615 + $0x9c] sm:$0xf]
        %v2849 = vld [vmem:[%s2615 + $0xa0] sm:$0xf]
        %v2850 = vld [vmem:[%s2615 + $0xa4] sm:$0x1]
        %v2851 = vld [vmem:[%s2615 + $0xa8] sm:$0xf]
        %v2852 = vld [vmem:[%s2615 + $0xac] sm:$0xf]
        %v2853 = vld [vmem:[%s2615 + $0xb0] sm:$0x1]
        %v2854 = vld [vmem:[%s2615 + $0xb4] sm:$0xf]
        %v2855 = vld [vmem:[%s2615 + $0xb8] sm:$0xf]
        %v2856 = vld [vmem:[%s2615 + $0xbc] sm:$0x1]
        %v2858 = vshrl.u32 %v2809, 16
        %v2860 = vrot.slane %v2858, 4
        %v2861 = vshll.u32 %v2809, 16
        %v2863 = vrot.slane %v2861, 5
        %v2864 = vor.u32 %v2860, %v2863
        %v2865 = vrot.slane %v2864, 4
        %v2867 = vshll.u32 %v2810, 16
        %v2869 = vrot.slane %v2867, 5
        %v2870 = vsel %vm1761, %v2865, %v2869
        %v2871 = vshrl.u32 %v2810, 16
        %v2873 = vrot.slane %v2871, 4
        %v2874 = vor.u32 %v2873, %v2869
        %v2875 = vrot.slane %v2874, 4
        %v2877 = vshll.u32 %v2811, 16
        %v2879 = vrot.slane %v2877, 5
        %v2880 = vsel %vm1761, %v2875, %v2879
        %v2882 = vshrl.u32 %v2812, 16
        %v2884 = vrot.slane %v2882, 4
        %v2885 = vshll.u32 %v2812, 16
        %v2887 = vrot.slane %v2885, 5
        %v2888 = vor.u32 %v2884, %v2887
        %v2889 = vrot.slane %v2888, 4
        %v2891 = vshll.u32 %v2813, 16
        %v2893 = vrot.slane %v2891, 5
        %v2894 = vsel %vm1761, %v2889, %v2893
        %v2895 = vshrl.u32 %v2813, 16
        %v2897 = vrot.slane %v2895, 4
        %v2898 = vor.u32 %v2897, %v2893
        %v2899 = vrot.slane %v2898, 4
        %v2901 = vshll.u32 %v2814, 16
        %v2903 = vrot.slane %v2901, 5
        %v2904 = vsel %vm1761, %v2899, %v2903
        %v2906 = vshrl.u32 %v2815, 16
        %v2908 = vrot.slane %v2906, 4
        %v2909 = vshll.u32 %v2815, 16
        %v2911 = vrot.slane %v2909, 5
        %v2912 = vor.u32 %v2908, %v2911
        %v2913 = vrot.slane %v2912, 4
        %v2915 = vshll.u32 %v2816, 16
        %v2917 = vrot.slane %v2915, 5
        %v2918 = vsel %vm1761, %v2913, %v2917
        %v2919 = vshrl.u32 %v2816, 16
        %v2921 = vrot.slane %v2919, 4
        %v2922 = vor.u32 %v2921, %v2917
        %v2923 = vrot.slane %v2922, 4
        %v2925 = vshll.u32 %v2817, 16
        %v2927 = vrot.slane %v2925, 5
        %v2928 = vsel %vm1761, %v2923, %v2927
        %v2930 = vshrl.u32 %v2818, 16
        %v2932 = vrot.slane %v2930, 4
        %v2933 = vshll.u32 %v2818, 16
        %v2935 = vrot.slane %v2933, 5
        %v2936 = vor.u32 %v2932, %v2935
        %v2937 = vrot.slane %v2936, 4
        %v2939 = vshll.u32 %v2819, 16
        %v2941 = vrot.slane %v2939, 5
        %v2942 = vsel %vm1761, %v2937, %v2941
        %v2943 = vshrl.u32 %v2819, 16
        %v2945 = vrot.slane %v2943, 4
        %v2946 = vor.u32 %v2945, %v2941
        %v2947 = vrot.slane %v2946, 4
        %v2949 = vshll.u32 %v2820, 16
        %v2951 = vrot.slane %v2949, 5
        %v2952 = vsel %vm1761, %v2947, %v2951
        %v2954 = vshrl.u32 %v2821, 16
        %v2956 = vrot.slane %v2954, 4
        %v2957 = vshll.u32 %v2821, 16
        %v2959 = vrot.slane %v2957, 5
        %v2960 = vor.u32 %v2956, %v2959
        %v2961 = vrot.slane %v2960, 4
        %v2963 = vshll.u32 %v2822, 16
        %v2965 = vrot.slane %v2963, 5
        %v2966 = vsel %vm1761, %v2961, %v2965
        %v2967 = vshrl.u32 %v2822, 16
        %v2969 = vrot.slane %v2967, 4
        %v2970 = vor.u32 %v2969, %v2965
        %v2971 = vrot.slane %v2970, 4
        %v2973 = vshll.u32 %v2823, 16
        %v2975 = vrot.slane %v2973, 5
        %v2976 = vsel %vm1761, %v2971, %v2975
        %v2978 = vshrl.u32 %v2824, 16
        %v2980 = vrot.slane %v2978, 4
        %v2981 = vshll.u32 %v2824, 16
        %v2983 = vrot.slane %v2981, 5
        %v2984 = vor.u32 %v2980, %v2983
        %v2985 = vrot.slane %v2984, 4
        %v2987 = vshll.u32 %v2825, 16
        %v2989 = vrot.slane %v2987, 5
        %v2990 = vsel %vm1761, %v2985, %v2989
        %v2991 = vshrl.u32 %v2825, 16
        %v2993 = vrot.slane %v2991, 4
        %v2994 = vor.u32 %v2993, %v2989
        %v2995 = vrot.slane %v2994, 4
        %v2997 = vshll.u32 %v2826, 16
        %v2999 = vrot.slane %v2997, 5
        %v3000 = vsel %vm1761, %v2995, %v2999
        %v3002 = vshrl.u32 %v2827, 16
        %v3004 = vrot.slane %v3002, 4
        %v3005 = vshll.u32 %v2827, 16
        %v3007 = vrot.slane %v3005, 5
        %v3008 = vor.u32 %v3004, %v3007
        %v3009 = vrot.slane %v3008, 4
        %v3011 = vshll.u32 %v2828, 16
        %v3013 = vrot.slane %v3011, 5
        %v3014 = vsel %vm1761, %v3009, %v3013
        %v3015 = vshrl.u32 %v2828, 16
        %v3017 = vrot.slane %v3015, 4
        %v3018 = vor.u32 %v3017, %v3013
        %v3019 = vrot.slane %v3018, 4
        %v3021 = vshll.u32 %v2829, 16
        %v3023 = vrot.slane %v3021, 5
        %v3024 = vsel %vm1761, %v3019, %v3023
        %v3026 = vshrl.u32 %v2830, 16
        %v3028 = vrot.slane %v3026, 4
        %v3029 = vshll.u32 %v2830, 16
        %v3031 = vrot.slane %v3029, 5
        %v3032 = vor.u32 %v3028, %v3031
        %v3033 = vrot.slane %v3032, 4
        %v3035 = vshll.u32 %v2831, 16
        %v3037 = vrot.slane %v3035, 5
        %v3038 = vsel %vm1761, %v3033, %v3037
        %v3039 = vshrl.u32 %v2831, 16
        %v3041 = vrot.slane %v3039, 4
        %v3042 = vor.u32 %v3041, %v3037
        %v3043 = vrot.slane %v3042, 4
        %v3045 = vshll.u32 %v2832, 16
        %v3047 = vrot.slane %v3045, 5
        %v3048 = vsel %vm1761, %v3043, %v3047
        %v3050 = vshrl.u32 %v2833, 16
        %v3052 = vrot.slane %v3050, 4
        %v3053 = vshll.u32 %v2833, 16
        %v3055 = vrot.slane %v3053, 5
        %v3056 = vor.u32 %v3052, %v3055
        %v3057 = vrot.slane %v3056, 4
        %v3059 = vshll.u32 %v2834, 16
        %v3061 = vrot.slane %v3059, 5
        %v3062 = vsel %vm1761, %v3057, %v3061
        %v3063 = vshrl.u32 %v2834, 16
        %v3065 = vrot.slane %v3063, 4
        %v3066 = vor.u32 %v3065, %v3061
        %v3067 = vrot.slane %v3066, 4
        %v3069 = vshll.u32 %v2835, 16
        %v3071 = vrot.slane %v3069, 5
        %v3072 = vsel %vm1761, %v3067, %v3071
        %v3074 = vshrl.u32 %v2836, 16
        %v3076 = vrot.slane %v3074, 4
        %v3077 = vshll.u32 %v2836, 16
        %v3079 = vrot.slane %v3077, 5
        %v3080 = vor.u32 %v3076, %v3079
        %v3081 = vrot.slane %v3080, 4
        %v3083 = vshll.u32 %v2837, 16
        %v3085 = vrot.slane %v3083, 5
        %v3086 = vsel %vm1761, %v3081, %v3085
        %v3087 = vshrl.u32 %v2837, 16
        %v3089 = vrot.slane %v3087, 4
        %v3090 = vor.u32 %v3089, %v3085
        %v3091 = vrot.slane %v3090, 4
        %v3093 = vshll.u32 %v2838, 16
        %v3095 = vrot.slane %v3093, 5
        %v3096 = vsel %vm1761, %v3091, %v3095
        %v3098 = vshrl.u32 %v2839, 16
        %v3100 = vrot.slane %v3098, 4
        %v3101 = vshll.u32 %v2839, 16
        %v3103 = vrot.slane %v3101, 5
        %v3104 = vor.u32 %v3100, %v3103
        %v3105 = vrot.slane %v3104, 4
        %v3107 = vshll.u32 %v2840, 16
        %v3109 = vrot.slane %v3107, 5
        %v3110 = vsel %vm1761, %v3105, %v3109
        %v3111 = vshrl.u32 %v2840, 16
        %v3113 = vrot.slane %v3111, 4
        %v3114 = vor.u32 %v3113, %v3109
        %v3115 = vrot.slane %v3114, 4
        %v3117 = vshll.u32 %v2841, 16
        %v3119 = vrot.slane %v3117, 5
        %v3120 = vsel %vm1761, %v3115, %v3119
        %v3122 = vshrl.u32 %v2842, 16
        %v3124 = vrot.slane %v3122, 4
        %v3125 = vshll.u32 %v2842, 16
        %v3127 = vrot.slane %v3125, 5
        %v3128 = vor.u32 %v3124, %v3127
        %v3129 = vrot.slane %v3128, 4
        %v3131 = vshll.u32 %v2843, 16
        %v3133 = vrot.slane %v3131, 5
        %v3134 = vsel %vm1761, %v3129, %v3133
        %v3135 = vshrl.u32 %v2843, 16
        %v3137 = vrot.slane %v3135, 4
        %v3138 = vor.u32 %v3137, %v3133
        %v3139 = vrot.slane %v3138, 4
        %v3141 = vshll.u32 %v2844, 16
        %v3143 = vrot.slane %v3141, 5
        %v3144 = vsel %vm1761, %v3139, %v3143
        %v3146 = vshrl.u32 %v2845, 16
        %v3148 = vrot.slane %v3146, 4
        %v3149 = vshll.u32 %v2845, 16
        %v3151 = vrot.slane %v3149, 5
        %v3152 = vor.u32 %v3148, %v3151
        %v3153 = vrot.slane %v3152, 4
        %v3155 = vshll.u32 %v2846, 16
        %v3157 = vrot.slane %v3155, 5
        %v3158 = vsel %vm1761, %v3153, %v3157
        %v3159 = vshrl.u32 %v2846, 16
        %v3161 = vrot.slane %v3159, 4
        %v3162 = vor.u32 %v3161, %v3157
        %v3163 = vrot.slane %v3162, 4
        %v3165 = vshll.u32 %v2847, 16
        %v3167 = vrot.slane %v3165, 5
        %v3168 = vsel %vm1761, %v3163, %v3167
        %v3170 = vshrl.u32 %v2848, 16
        %v3172 = vrot.slane %v3170, 4
        %v3173 = vshll.u32 %v2848, 16
        %v3175 = vrot.slane %v3173, 5
        %v3176 = vor.u32 %v3172, %v3175
        %v3177 = vrot.slane %v3176, 4
        %v3179 = vshll.u32 %v2849, 16
        %v3181 = vrot.slane %v3179, 5
        %v3182 = vsel %vm1761, %v3177, %v3181
        %v3183 = vshrl.u32 %v2849, 16
        %v3185 = vrot.slane %v3183, 4
        %v3186 = vor.u32 %v3185, %v3181
        %v3187 = vrot.slane %v3186, 4
        %v3189 = vshll.u32 %v2850, 16
        %v3191 = vrot.slane %v3189, 5
        %v3192 = vsel %vm1761, %v3187, %v3191
        %v3194 = vshrl.u32 %v2851, 16
        %v3196 = vrot.slane %v3194, 4
        %v3197 = vshll.u32 %v2851, 16
        %v3199 = vrot.slane %v3197, 5
        %v3200 = vor.u32 %v3196, %v3199
        %v3201 = vrot.slane %v3200, 4
        %v3203 = vshll.u32 %v2852, 16
        %v3205 = vrot.slane %v3203, 5
        %v3206 = vsel %vm1761, %v3201, %v3205
        %v3207 = vshrl.u32 %v2852, 16
        %v3209 = vrot.slane %v3207, 4
        %v3210 = vor.u32 %v3209, %v3205
        %v3211 = vrot.slane %v3210, 4
        %v3213 = vshll.u32 %v2853, 16
        %v3215 = vrot.slane %v3213, 5
        %v3216 = vsel %vm1761, %v3211, %v3215
        %v3218 = vshrl.u32 %v2854, 16
        %v3220 = vrot.slane %v3218, 4
        %v3221 = vshll.u32 %v2854, 16
        %v3223 = vrot.slane %v3221, 5
        %v3224 = vor.u32 %v3220, %v3223
        %v3225 = vrot.slane %v3224, 4
        %v3227 = vshll.u32 %v2855, 16
        %v3229 = vrot.slane %v3227, 5
        %v3230 = vsel %vm1761, %v3225, %v3229
        %v3231 = vshrl.u32 %v2855, 16
        %v3233 = vrot.slane %v3231, 4
        %v3234 = vor.u32 %v3233, %v3229
        %v3235 = vrot.slane %v3234, 4
        %v3237 = vshll.u32 %v2856, 16
        %v3239 = vrot.slane %v3237, 5
        %v3240 = vsel %vm1761, %v3235, %v3239
        %3273 = vst.msk [vmem:[#allocation3 + $0x4] sm:$0xf] %vm1400, %v2870
        %3274 = vst.msk [vmem:[#allocation3 + $0x10] sm:$0xf] %vm1400, %v2880
        %3275 = vst.msk [vmem:[#allocation3 + $0x1c] sm:$0xf] %vm1400, %v2894
        %3276 = vst.msk [vmem:[#allocation3 + $0x28] sm:$0xf] %vm1400, %v2904
        %3277 = vst.msk [vmem:[#allocation3 + $0x34] sm:$0xf] %vm1400, %v2918
        %3278 = vst.msk [vmem:[#allocation3 + $0x40] sm:$0xf] %vm1400, %v2928
        %3279 = vst.msk [vmem:[#allocation3 + $0x4c] sm:$0xf] %vm1400, %v2942
        %3280 = vst.msk [vmem:[#allocation3 + $0x58] sm:$0xf] %vm1400, %v2952
        %3281 = vst.msk [vmem:[#allocation3 + $0x64] sm:$0xf] %vm1400, %v2966
        %3282 = vst.msk [vmem:[#allocation3 + $0x70] sm:$0xf] %vm1400, %v2976
        %3283 = vst.msk [vmem:[#allocation3 + $0x7c] sm:$0xf] %vm1400, %v2990
        %3284 = vst.msk [vmem:[#allocation3 + $0x88] sm:$0xf] %vm1400, %v3000
        %3285 = vst.msk [vmem:[#allocation3 + $0x94] sm:$0xf] %vm1400, %v3014
        %3286 = vst.msk [vmem:[#allocation3 + $0xa0] sm:$0xf] %vm1400, %v3024
        %3287 = vst.msk [vmem:[#allocation3 + $0xac] sm:$0xf] %vm1400, %v3038
        %3288 = vst.msk [vmem:[#allocation3 + $0xb8] sm:$0xf] %vm1400, %v3048
        %3289 = vst.msk [vmem:[#allocation3 + $0xc4] sm:$0xf] %vm1400, %v3062
        %3290 = vst.msk [vmem:[#allocation3 + $0xd0] sm:$0xf] %vm1400, %v3072
        %3291 = vst.msk [vmem:[#allocation3 + $0xdc] sm:$0xf] %vm1400, %v3086
        %3292 = vst.msk [vmem:[#allocation3 + $0xe8] sm:$0xf] %vm1400, %v3096
        %3293 = vst.msk [vmem:[#allocation3 + $0xf4] sm:$0xf] %vm1400, %v3110
        %3294 = vst.msk [vmem:[#allocation3 + $0x100] sm:$0xf] %vm1400, %v3120
        %3295 = vst.msk [vmem:[#allocation3 + $0x10c] sm:$0xf] %vm1400, %v3134
        %3296 = vst.msk [vmem:[#allocation3 + $0x118] sm:$0xf] %vm1400, %v3144
        %3297 = vst.msk [vmem:[#allocation3 + $0x124] sm:$0xf] %vm1400, %v3158
        %3298 = vst.msk [vmem:[#allocation3 + $0x130] sm:$0xf] %vm1400, %v3168
        %3299 = vst.msk [vmem:[#allocation3 + $0x13c] sm:$0xf] %vm1400, %v3182
        %3300 = vst.msk [vmem:[#allocation3 + $0x148] sm:$0xf] %vm1400, %v3192
        %3301 = vst.msk [vmem:[#allocation3 + $0x154] sm:$0xf] %vm1400, %v3206
        %3302 = vst.msk [vmem:[#allocation3 + $0x160] sm:$0xf] %vm1400, %v3216
        %3303 = vst.msk [vmem:[#allocation3 + $0x16c] sm:$0xf] %vm1400, %v3230
        %3304 = vst.msk [vmem:[#allocation3 + $0x178] sm:$0xf] %vm1400, %v3240
        %v3305 = vld [vmem:[%s2615] sm:$0xe]
        %v3306 = vld [vmem:[%s2615 + $0x4] sm:$0xf]
        %v3307 = vld [vmem:[%s2615 + $0x8] sm:$0x1]
        %v3308 = vld [vmem:[%s2615 + $0xc] sm:$0xe]
        %v3309 = vld [vmem:[%s2615 + $0x10] sm:$0xf]
        %v3310 = vld [vmem:[%s2615 + $0x14] sm:$0x1]
        %v3311 = vld [vmem:[%s2615 + $0x18] sm:$0xe]
        %v3312 = vld [vmem:[%s2615 + $0x1c] sm:$0xf]
        %v3313 = vld [vmem:[%s2615 + $0x20] sm:$0x1]
        %v3314 = vld [vmem:[%s2615 + $0x24] sm:$0xe]
        %v3315 = vld [vmem:[%s2615 + $0x28] sm:$0xf]
        %v3316 = vld [vmem:[%s2615 + $0x2c] sm:$0x1]
        %v3317 = vld [vmem:[%s2615 + $0x30] sm:$0xe]
        %v3318 = vld [vmem:[%s2615 + $0x34] sm:$0xf]
        %v3319 = vld [vmem:[%s2615 + $0x38] sm:$0x1]
        %v3320 = vld [vmem:[%s2615 + $0x3c] sm:$0xe]
        %v3321 = vld [vmem:[%s2615 + $0x40] sm:$0xf]
        %v3322 = vld [vmem:[%s2615 + $0x44] sm:$0x1]
        %v3323 = vld [vmem:[%s2615 + $0x48] sm:$0xe]
        %v3324 = vld [vmem:[%s2615 + $0x4c] sm:$0xf]
        %v3325 = vld [vmem:[%s2615 + $0x50] sm:$0x1]
        %v3326 = vld [vmem:[%s2615 + $0x54] sm:$0xe]
        %v3327 = vld [vmem:[%s2615 + $0x58] sm:$0xf]
        %v3328 = vld [vmem:[%s2615 + $0x5c] sm:$0x1]
        %v3329 = vld [vmem:[%s2615 + $0x60] sm:$0xe]
        %v3330 = vld [vmem:[%s2615 + $0x64] sm:$0xf]
        %v3331 = vld [vmem:[%s2615 + $0x68] sm:$0x1]
        %v3332 = vld [vmem:[%s2615 + $0x6c] sm:$0xe]
        %v3333 = vld [vmem:[%s2615 + $0x70] sm:$0xf]
        %v3334 = vld [vmem:[%s2615 + $0x74] sm:$0x1]
        %v3335 = vld [vmem:[%s2615 + $0x78] sm:$0xe]
        %v3336 = vld [vmem:[%s2615 + $0x7c] sm:$0xf]
        %v3337 = vld [vmem:[%s2615 + $0x80] sm:$0x1]
        %v3338 = vld [vmem:[%s2615 + $0x84] sm:$0xe]
        %v3339 = vld [vmem:[%s2615 + $0x88] sm:$0xf]
        %v3340 = vld [vmem:[%s2615 + $0x8c] sm:$0x1]
        %v3341 = vld [vmem:[%s2615 + $0x90] sm:$0xe]
        %v3342 = vld [vmem:[%s2615 + $0x94] sm:$0xf]
        %v3343 = vld [vmem:[%s2615 + $0x98] sm:$0x1]
        %v3344 = vld [vmem:[%s2615 + $0x9c] sm:$0xe]
        %v3345 = vld [vmem:[%s2615 + $0xa0] sm:$0xf]
        %v3346 = vld [vmem:[%s2615 + $0xa4] sm:$0x1]
        %v3347 = vld [vmem:[%s2615 + $0xa8] sm:$0xe]
        %v3348 = vld [vmem:[%s2615 + $0xac] sm:$0xf]
        %v3349 = vld [vmem:[%s2615 + $0xb0] sm:$0x1]
        %v3350 = vld [vmem:[%s2615 + $0xb4] sm:$0xe]
        %v3351 = vld [vmem:[%s2615 + $0xb8] sm:$0xf]
        %v3352 = vld [vmem:[%s2615 + $0xbc] sm:$0x1]
        %v3401 = vrot.slane %v3305, 5
        %v3402 = vrot.slane %v3401, 4
        %v3403 = vrot.slane %v3306, 5
        %v3404 = vsel %vm2373, %v3402, %v3403
        %v3405 = vrot.slane %v3403, 4
        %v3406 = vrot.slane %v3307, 5
        %v3407 = vsel %vm2373, %v3405, %v3406
        %v3408 = vrot.slane %v3308, 5
        %v3409 = vrot.slane %v3408, 4
        %v3410 = vrot.slane %v3309, 5
        %v3411 = vsel %vm2373, %v3409, %v3410
        %v3412 = vrot.slane %v3410, 4
        %v3413 = vrot.slane %v3310, 5
        %v3414 = vsel %vm2373, %v3412, %v3413
        %v3415 = vrot.slane %v3311, 5
        %v3416 = vrot.slane %v3415, 4
        %v3417 = vrot.slane %v3312, 5
        %v3418 = vsel %vm2373, %v3416, %v3417
        %v3419 = vrot.slane %v3417, 4
        %v3420 = vrot.slane %v3313, 5
        %v3421 = vsel %vm2373, %v3419, %v3420
        %v3422 = vrot.slane %v3314, 5
        %v3423 = vrot.slane %v3422, 4
        %v3424 = vrot.slane %v3315, 5
        %v3425 = vsel %vm2373, %v3423, %v3424
        %v3426 = vrot.slane %v3424, 4
        %v3427 = vrot.slane %v3316, 5
        %v3428 = vsel %vm2373, %v3426, %v3427
        %v3429 = vrot.slane %v3317, 5
        %v3430 = vrot.slane %v3429, 4
        %v3431 = vrot.slane %v3318, 5
        %v3432 = vsel %vm2373, %v3430, %v3431
        %v3433 = vrot.slane %v3431, 4
        %v3434 = vrot.slane %v3319, 5
        %v3435 = vsel %vm2373, %v3433, %v3434
        %v3436 = vrot.slane %v3320, 5
        %v3437 = vrot.slane %v3436, 4
        %v3438 = vrot.slane %v3321, 5
        %v3439 = vsel %vm2373, %v3437, %v3438
        %v3440 = vrot.slane %v3438, 4
        %v3441 = vrot.slane %v3322, 5
        %v3442 = vsel %vm2373, %v3440, %v3441
        %v3443 = vrot.slane %v3323, 5
        %v3444 = vrot.slane %v3443, 4
        %v3445 = vrot.slane %v3324, 5
        %v3446 = vsel %vm2373, %v3444, %v3445
        %v3447 = vrot.slane %v3445, 4
        %v3448 = vrot.slane %v3325, 5
        %v3449 = vsel %vm2373, %v3447, %v3448
        %v3450 = vrot.slane %v3326, 5
        %v3451 = vrot.slane %v3450, 4
        %v3452 = vrot.slane %v3327, 5
        %v3453 = vsel %vm2373, %v3451, %v3452
        %v3454 = vrot.slane %v3452, 4
        %v3455 = vrot.slane %v3328, 5
        %v3456 = vsel %vm2373, %v3454, %v3455
        %v3457 = vrot.slane %v3329, 5
        %v3458 = vrot.slane %v3457, 4
        %v3459 = vrot.slane %v3330, 5
        %v3460 = vsel %vm2373, %v3458, %v3459
        %v3461 = vrot.slane %v3459, 4
        %v3462 = vrot.slane %v3331, 5
        %v3463 = vsel %vm2373, %v3461, %v3462
        %v3464 = vrot.slane %v3332, 5
        %v3465 = vrot.slane %v3464, 4
        %v3466 = vrot.slane %v3333, 5
        %v3467 = vsel %vm2373, %v3465, %v3466
        %v3468 = vrot.slane %v3466, 4
        %v3469 = vrot.slane %v3334, 5
        %v3470 = vsel %vm2373, %v3468, %v3469
        %v3471 = vrot.slane %v3335, 5
        %v3472 = vrot.slane %v3471, 4
        %v3473 = vrot.slane %v3336, 5
        %v3474 = vsel %vm2373, %v3472, %v3473
        %v3475 = vrot.slane %v3473, 4
        %v3476 = vrot.slane %v3337, 5
        %v3477 = vsel %vm2373, %v3475, %v3476
        %v3478 = vrot.slane %v3338, 5
        %v3479 = vrot.slane %v3478, 4
        %v3480 = vrot.slane %v3339, 5
        %v3481 = vsel %vm2373, %v3479, %v3480
        %v3482 = vrot.slane %v3480, 4
        %v3483 = vrot.slane %v3340, 5
        %v3484 = vsel %vm2373, %v3482, %v3483
        %v3485 = vrot.slane %v3341, 5
        %v3486 = vrot.slane %v3485, 4
        %v3487 = vrot.slane %v3342, 5
        %v3488 = vsel %vm2373, %v3486, %v3487
        %v3489 = vrot.slane %v3487, 4
        %v3490 = vrot.slane %v3343, 5
        %v3491 = vsel %vm2373, %v3489, %v3490
        %v3492 = vrot.slane %v3344, 5
        %v3493 = vrot.slane %v3492, 4
        %v3494 = vrot.slane %v3345, 5
        %v3495 = vsel %vm2373, %v3493, %v3494
        %v3496 = vrot.slane %v3494, 4
        %v3497 = vrot.slane %v3346, 5
        %v3498 = vsel %vm2373, %v3496, %v3497
        %v3499 = vrot.slane %v3347, 5
        %v3500 = vrot.slane %v3499, 4
        %v3501 = vrot.slane %v3348, 5
        %v3502 = vsel %vm2373, %v3500, %v3501
        %v3503 = vrot.slane %v3501, 4
        %v3504 = vrot.slane %v3349, 5
        %v3505 = vsel %vm2373, %v3503, %v3504
        %v3506 = vrot.slane %v3350, 5
        %v3507 = vrot.slane %v3506, 4
        %v3508 = vrot.slane %v3351, 5
        %v3509 = vsel %vm2373, %v3507, %v3508
        %v3510 = vrot.slane %v3508, 4
        %v3511 = vrot.slane %v3352, 5
        %v3512 = vsel %vm2373, %v3510, %v3511
        %3513 = vrot.lane.b32.xlu0 %v3404, 32
        %v3514 = vpop.permute.xlu0 %3513
        %3515 = vrot.lane.b32.xlu0 %v3407, 32
        %v3516 = vpop.permute.xlu0 %3515
        %3517 = vrot.lane.b32.xlu0 %v3411, 32
        %v3518 = vpop.permute.xlu0 %3517
        %3519 = vrot.lane.b32.xlu0 %v3414, 32
        %v3520 = vpop.permute.xlu0 %3519
        %3521 = vrot.lane.b32.xlu0 %v3418, 32
        %v3522 = vpop.permute.xlu0 %3521
        %3523 = vrot.lane.b32.xlu0 %v3421, 32
        %v3524 = vpop.permute.xlu0 %3523
        %3525 = vrot.lane.b32.xlu0 %v3425, 32
        %v3526 = vpop.permute.xlu0 %3525
        %3527 = vrot.lane.b32.xlu0 %v3428, 32
        %v3528 = vpop.permute.xlu0 %3527
        %3529 = vrot.lane.b32.xlu0 %v3432, 32
        %v3530 = vpop.permute.xlu0 %3529
        %3531 = vrot.lane.b32.xlu0 %v3435, 32
        %v3532 = vpop.permute.xlu0 %3531
        %3533 = vrot.lane.b32.xlu0 %v3439, 32
        %v3534 = vpop.permute.xlu0 %3533
        %3535 = vrot.lane.b32.xlu0 %v3442, 32
        %v3536 = vpop.permute.xlu0 %3535
        %3537 = vrot.lane.b32.xlu0 %v3446, 32
        %v3538 = vpop.permute.xlu0 %3537
        %3539 = vrot.lane.b32.xlu0 %v3449, 32
        %v3540 = vpop.permute.xlu0 %3539
        %3541 = vrot.lane.b32.xlu0 %v3453, 32
        %v3542 = vpop.permute.xlu0 %3541
        %3543 = vrot.lane.b32.xlu0 %v3456, 32
        %v3544 = vpop.permute.xlu0 %3543
        %3545 = vrot.lane.b32.xlu0 %v3460, 32
        %v3546 = vpop.permute.xlu0 %3545
        %3547 = vrot.lane.b32.xlu0 %v3463, 32
        %v3548 = vpop.permute.xlu0 %3547
        %3549 = vrot.lane.b32.xlu0 %v3467, 32
        %v3550 = vpop.permute.xlu0 %3549
        %3551 = vrot.lane.b32.xlu0 %v3470, 32
        %v3552 = vpop.permute.xlu0 %3551
        %3553 = vrot.lane.b32.xlu0 %v3474, 32
        %v3554 = vpop.permute.xlu0 %3553
        %3555 = vrot.lane.b32.xlu0 %v3477, 32
        %v3556 = vpop.permute.xlu0 %3555
        %3557 = vrot.lane.b32.xlu0 %v3481, 32
        %v3558 = vpop.permute.xlu0 %3557
        %3559 = vrot.lane.b32.xlu0 %v3484, 32
        %v3560 = vpop.permute.xlu0 %3559
        %3561 = vrot.lane.b32.xlu0 %v3488, 32
        %v3562 = vpop.permute.xlu0 %3561
        %3563 = vrot.lane.b32.xlu0 %v3491, 32
        %v3564 = vpop.permute.xlu0 %3563
        %3565 = vrot.lane.b32.xlu0 %v3495, 32
        %v3566 = vpop.permute.xlu0 %3565
        %3567 = vrot.lane.b32.xlu0 %v3498, 32
        %v3568 = vpop.permute.xlu0 %3567
        %3569 = vrot.lane.b32.xlu0 %v3502, 32
        %v3570 = vpop.permute.xlu0 %3569
        %3571 = vrot.lane.b32.xlu0 %v3505, 32
        %v3572 = vpop.permute.xlu0 %3571
        %3573 = vrot.lane.b32.xlu0 %v3509, 32
        %v3574 = vpop.permute.xlu0 %3573
        %3575 = vrot.lane.b32.xlu0 %v3512, 32
        %v3576 = vpop.permute.xlu0 %3575
        %3609 = vst.msk [vmem:[#allocation3 + $0x4] sm:$0xf] %vm2242, %v3514
        %3610 = vst.msk [vmem:[#allocation3 + $0x10] sm:$0xf] %vm2242, %v3516
        %3611 = vst.msk [vmem:[#allocation3 + $0x1c] sm:$0xf] %vm2242, %v3518
        %3612 = vst.msk [vmem:[#allocation3 + $0x28] sm:$0xf] %vm2242, %v3520
        %3613 = vst.msk [vmem:[#allocation3 + $0x34] sm:$0xf] %vm2242, %v3522
        %3614 = vst.msk [vmem:[#allocation3 + $0x40] sm:$0xf] %vm2242, %v3524
        %3615 = vst.msk [vmem:[#allocation3 + $0x4c] sm:$0xf] %vm2242, %v3526
        %3616 = vst.msk [vmem:[#allocation3 + $0x58] sm:$0xf] %vm2242, %v3528
        %3617 = vst.msk [vmem:[#allocation3 + $0x64] sm:$0xf] %vm2242, %v3530
        %3618 = vst.msk [vmem:[#allocation3 + $0x70] sm:$0xf] %vm2242, %v3532
        %3619 = vst.msk [vmem:[#allocation3 + $0x7c] sm:$0xf] %vm2242, %v3534
        %3620 = vst.msk [vmem:[#allocation3 + $0x88] sm:$0xf] %vm2242, %v3536
        %3621 = vst.msk [vmem:[#allocation3 + $0x94] sm:$0xf] %vm2242, %v3538
        %3622 = vst.msk [vmem:[#allocation3 + $0xa0] sm:$0xf] %vm2242, %v3540
        %3623 = vst.msk [vmem:[#allocation3 + $0xac] sm:$0xf] %vm2242, %v3542
        %3624 = vst.msk [vmem:[#allocation3 + $0xb8] sm:$0xf] %vm2242, %v3544
        %3625 = vst.msk [vmem:[#allocation3 + $0xc4] sm:$0xf] %vm2242, %v3546
        %3626 = vst.msk [vmem:[#allocation3 + $0xd0] sm:$0xf] %vm2242, %v3548
        %3627 = vst.msk [vmem:[#allocation3 + $0xdc] sm:$0xf] %vm2242, %v3550
        %3628 = vst.msk [vmem:[#allocation3 + $0xe8] sm:$0xf] %vm2242, %v3552
        %3629 = vst.msk [vmem:[#allocation3 + $0xf4] sm:$0xf] %vm2242, %v3554
        %3630 = vst.msk [vmem:[#allocation3 + $0x100] sm:$0xf] %vm2242, %v3556
        %3631 = vst.msk [vmem:[#allocation3 + $0x10c] sm:$0xf] %vm2242, %v3558
        %3632 = vst.msk [vmem:[#allocation3 + $0x118] sm:$0xf] %vm2242, %v3560
        %3633 = vst.msk [vmem:[#allocation3 + $0x124] sm:$0xf] %vm2242, %v3562
        %3634 = vst.msk [vmem:[#allocation3 + $0x130] sm:$0xf] %vm2242, %v3564
        %3635 = vst.msk [vmem:[#allocation3 + $0x13c] sm:$0xf] %vm2242, %v3566
        %3636 = vst.msk [vmem:[#allocation3 + $0x148] sm:$0xf] %vm2242, %v3568
        %3637 = vst.msk [vmem:[#allocation3 + $0x154] sm:$0xf] %vm2242, %v3570
        %3638 = vst.msk [vmem:[#allocation3 + $0x160] sm:$0xf] %vm2242, %v3572
        %3639 = vst.msk [vmem:[#allocation3 + $0x16c] sm:$0xf] %vm2242, %v3574
        %3640 = vst.msk [vmem:[#allocation3 + $0x178] sm:$0xf] %vm2242, %v3576
        %s3641 = scalar_lea.vmem [#allocation2], 24
        %v3642 = vld [vmem:[%s3641] sm:$0xf]
        %v3643 = vld [vmem:[%s3641 + $0x4] sm:$0xf]
        %v3644 = vld [vmem:[%s3641 + $0xc] sm:$0xf]
        %v3645 = vld [vmem:[%s3641 + $0x10] sm:$0xf]
        %v3646 = vld [vmem:[%s3641 + $0x18] sm:$0xf]
        %v3647 = vld [vmem:[%s3641 + $0x1c] sm:$0xf]
        %v3648 = vld [vmem:[%s3641 + $0x24] sm:$0xf]
        %v3649 = vld [vmem:[%s3641 + $0x28] sm:$0xf]
        %v3650 = vld [vmem:[%s3641 + $0x30] sm:$0xf]
        %v3651 = vld [vmem:[%s3641 + $0x34] sm:$0xf]
        %v3652 = vld [vmem:[%s3641 + $0x3c] sm:$0xf]
        %v3653 = vld [vmem:[%s3641 + $0x40] sm:$0xf]
        %v3654 = vld [vmem:[%s3641 + $0x48] sm:$0xf]
        %v3655 = vld [vmem:[%s3641 + $0x4c] sm:$0xf]
        %v3656 = vld [vmem:[%s3641 + $0x54] sm:$0xf]
        %v3657 = vld [vmem:[%s3641 + $0x58] sm:$0xf]
        %v3658 = vld [vmem:[%s3641 + $0x60] sm:$0xf]
        %v3659 = vld [vmem:[%s3641 + $0x64] sm:$0xf]
        %v3660 = vld [vmem:[%s3641 + $0x6c] sm:$0xf]
        %v3661 = vld [vmem:[%s3641 + $0x70] sm:$0xf]
        %v3662 = vld [vmem:[%s3641 + $0x78] sm:$0xf]
        %v3663 = vld [vmem:[%s3641 + $0x7c] sm:$0xf]
        %v3664 = vld [vmem:[%s3641 + $0x84] sm:$0xf]
        %v3665 = vld [vmem:[%s3641 + $0x88] sm:$0xf]
        %v3666 = vld [vmem:[%s3641 + $0x90] sm:$0xf]
        %v3667 = vld [vmem:[%s3641 + $0x94] sm:$0xf]
        %v3668 = vld [vmem:[%s3641 + $0x9c] sm:$0xf]
        %v3669 = vld [vmem:[%s3641 + $0xa0] sm:$0xf]
        %v3670 = vld [vmem:[%s3641 + $0xa8] sm:$0xf]
        %v3671 = vld [vmem:[%s3641 + $0xac] sm:$0xf]
        %v3672 = vld [vmem:[%s3641 + $0xb4] sm:$0xf]
        %v3673 = vld [vmem:[%s3641 + $0xb8] sm:$0xf]
        %3706 = vrot.lane.b32.xlu0 %v3642, 64
        %v3707 = vpop.permute.xlu0 %3706
        %3708 = vrot.lane.b32.xlu0 %v3643, 64
        %v3709 = vpop.permute.xlu0 %3708
        %3710 = vrot.lane.b32.xlu0 %v3644, 64
        %v3711 = vpop.permute.xlu0 %3710
        %3712 = vrot.lane.b32.xlu0 %v3645, 64
        %v3713 = vpop.permute.xlu0 %3712
        %3714 = vrot.lane.b32.xlu0 %v3646, 64
        %v3715 = vpop.permute.xlu0 %3714
        %3716 = vrot.lane.b32.xlu0 %v3647, 64
        %v3717 = vpop.permute.xlu0 %3716
        %3718 = vrot.lane.b32.xlu0 %v3648, 64
        %v3719 = vpop.permute.xlu0 %3718
        %3720 = vrot.lane.b32.xlu0 %v3649, 64
        %v3721 = vpop.permute.xlu0 %3720
        %3722 = vrot.lane.b32.xlu0 %v3650, 64
        %v3723 = vpop.permute.xlu0 %3722
        %3724 = vrot.lane.b32.xlu0 %v3651, 64
        %v3725 = vpop.permute.xlu0 %3724
        %3726 = vrot.lane.b32.xlu0 %v3652, 64
        %v3727 = vpop.permute.xlu0 %3726
        %3728 = vrot.lane.b32.xlu0 %v3653, 64
        %v3729 = vpop.permute.xlu0 %3728
        %3730 = vrot.lane.b32.xlu0 %v3654, 64
        %v3731 = vpop.permute.xlu0 %3730
        %3732 = vrot.lane.b32.xlu0 %v3655, 64
        %v3733 = vpop.permute.xlu0 %3732
        %3734 = vrot.lane.b32.xlu0 %v3656, 64
        %v3735 = vpop.permute.xlu0 %3734
        %3736 = vrot.lane.b32.xlu0 %v3657, 64
        %v3737 = vpop.permute.xlu0 %3736
        %3738 = vrot.lane.b32.xlu0 %v3658, 64
        %v3739 = vpop.permute.xlu0 %3738
        %3740 = vrot.lane.b32.xlu0 %v3659, 64
        %v3741 = vpop.permute.xlu0 %3740
        %3742 = vrot.lane.b32.xlu0 %v3660, 64
        %v3743 = vpop.permute.xlu0 %3742
        %3744 = vrot.lane.b32.xlu0 %v3661, 64
        %v3745 = vpop.permute.xlu0 %3744
        %3746 = vrot.lane.b32.xlu0 %v3662, 64
        %v3747 = vpop.permute.xlu0 %3746
        %3748 = vrot.lane.b32.xlu0 %v3663, 64
        %v3749 = vpop.permute.xlu0 %3748
        %3750 = vrot.lane.b32.xlu0 %v3664, 64
        %v3751 = vpop.permute.xlu0 %3750
        %3752 = vrot.lane.b32.xlu0 %v3665, 64
        %v3753 = vpop.permute.xlu0 %3752
        %3754 = vrot.lane.b32.xlu0 %v3666, 64
        %v3755 = vpop.permute.xlu0 %3754
        %3756 = vrot.lane.b32.xlu0 %v3667, 64
        %v3757 = vpop.permute.xlu0 %3756
        %3758 = vrot.lane.b32.xlu0 %v3668, 64
        %v3759 = vpop.permute.xlu0 %3758
        %3760 = vrot.lane.b32.xlu0 %v3669, 64
        %v3761 = vpop.permute.xlu0 %3760
        %3762 = vrot.lane.b32.xlu0 %v3670, 64
        %v3763 = vpop.permute.xlu0 %3762
        %3764 = vrot.lane.b32.xlu0 %v3671, 64
        %v3765 = vpop.permute.xlu0 %3764
        %3766 = vrot.lane.b32.xlu0 %v3672, 64
        %v3767 = vpop.permute.xlu0 %3766
        %3768 = vrot.lane.b32.xlu0 %v3673, 64
        %v3769 = vpop.permute.xlu0 %3768
        %3802 = vst.msk [vmem:[#allocation3 + $0x4] sm:$0xf] %vm2582, %v3707
        %3803 = vst.msk [vmem:[#allocation3 + $0x10] sm:$0xf] %vm2582, %v3709
        %3804 = vst.msk [vmem:[#allocation3 + $0x1c] sm:$0xf] %vm2582, %v3711
        %3805 = vst.msk [vmem:[#allocation3 + $0x28] sm:$0xf] %vm2582, %v3713
        %3806 = vst.msk [vmem:[#allocation3 + $0x34] sm:$0xf] %vm2582, %v3715
        %3807 = vst.msk [vmem:[#allocation3 + $0x40] sm:$0xf] %vm2582, %v3717
        %3808 = vst.msk [vmem:[#allocation3 + $0x4c] sm:$0xf] %vm2582, %v3719
        %3809 = vst.msk [vmem:[#allocation3 + $0x58] sm:$0xf] %vm2582, %v3721
        %3810 = vst.msk [vmem:[#allocation3 + $0x64] sm:$0xf] %vm2582, %v3723
        %3811 = vst.msk [vmem:[#allocation3 + $0x70] sm:$0xf] %vm2582, %v3725
        %3812 = vst.msk [vmem:[#allocation3 + $0x7c] sm:$0xf] %vm2582, %v3727
        %3813 = vst.msk [vmem:[#allocation3 + $0x88] sm:$0xf] %vm2582, %v3729
        %3814 = vst.msk [vmem:[#allocation3 + $0x94] sm:$0xf] %vm2582, %v3731
        %3815 = vst.msk [vmem:[#allocation3 + $0xa0] sm:$0xf] %vm2582, %v3733
        %3816 = vst.msk [vmem:[#allocation3 + $0xac] sm:$0xf] %vm2582, %v3735
        %3817 = vst.msk [vmem:[#allocation3 + $0xb8] sm:$0xf] %vm2582, %v3737
        %3818 = vst.msk [vmem:[#allocation3 + $0xc4] sm:$0xf] %vm2582, %v3739
        %3819 = vst.msk [vmem:[#allocation3 + $0xd0] sm:$0xf] %vm2582, %v3741
        %3820 = vst.msk [vmem:[#allocation3 + $0xdc] sm:$0xf] %vm2582, %v3743
        %3821 = vst.msk [vmem:[#allocation3 + $0xe8] sm:$0xf] %vm2582, %v3745
        %3822 = vst.msk [vmem:[#allocation3 + $0xf4] sm:$0xf] %vm2582, %v3747
        %3823 = vst.msk [vmem:[#allocation3 + $0x100] sm:$0xf] %vm2582, %v3749
        %3824 = vst.msk [vmem:[#allocation3 + $0x10c] sm:$0xf] %vm2582, %v3751
        %3825 = vst.msk [vmem:[#allocation3 + $0x118] sm:$0xf] %vm2582, %v3753
        %3826 = vst.msk [vmem:[#allocation3 + $0x124] sm:$0xf] %vm2582, %v3755
        %3827 = vst.msk [vmem:[#allocation3 + $0x130] sm:$0xf] %vm2582, %v3757
        %3828 = vst.msk [vmem:[#allocation3 + $0x13c] sm:$0xf] %vm2582, %v3759
        %3829 = vst.msk [vmem:[#allocation3 + $0x148] sm:$0xf] %vm2582, %v3761
        %3830 = vst.msk [vmem:[#allocation3 + $0x154] sm:$0xf] %vm2582, %v3763
        %3831 = vst.msk [vmem:[#allocation3 + $0x160] sm:$0xf] %vm2582, %v3765
        %3832 = vst.msk [vmem:[#allocation3 + $0x16c] sm:$0xf] %vm2582, %v3767
        %3833 = vst.msk [vmem:[#allocation3 + $0x178] sm:$0xf] %vm2582, %v3769
        %v3834 = vld [vmem:[%s3641] sm:$0xf]
        %v3835 = vld [vmem:[%s3641 + $0x4] sm:$0xf]
        %v3836 = vld [vmem:[%s3641 + $0x8] sm:$0x1]
        %v3837 = vld [vmem:[%s3641 + $0xc] sm:$0xf]
        %v3838 = vld [vmem:[%s3641 + $0x10] sm:$0xf]
        %v3839 = vld [vmem:[%s3641 + $0x14] sm:$0x1]
        %v3840 = vld [vmem:[%s3641 + $0x18] sm:$0xf]
        %v3841 = vld [vmem:[%s3641 + $0x1c] sm:$0xf]
        %v3842 = vld [vmem:[%s3641 + $0x20] sm:$0x1]
        %v3843 = vld [vmem:[%s3641 + $0x24] sm:$0xf]
        %v3844 = vld [vmem:[%s3641 + $0x28] sm:$0xf]
        %v3845 = vld [vmem:[%s3641 + $0x2c] sm:$0x1]
        %v3846 = vld [vmem:[%s3641 + $0x30] sm:$0xf]
        %v3847 = vld [vmem:[%s3641 + $0x34] sm:$0xf]
        %v3848 = vld [vmem:[%s3641 + $0x38] sm:$0x1]
        %v3849 = vld [vmem:[%s3641 + $0x3c] sm:$0xf]
        %v3850 = vld [vmem:[%s3641 + $0x40] sm:$0xf]
        %v3851 = vld [vmem:[%s3641 + $0x44] sm:$0x1]
        %v3852 = vld [vmem:[%s3641 + $0x48] sm:$0xf]
        %v3853 = vld [vmem:[%s3641 + $0x4c] sm:$0xf]
        %v3854 = vld [vmem:[%s3641 + $0x50] sm:$0x1]
        %v3855 = vld [vmem:[%s3641 + $0x54] sm:$0xf]
        %v3856 = vld [vmem:[%s3641 + $0x58] sm:$0xf]
        %v3857 = vld [vmem:[%s3641 + $0x5c] sm:$0x1]
        %v3858 = vld [vmem:[%s3641 + $0x60] sm:$0xf]
        %v3859 = vld [vmem:[%s3641 + $0x64] sm:$0xf]
        %v3860 = vld [vmem:[%s3641 + $0x68] sm:$0x1]
        %v3861 = vld [vmem:[%s3641 + $0x6c] sm:$0xf]
        %v3862 = vld [vmem:[%s3641 + $0x70] sm:$0xf]
        %v3863 = vld [vmem:[%s3641 + $0x74] sm:$0x1]
        %v3864 = vld [vmem:[%s3641 + $0x78] sm:$0xf]
        %v3865 = vld [vmem:[%s3641 + $0x7c] sm:$0xf]
        %v3866 = vld [vmem:[%s3641 + $0x80] sm:$0x1]
        %v3867 = vld [vmem:[%s3641 + $0x84] sm:$0xf]
        %v3868 = vld [vmem:[%s3641 + $0x88] sm:$0xf]
        %v3869 = vld [vmem:[%s3641 + $0x8c] sm:$0x1]
        %v3870 = vld [vmem:[%s3641 + $0x90] sm:$0xf]
        %v3871 = vld [vmem:[%s3641 + $0x94] sm:$0xf]
        %v3872 = vld [vmem:[%s3641 + $0x98] sm:$0x1]
        %v3873 = vld [vmem:[%s3641 + $0x9c] sm:$0xf]
        %v3874 = vld [vmem:[%s3641 + $0xa0] sm:$0xf]
        %v3875 = vld [vmem:[%s3641 + $0xa4] sm:$0x1]
        %v3876 = vld [vmem:[%s3641 + $0xa8] sm:$0xf]
        %v3877 = vld [vmem:[%s3641 + $0xac] sm:$0xf]
        %v3878 = vld [vmem:[%s3641 + $0xb0] sm:$0x1]
        %v3879 = vld [vmem:[%s3641 + $0xb4] sm:$0xf]
        %v3880 = vld [vmem:[%s3641 + $0xb8] sm:$0xf]
        %v3881 = vld [vmem:[%s3641 + $0xbc] sm:$0x1]
        %v3883 = vshrl.u32 %v3834, 16
        %v3885 = vrot.slane %v3883, 4
        %v3886 = vshll.u32 %v3834, 16
        %v3888 = vrot.slane %v3886, 5
        %v3889 = vor.u32 %v3885, %v3888
        %v3890 = vrot.slane %v3889, 4
        %v3892 = vshll.u32 %v3835, 16
        %v3894 = vrot.slane %v3892, 5
        %v3895 = vsel %vm1761, %v3890, %v3894
        %v3896 = vshrl.u32 %v3835, 16
        %v3898 = vrot.slane %v3896, 4
        %v3899 = vor.u32 %v3898, %v3894
        %v3900 = vrot.slane %v3899, 4
        %v3902 = vshll.u32 %v3836, 16
        %v3904 = vrot.slane %v3902, 5
        %v3905 = vsel %vm1761, %v3900, %v3904
        %v3907 = vshrl.u32 %v3837, 16
        %v3909 = vrot.slane %v3907, 4
        %v3910 = vshll.u32 %v3837, 16
        %v3912 = vrot.slane %v3910, 5
        %v3913 = vor.u32 %v3909, %v3912
        %v3914 = vrot.slane %v3913, 4
        %v3916 = vshll.u32 %v3838, 16
        %v3918 = vrot.slane %v3916, 5
        %v3919 = vsel %vm1761, %v3914, %v3918
        %v3920 = vshrl.u32 %v3838, 16
        %v3922 = vrot.slane %v3920, 4
        %v3923 = vor.u32 %v3922, %v3918
        %v3924 = vrot.slane %v3923, 4
        %v3926 = vshll.u32 %v3839, 16
        %v3928 = vrot.slane %v3926, 5
        %v3929 = vsel %vm1761, %v3924, %v3928
        %v3931 = vshrl.u32 %v3840, 16
        %v3933 = vrot.slane %v3931, 4
        %v3934 = vshll.u32 %v3840, 16
        %v3936 = vrot.slane %v3934, 5
        %v3937 = vor.u32 %v3933, %v3936
        %v3938 = vrot.slane %v3937, 4
        %v3940 = vshll.u32 %v3841, 16
        %v3942 = vrot.slane %v3940, 5
        %v3943 = vsel %vm1761, %v3938, %v3942
        %v3944 = vshrl.u32 %v3841, 16
        %v3946 = vrot.slane %v3944, 4
        %v3947 = vor.u32 %v3946, %v3942
        %v3948 = vrot.slane %v3947, 4
        %v3950 = vshll.u32 %v3842, 16
        %v3952 = vrot.slane %v3950, 5
        %v3953 = vsel %vm1761, %v3948, %v3952
        %v3955 = vshrl.u32 %v3843, 16
        %v3957 = vrot.slane %v3955, 4
        %v3958 = vshll.u32 %v3843, 16
        %v3960 = vrot.slane %v3958, 5
        %v3961 = vor.u32 %v3957, %v3960
        %v3962 = vrot.slane %v3961, 4
        %v3964 = vshll.u32 %v3844, 16
        %v3966 = vrot.slane %v3964, 5
        %v3967 = vsel %vm1761, %v3962, %v3966
        %v3968 = vshrl.u32 %v3844, 16
        %v3970 = vrot.slane %v3968, 4
        %v3971 = vor.u32 %v3970, %v3966
        %v3972 = vrot.slane %v3971, 4
        %v3974 = vshll.u32 %v3845, 16
        %v3976 = vrot.slane %v3974, 5
        %v3977 = vsel %vm1761, %v3972, %v3976
        %v3979 = vshrl.u32 %v3846, 16
        %v3981 = vrot.slane %v3979, 4
        %v3982 = vshll.u32 %v3846, 16
        %v3984 = vrot.slane %v3982, 5
        %v3985 = vor.u32 %v3981, %v3984
        %v3986 = vrot.slane %v3985, 4
        %v3988 = vshll.u32 %v3847, 16
        %v3990 = vrot.slane %v3988, 5
        %v3991 = vsel %vm1761, %v3986, %v3990
        %v3992 = vshrl.u32 %v3847, 16
        %v3994 = vrot.slane %v3992, 4
        %v3995 = vor.u32 %v3994, %v3990
        %v3996 = vrot.slane %v3995, 4
        %v3998 = vshll.u32 %v3848, 16
        %v4000 = vrot.slane %v3998, 5
        %v4001 = vsel %vm1761, %v3996, %v4000
        %v4003 = vshrl.u32 %v3849, 16
        %v4005 = vrot.slane %v4003, 4
        %v4006 = vshll.u32 %v3849, 16
        %v4008 = vrot.slane %v4006, 5
        %v4009 = vor.u32 %v4005, %v4008
        %v4010 = vrot.slane %v4009, 4
        %v4012 = vshll.u32 %v3850, 16
        %v4014 = vrot.slane %v4012, 5
        %v4015 = vsel %vm1761, %v4010, %v4014
        %v4016 = vshrl.u32 %v3850, 16
        %v4018 = vrot.slane %v4016, 4
        %v4019 = vor.u32 %v4018, %v4014
        %v4020 = vrot.slane %v4019, 4
        %v4022 = vshll.u32 %v3851, 16
        %v4024 = vrot.slane %v4022, 5
        %v4025 = vsel %vm1761, %v4020, %v4024
        %v4027 = vshrl.u32 %v3852, 16
        %v4029 = vrot.slane %v4027, 4
        %v4030 = vshll.u32 %v3852, 16
        %v4032 = vrot.slane %v4030, 5
        %v4033 = vor.u32 %v4029, %v4032
        %v4034 = vrot.slane %v4033, 4
        %v4036 = vshll.u32 %v3853, 16
        %v4038 = vrot.slane %v4036, 5
        %v4039 = vsel %vm1761, %v4034, %v4038
        %v4040 = vshrl.u32 %v3853, 16
        %v4042 = vrot.slane %v4040, 4
        %v4043 = vor.u32 %v4042, %v4038
        %v4044 = vrot.slane %v4043, 4
        %v4046 = vshll.u32 %v3854, 16
        %v4048 = vrot.slane %v4046, 5
        %v4049 = vsel %vm1761, %v4044, %v4048
        %v4051 = vshrl.u32 %v3855, 16
        %v4053 = vrot.slane %v4051, 4
        %v4054 = vshll.u32 %v3855, 16
        %v4056 = vrot.slane %v4054, 5
        %v4057 = vor.u32 %v4053, %v4056
        %v4058 = vrot.slane %v4057, 4
        %v4060 = vshll.u32 %v3856, 16
        %v4062 = vrot.slane %v4060, 5
        %v4063 = vsel %vm1761, %v4058, %v4062
        %v4064 = vshrl.u32 %v3856, 16
        %v4066 = vrot.slane %v4064, 4
        %v4067 = vor.u32 %v4066, %v4062
        %v4068 = vrot.slane %v4067, 4
        %v4070 = vshll.u32 %v3857, 16
        %v4072 = vrot.slane %v4070, 5
        %v4073 = vsel %vm1761, %v4068, %v4072
        %v4075 = vshrl.u32 %v3858, 16
        %v4077 = vrot.slane %v4075, 4
        %v4078 = vshll.u32 %v3858, 16
        %v4080 = vrot.slane %v4078, 5
        %v4081 = vor.u32 %v4077, %v4080
        %v4082 = vrot.slane %v4081, 4
        %v4084 = vshll.u32 %v3859, 16
        %v4086 = vrot.slane %v4084, 5
        %v4087 = vsel %vm1761, %v4082, %v4086
        %v4088 = vshrl.u32 %v3859, 16
        %v4090 = vrot.slane %v4088, 4
        %v4091 = vor.u32 %v4090, %v4086
        %v4092 = vrot.slane %v4091, 4
        %v4094 = vshll.u32 %v3860, 16
        %v4096 = vrot.slane %v4094, 5
        %v4097 = vsel %vm1761, %v4092, %v4096
        %v4099 = vshrl.u32 %v3861, 16
        %v4101 = vrot.slane %v4099, 4
        %v4102 = vshll.u32 %v3861, 16
        %v4104 = vrot.slane %v4102, 5
        %v4105 = vor.u32 %v4101, %v4104
        %v4106 = vrot.slane %v4105, 4
        %v4108 = vshll.u32 %v3862, 16
        %v4110 = vrot.slane %v4108, 5
        %v4111 = vsel %vm1761, %v4106, %v4110
        %v4112 = vshrl.u32 %v3862, 16
        %v4114 = vrot.slane %v4112, 4
        %v4115 = vor.u32 %v4114, %v4110
        %v4116 = vrot.slane %v4115, 4
        %v4118 = vshll.u32 %v3863, 16
        %v4120 = vrot.slane %v4118, 5
        %v4121 = vsel %vm1761, %v4116, %v4120
        %v4123 = vshrl.u32 %v3864, 16
        %v4125 = vrot.slane %v4123, 4
        %v4126 = vshll.u32 %v3864, 16
        %v4128 = vrot.slane %v4126, 5
        %v4129 = vor.u32 %v4125, %v4128
        %v4130 = vrot.slane %v4129, 4
        %v4132 = vshll.u32 %v3865, 16
        %v4134 = vrot.slane %v4132, 5
        %v4135 = vsel %vm1761, %v4130, %v4134
        %v4136 = vshrl.u32 %v3865, 16
        %v4138 = vrot.slane %v4136, 4
        %v4139 = vor.u32 %v4138, %v4134
        %v4140 = vrot.slane %v4139, 4
        %v4142 = vshll.u32 %v3866, 16
        %v4144 = vrot.slane %v4142, 5
        %v4145 = vsel %vm1761, %v4140, %v4144
        %v4147 = vshrl.u32 %v3867, 16
        %v4149 = vrot.slane %v4147, 4
        %v4150 = vshll.u32 %v3867, 16
        %v4152 = vrot.slane %v4150, 5
        %v4153 = vor.u32 %v4149, %v4152
        %v4154 = vrot.slane %v4153, 4
        %v4156 = vshll.u32 %v3868, 16
        %v4158 = vrot.slane %v4156, 5
        %v4159 = vsel %vm1761, %v4154, %v4158
        %v4160 = vshrl.u32 %v3868, 16
        %v4162 = vrot.slane %v4160, 4
        %v4163 = vor.u32 %v4162, %v4158
        %v4164 = vrot.slane %v4163, 4
        %v4166 = vshll.u32 %v3869, 16
        %v4168 = vrot.slane %v4166, 5
        %v4169 = vsel %vm1761, %v4164, %v4168
        %v4171 = vshrl.u32 %v3870, 16
        %v4173 = vrot.slane %v4171, 4
        %v4174 = vshll.u32 %v3870, 16
        %v4176 = vrot.slane %v4174, 5
        %v4177 = vor.u32 %v4173, %v4176
        %v4178 = vrot.slane %v4177, 4
        %v4180 = vshll.u32 %v3871, 16
        %v4182 = vrot.slane %v4180, 5
        %v4183 = vsel %vm1761, %v4178, %v4182
        %v4184 = vshrl.u32 %v3871, 16
        %v4186 = vrot.slane %v4184, 4
        %v4187 = vor.u32 %v4186, %v4182
        %v4188 = vrot.slane %v4187, 4
        %v4190 = vshll.u32 %v3872, 16
        %v4192 = vrot.slane %v4190, 5
        %v4193 = vsel %vm1761, %v4188, %v4192
        %v4195 = vshrl.u32 %v3873, 16
        %v4197 = vrot.slane %v4195, 4
        %v4198 = vshll.u32 %v3873, 16
        %v4200 = vrot.slane %v4198, 5
        %v4201 = vor.u32 %v4197, %v4200
        %v4202 = vrot.slane %v4201, 4
        %v4204 = vshll.u32 %v3874, 16
        %v4206 = vrot.slane %v4204, 5
        %v4207 = vsel %vm1761, %v4202, %v4206
        %v4208 = vshrl.u32 %v3874, 16
        %v4210 = vrot.slane %v4208, 4
        %v4211 = vor.u32 %v4210, %v4206
        %v4212 = vrot.slane %v4211, 4
        %v4214 = vshll.u32 %v3875, 16
        %v4216 = vrot.slane %v4214, 5
        %v4217 = vsel %vm1761, %v4212, %v4216
        %v4219 = vshrl.u32 %v3876, 16
        %v4221 = vrot.slane %v4219, 4
        %v4222 = vshll.u32 %v3876, 16
        %v4224 = vrot.slane %v4222, 5
        %v4225 = vor.u32 %v4221, %v4224
        %v4226 = vrot.slane %v4225, 4
        %v4228 = vshll.u32 %v3877, 16
        %v4230 = vrot.slane %v4228, 5
        %v4231 = vsel %vm1761, %v4226, %v4230
        %v4232 = vshrl.u32 %v3877, 16
        %v4234 = vrot.slane %v4232, 4
        %v4235 = vor.u32 %v4234, %v4230
        %v4236 = vrot.slane %v4235, 4
        %v4238 = vshll.u32 %v3878, 16
        %v4240 = vrot.slane %v4238, 5
        %v4241 = vsel %vm1761, %v4236, %v4240
        %v4243 = vshrl.u32 %v3879, 16
        %v4245 = vrot.slane %v4243, 4
        %v4246 = vshll.u32 %v3879, 16
        %v4248 = vrot.slane %v4246, 5
        %v4249 = vor.u32 %v4245, %v4248
        %v4250 = vrot.slane %v4249, 4
        %v4252 = vshll.u32 %v3880, 16
        %v4254 = vrot.slane %v4252, 5
        %v4255 = vsel %vm1761, %v4250, %v4254
        %v4256 = vshrl.u32 %v3880, 16
        %v4258 = vrot.slane %v4256, 4
        %v4259 = vor.u32 %v4258, %v4254
        %v4260 = vrot.slane %v4259, 4
        %v4262 = vshll.u32 %v3881, 16
        %v4264 = vrot.slane %v4262, 5
        %v4265 = vsel %vm1761, %v4260, %v4264
        %4266 = vrot.lane.b32.xlu0 %v3895, 96
        %v4267 = vpop.permute.xlu0 %4266
        %4268 = vrot.lane.b32.xlu0 %v3905, 96
        %v4269 = vpop.permute.xlu0 %4268
        %4270 = vrot.lane.b32.xlu0 %v3919, 96
        %v4271 = vpop.permute.xlu0 %4270
        %4272 = vrot.lane.b32.xlu0 %v3929, 96
        %v4273 = vpop.permute.xlu0 %4272
        %4274 = vrot.lane.b32.xlu0 %v3943, 96
        %v4275 = vpop.permute.xlu0 %4274
        %4276 = vrot.lane.b32.xlu0 %v3953, 96
        %v4277 = vpop.permute.xlu0 %4276
        %4278 = vrot.lane.b32.xlu0 %v3967, 96
        %v4279 = vpop.permute.xlu0 %4278
        %4280 = vrot.lane.b32.xlu0 %v3977, 96
        %v4281 = vpop.permute.xlu0 %4280
        %4282 = vrot.lane.b32.xlu0 %v3991, 96
        %v4283 = vpop.permute.xlu0 %4282
        %4284 = vrot.lane.b32.xlu0 %v4001, 96
        %v4285 = vpop.permute.xlu0 %4284
        %4286 = vrot.lane.b32.xlu0 %v4015, 96
        %v4287 = vpop.permute.xlu0 %4286
        %4288 = vrot.lane.b32.xlu0 %v4025, 96
        %v4289 = vpop.permute.xlu0 %4288
        %4290 = vrot.lane.b32.xlu0 %v4039, 96
        %v4291 = vpop.permute.xlu0 %4290
        %4292 = vrot.lane.b32.xlu0 %v4049, 96
        %v4293 = vpop.permute.xlu0 %4292
        %4294 = vrot.lane.b32.xlu0 %v4063, 96
        %v4295 = vpop.permute.xlu0 %4294
        %4296 = vrot.lane.b32.xlu0 %v4073, 96
        %v4297 = vpop.permute.xlu0 %4296
        %4298 = vrot.lane.b32.xlu0 %v4087, 96
        %v4299 = vpop.permute.xlu0 %4298
        %4300 = vrot.lane.b32.xlu0 %v4097, 96
        %v4301 = vpop.permute.xlu0 %4300
        %4302 = vrot.lane.b32.xlu0 %v4111, 96
        %v4303 = vpop.permute.xlu0 %4302
        %4304 = vrot.lane.b32.xlu0 %v4121, 96
        %v4305 = vpop.permute.xlu0 %4304
        %4306 = vrot.lane.b32.xlu0 %v4135, 96
        %v4307 = vpop.permute.xlu0 %4306
        %4308 = vrot.lane.b32.xlu0 %v4145, 96
        %v4309 = vpop.permute.xlu0 %4308
        %4310 = vrot.lane.b32.xlu0 %v4159, 96
        %v4311 = vpop.permute.xlu0 %4310
        %4312 = vrot.lane.b32.xlu0 %v4169, 96
        %v4313 = vpop.permute.xlu0 %4312
        %4314 = vrot.lane.b32.xlu0 %v4183, 96
        %v4315 = vpop.permute.xlu0 %4314
        %4316 = vrot.lane.b32.xlu0 %v4193, 96
        %v4317 = vpop.permute.xlu0 %4316
        %4318 = vrot.lane.b32.xlu0 %v4207, 96
        %v4319 = vpop.permute.xlu0 %4318
        %4320 = vrot.lane.b32.xlu0 %v4217, 96
        %v4321 = vpop.permute.xlu0 %4320
        %4322 = vrot.lane.b32.xlu0 %v4231, 96
        %v4323 = vpop.permute.xlu0 %4322
        %4324 = vrot.lane.b32.xlu0 %v4241, 96
        %v4325 = vpop.permute.xlu0 %4324
        %4326 = vrot.lane.b32.xlu0 %v4255, 96
        %v4327 = vpop.permute.xlu0 %4326
        %4328 = vrot.lane.b32.xlu0 %v4265, 96
        %v4329 = vpop.permute.xlu0 %4328
        %4362 = vst.msk [vmem:[#allocation3 + $0x4] sm:$0xf] %vm2776, %v4267
        %4363 = vst.msk [vmem:[#allocation3 + $0x10] sm:$0xf] %vm2776, %v4269
        %4364 = vst.msk [vmem:[#allocation3 + $0x1c] sm:$0xf] %vm2776, %v4271
        %4365 = vst.msk [vmem:[#allocation3 + $0x28] sm:$0xf] %vm2776, %v4273
        %4366 = vst.msk [vmem:[#allocation3 + $0x34] sm:$0xf] %vm2776, %v4275
        %4367 = vst.msk [vmem:[#allocation3 + $0x40] sm:$0xf] %vm2776, %v4277
        %4368 = vst.msk [vmem:[#allocation3 + $0x4c] sm:$0xf] %vm2776, %v4279
        %4369 = vst.msk [vmem:[#allocation3 + $0x58] sm:$0xf] %vm2776, %v4281
        %4370 = vst.msk [vmem:[#allocation3 + $0x64] sm:$0xf] %vm2776, %v4283
        %4371 = vst.msk [vmem:[#allocation3 + $0x70] sm:$0xf] %vm2776, %v4285
        %4372 = vst.msk [vmem:[#allocation3 + $0x7c] sm:$0xf] %vm2776, %v4287
        %4373 = vst.msk [vmem:[#allocation3 + $0x88] sm:$0xf] %vm2776, %v4289
        %4374 = vst.msk [vmem:[#allocation3 + $0x94] sm:$0xf] %vm2776, %v4291
        %4375 = vst.msk [vmem:[#allocation3 + $0xa0] sm:$0xf] %vm2776, %v4293
        %4376 = vst.msk [vmem:[#allocation3 + $0xac] sm:$0xf] %vm2776, %v4295
        %4377 = vst.msk [vmem:[#allocation3 + $0xb8] sm:$0xf] %vm2776, %v4297
        %4378 = vst.msk [vmem:[#allocation3 + $0xc4] sm:$0xf] %vm2776, %v4299
        %4379 = vst.msk [vmem:[#allocation3 + $0xd0] sm:$0xf] %vm2776, %v4301
        %4380 = vst.msk [vmem:[#allocation3 + $0xdc] sm:$0xf] %vm2776, %v4303
        %4381 = vst.msk [vmem:[#allocation3 + $0xe8] sm:$0xf] %vm2776, %v4305
        %4382 = vst.msk [vmem:[#allocation3 + $0xf4] sm:$0xf] %vm2776, %v4307
        %4383 = vst.msk [vmem:[#allocation3 + $0x100] sm:$0xf] %vm2776, %v4309
        %4384 = vst.msk [vmem:[#allocation3 + $0x10c] sm:$0xf] %vm2776, %v4311
        %4385 = vst.msk [vmem:[#allocation3 + $0x118] sm:$0xf] %vm2776, %v4313
        %4386 = vst.msk [vmem:[#allocation3 + $0x124] sm:$0xf] %vm2776, %v4315
        %4387 = vst.msk [vmem:[#allocation3 + $0x130] sm:$0xf] %vm2776, %v4317
        %4388 = vst.msk [vmem:[#allocation3 + $0x13c] sm:$0xf] %vm2776, %v4319
        %4389 = vst.msk [vmem:[#allocation3 + $0x148] sm:$0xf] %vm2776, %v4321
        %4390 = vst.msk [vmem:[#allocation3 + $0x154] sm:$0xf] %vm2776, %v4323
        %4391 = vst.msk [vmem:[#allocation3 + $0x160] sm:$0xf] %vm2776, %v4325
        %4392 = vst.msk [vmem:[#allocation3 + $0x16c] sm:$0xf] %vm2776, %v4327
        %4393 = vst.msk [vmem:[#allocation3 + $0x178] sm:$0xf] %vm2776, %v4329
        %v4394 = vld [vmem:[%s3641] sm:$0xe]
        %v4395 = vld [vmem:[%s3641 + $0x4] sm:$0xf]
        %v4396 = vld [vmem:[%s3641 + $0x8] sm:$0x1]
        %v4397 = vld [vmem:[%s3641 + $0xc] sm:$0xe]
        %v4398 = vld [vmem:[%s3641 + $0x10] sm:$0xf]
        %v4399 = vld [vmem:[%s3641 + $0x14] sm:$0x1]
        %v4400 = vld [vmem:[%s3641 + $0x18] sm:$0xe]
        %v4401 = vld [vmem:[%s3641 + $0x1c] sm:$0xf]
        %v4402 = vld [vmem:[%s3641 + $0x20] sm:$0x1]
        %v4403 = vld [vmem:[%s3641 + $0x24] sm:$0xe]
        %v4404 = vld [vmem:[%s3641 + $0x28] sm:$0xf]
        %v4405 = vld [vmem:[%s3641 + $0x2c] sm:$0x1]
        %v4406 = vld [vmem:[%s3641 + $0x30] sm:$0xe]
        %v4407 = vld [vmem:[%s3641 + $0x34] sm:$0xf]
        %v4408 = vld [vmem:[%s3641 + $0x38] sm:$0x1]
        %v4409 = vld [vmem:[%s3641 + $0x3c] sm:$0xe]
        %v4410 = vld [vmem:[%s3641 + $0x40] sm:$0xf]
        %v4411 = vld [vmem:[%s3641 + $0x44] sm:$0x1]
        %v4412 = vld [vmem:[%s3641 + $0x48] sm:$0xe]
        %v4413 = vld [vmem:[%s3641 + $0x4c] sm:$0xf]
        %v4414 = vld [vmem:[%s3641 + $0x50] sm:$0x1]
        %v4415 = vld [vmem:[%s3641 + $0x54] sm:$0xe]
        %v4416 = vld [vmem:[%s3641 + $0x58] sm:$0xf]
        %v4417 = vld [vmem:[%s3641 + $0x5c] sm:$0x1]
        %v4418 = vld [vmem:[%s3641 + $0x60] sm:$0xe]
        %v4419 = vld [vmem:[%s3641 + $0x64] sm:$0xf]
        %v4420 = vld [vmem:[%s3641 + $0x68] sm:$0x1]
        %v4421 = vld [vmem:[%s3641 + $0x6c] sm:$0xe]
        %v4422 = vld [vmem:[%s3641 + $0x70] sm:$0xf]
        %v4423 = vld [vmem:[%s3641 + $0x74] sm:$0x1]
        %v4424 = vld [vmem:[%s3641 + $0x78] sm:$0xe]
        %v4425 = vld [vmem:[%s3641 + $0x7c] sm:$0xf]
        %v4426 = vld [vmem:[%s3641 + $0x80] sm:$0x1]
        %v4427 = vld [vmem:[%s3641 + $0x84] sm:$0xe]
        %v4428 = vld [vmem:[%s3641 + $0x88] sm:$0xf]
        %v4429 = vld [vmem:[%s3641 + $0x8c] sm:$0x1]
        %v4430 = vld [vmem:[%s3641 + $0x90] sm:$0xe]
        %v4431 = vld [vmem:[%s3641 + $0x94] sm:$0xf]
        %v4432 = vld [vmem:[%s3641 + $0x98] sm:$0x1]
        %v4433 = vld [vmem:[%s3641 + $0x9c] sm:$0xe]
        %v4434 = vld [vmem:[%s3641 + $0xa0] sm:$0xf]
        %v4435 = vld [vmem:[%s3641 + $0xa4] sm:$0x1]
        %v4436 = vld [vmem:[%s3641 + $0xa8] sm:$0xe]
        %v4437 = vld [vmem:[%s3641 + $0xac] sm:$0xf]
        %v4438 = vld [vmem:[%s3641 + $0xb0] sm:$0x1]
        %v4439 = vld [vmem:[%s3641 + $0xb4] sm:$0xe]
        %v4440 = vld [vmem:[%s3641 + $0xb8] sm:$0xf]
        %v4441 = vld [vmem:[%s3641 + $0xbc] sm:$0x1]
        %v4490 = vrot.slane %v4394, 5
        %v4491 = vrot.slane %v4490, 4
        %v4492 = vrot.slane %v4395, 5
        %v4493 = vsel %vm2373, %v4491, %v4492
        %v4494 = vrot.slane %v4492, 4
        %v4495 = vrot.slane %v4396, 5
        %v4496 = vsel %vm2373, %v4494, %v4495
        %v4497 = vrot.slane %v4397, 5
        %v4498 = vrot.slane %v4497, 4
        %v4499 = vrot.slane %v4398, 5
        %v4500 = vsel %vm2373, %v4498, %v4499
        %v4501 = vrot.slane %v4499, 4
        %v4502 = vrot.slane %v4399, 5
        %v4503 = vsel %vm2373, %v4501, %v4502
        %v4504 = vrot.slane %v4400, 5
        %v4505 = vrot.slane %v4504, 4
        %v4506 = vrot.slane %v4401, 5
        %v4507 = vsel %vm2373, %v4505, %v4506
        %v4508 = vrot.slane %v4506, 4
        %v4509 = vrot.slane %v4402, 5
        %v4510 = vsel %vm2373, %v4508, %v4509
        %v4511 = vrot.slane %v4403, 5
        %v4512 = vrot.slane %v4511, 4
        %v4513 = vrot.slane %v4404, 5
        %v4514 = vsel %vm2373, %v4512, %v4513
        %v4515 = vrot.slane %v4513, 4
        %v4516 = vrot.slane %v4405, 5
        %v4517 = vsel %vm2373, %v4515, %v4516
        %v4518 = vrot.slane %v4406, 5
        %v4519 = vrot.slane %v4518, 4
        %v4520 = vrot.slane %v4407, 5
        %v4521 = vsel %vm2373, %v4519, %v4520
        %v4522 = vrot.slane %v4520, 4
        %v4523 = vrot.slane %v4408, 5
        %v4524 = vsel %vm2373, %v4522, %v4523
        %v4525 = vrot.slane %v4409, 5
        %v4526 = vrot.slane %v4525, 4
        %v4527 = vrot.slane %v4410, 5
        %v4528 = vsel %vm2373, %v4526, %v4527
        %v4529 = vrot.slane %v4527, 4
        %v4530 = vrot.slane %v4411, 5
        %v4531 = vsel %vm2373, %v4529, %v4530
        %v4532 = vrot.slane %v4412, 5
        %v4533 = vrot.slane %v4532, 4
        %v4534 = vrot.slane %v4413, 5
        %v4535 = vsel %vm2373, %v4533, %v4534
        %v4536 = vrot.slane %v4534, 4
        %v4537 = vrot.slane %v4414, 5
        %v4538 = vsel %vm2373, %v4536, %v4537
        %v4539 = vrot.slane %v4415, 5
        %v4540 = vrot.slane %v4539, 4
        %v4541 = vrot.slane %v4416, 5
        %v4542 = vsel %vm2373, %v4540, %v4541
        %v4543 = vrot.slane %v4541, 4
        %v4544 = vrot.slane %v4417, 5
        %v4545 = vsel %vm2373, %v4543, %v4544
        %v4546 = vrot.slane %v4418, 5
        %v4547 = vrot.slane %v4546, 4
        %v4548 = vrot.slane %v4419, 5
        %v4549 = vsel %vm2373, %v4547, %v4548
        %v4550 = vrot.slane %v4548, 4
        %v4551 = vrot.slane %v4420, 5
        %v4552 = vsel %vm2373, %v4550, %v4551
        %v4553 = vrot.slane %v4421, 5
        %v4554 = vrot.slane %v4553, 4
        %v4555 = vrot.slane %v4422, 5
        %v4556 = vsel %vm2373, %v4554, %v4555
        %v4557 = vrot.slane %v4555, 4
        %v4558 = vrot.slane %v4423, 5
        %v4559 = vsel %vm2373, %v4557, %v4558
        %v4560 = vrot.slane %v4424, 5
        %v4561 = vrot.slane %v4560, 4
        %v4562 = vrot.slane %v4425, 5
        %v4563 = vsel %vm2373, %v4561, %v4562
        %v4564 = vrot.slane %v4562, 4
        %v4565 = vrot.slane %v4426, 5
        %v4566 = vsel %vm2373, %v4564, %v4565
        %v4567 = vrot.slane %v4427, 5
        %v4568 = vrot.slane %v4567, 4
        %v4569 = vrot.slane %v4428, 5
        %v4570 = vsel %vm2373, %v4568, %v4569
        %v4571 = vrot.slane %v4569, 4
        %v4572 = vrot.slane %v4429, 5
        %v4573 = vsel %vm2373, %v4571, %v4572
        %v4574 = vrot.slane %v4430, 5
        %v4575 = vrot.slane %v4574, 4
        %v4576 = vrot.slane %v4431, 5
        %v4577 = vsel %vm2373, %v4575, %v4576
        %v4578 = vrot.slane %v4576, 4
        %v4579 = vrot.slane %v4432, 5
        %v4580 = vsel %vm2373, %v4578, %v4579
        %v4581 = vrot.slane %v4433, 5
        %v4582 = vrot.slane %v4581, 4
        %v4583 = vrot.slane %v4434, 5
        %v4584 = vsel %vm2373, %v4582, %v4583
        %v4585 = vrot.slane %v4583, 4
        %v4586 = vrot.slane %v4435, 5
        %v4587 = vsel %vm2373, %v4585, %v4586
        %v4588 = vrot.slane %v4436, 5
        %v4589 = vrot.slane %v4588, 4
        %v4590 = vrot.slane %v4437, 5
        %v4591 = vsel %vm2373, %v4589, %v4590
        %v4592 = vrot.slane %v4590, 4
        %v4593 = vrot.slane %v4438, 5
        %v4594 = vsel %vm2373, %v4592, %v4593
        %v4595 = vrot.slane %v4439, 5
        %v4596 = vrot.slane %v4595, 4
        %v4597 = vrot.slane %v4440, 5
        %v4598 = vsel %vm2373, %v4596, %v4597
        %v4599 = vrot.slane %v4597, 4
        %v4600 = vrot.slane %v4441, 5
        %v4601 = vsel %vm2373, %v4599, %v4600
        %4634 = vst.msk [vmem:[#allocation3 + $0x8] sm:$0xf] %vm1400, %v4493
        %4635 = vst.msk [vmem:[#allocation3 + $0x14] sm:$0xf] %vm1400, %v4496
        %4636 = vst.msk [vmem:[#allocation3 + $0x20] sm:$0xf] %vm1400, %v4500
        %4637 = vst.msk [vmem:[#allocation3 + $0x2c] sm:$0xf] %vm1400, %v4503
        %4638 = vst.msk [vmem:[#allocation3 + $0x38] sm:$0xf] %vm1400, %v4507
        %4639 = vst.msk [vmem:[#allocation3 + $0x44] sm:$0xf] %vm1400, %v4510
        %4640 = vst.msk [vmem:[#allocation3 + $0x50] sm:$0xf] %vm1400, %v4514
        %4641 = vst.msk [vmem:[#allocation3 + $0x5c] sm:$0xf] %vm1400, %v4517
        %4642 = vst.msk [vmem:[#allocation3 + $0x68] sm:$0xf] %vm1400, %v4521
        %4643 = vst.msk [vmem:[#allocation3 + $0x74] sm:$0xf] %vm1400, %v4524
        %4644 = vst.msk [vmem:[#allocation3 + $0x80] sm:$0xf] %vm1400, %v4528
        %4645 = vst.msk [vmem:[#allocation3 + $0x8c] sm:$0xf] %vm1400, %v4531
        %4646 = vst.msk [vmem:[#allocation3 + $0x98] sm:$0xf] %vm1400, %v4535
        %4647 = vst.msk [vmem:[#allocation3 + $0xa4] sm:$0xf] %vm1400, %v4538
        %4648 = vst.msk [vmem:[#allocation3 + $0xb0] sm:$0xf] %vm1400, %v4542
        %4649 = vst.msk [vmem:[#allocation3 + $0xbc] sm:$0xf] %vm1400, %v4545
        %4650 = vst.msk [vmem:[#allocation3 + $0xc8] sm:$0xf] %vm1400, %v4549
        %4651 = vst.msk [vmem:[#allocation3 + $0xd4] sm:$0xf] %vm1400, %v4552
        %4652 = vst.msk [vmem:[#allocation3 + $0xe0] sm:$0xf] %vm1400, %v4556
        %4653 = vst.msk [vmem:[#allocation3 + $0xec] sm:$0xf] %vm1400, %v4559
        %4654 = vst.msk [vmem:[#allocation3 + $0xf8] sm:$0xf] %vm1400, %v4563
        %4655 = vst.msk [vmem:[#allocation3 + $0x104] sm:$0xf] %vm1400, %v4566
        %4656 = vst.msk [vmem:[#allocation3 + $0x110] sm:$0xf] %vm1400, %v4570
        %4657 = vst.msk [vmem:[#allocation3 + $0x11c] sm:$0xf] %vm1400, %v4573
        %4658 = vst.msk [vmem:[#allocation3 + $0x128] sm:$0xf] %vm1400, %v4577
        %4659 = vst.msk [vmem:[#allocation3 + $0x134] sm:$0xf] %vm1400, %v4580
        %4660 = vst.msk [vmem:[#allocation3 + $0x140] sm:$0xf] %vm1400, %v4584
        %4661 = vst.msk [vmem:[#allocation3 + $0x14c] sm:$0xf] %vm1400, %v4587
        %4662 = vst.msk [vmem:[#allocation3 + $0x158] sm:$0xf] %vm1400, %v4591
        %4663 = vst.msk [vmem:[#allocation3 + $0x164] sm:$0xf] %vm1400, %v4594
        %4664 = vst.msk [vmem:[#allocation3 + $0x170] sm:$0xf] %vm1400, %v4598
        %4665 = vst.msk [vmem:[#allocation3 + $0x17c] sm:$0xf] %vm1400, %v4601
        %v4666 = vld [vmem:[#allocation3] sm:$0xff]
        %v4667 = vld [vmem:[#allocation3 + $0x8] sm:$0xf]
        %v4668 = vld [vmem:[#allocation3 + $0xc] sm:$0xff]
        %v4669 = vld [vmem:[#allocation3 + $0x14] sm:$0xf]
        %v4670 = vld [vmem:[#allocation3 + $0x18] sm:$0xff]
        %v4671 = vld [vmem:[#allocation3 + $0x20] sm:$0xf]
        %v4672 = vld [vmem:[#allocation3 + $0x24] sm:$0xff]
        %v4673 = vld [vmem:[#allocation3 + $0x2c] sm:$0xf]
        %v4674 = vld [vmem:[#allocation3 + $0x30] sm:$0xff]
        %v4675 = vld [vmem:[#allocation3 + $0x38] sm:$0xf]
        %v4676 = vld [vmem:[#allocation3 + $0x3c] sm:$0xff]
        %v4677 = vld [vmem:[#allocation3 + $0x44] sm:$0xf]
        %v4678 = vld [vmem:[#allocation3 + $0x48] sm:$0xff]
        %v4679 = vld [vmem:[#allocation3 + $0x50] sm:$0xf]
        %v4680 = vld [vmem:[#allocation3 + $0x54] sm:$0xff]
        %v4681 = vld [vmem:[#allocation3 + $0x5c] sm:$0xf]
        %v4682 = vld [vmem:[#allocation3 + $0x60] sm:$0xff]
        %v4683 = vld [vmem:[#allocation3 + $0x68] sm:$0xf]
        %v4684 = vld [vmem:[#allocation3 + $0x6c] sm:$0xff]
        %v4685 = vld [vmem:[#allocation3 + $0x74] sm:$0xf]
        %v4686 = vld [vmem:[#allocation3 + $0x78] sm:$0xff]
        %v4687 = vld [vmem:[#allocation3 + $0x80] sm:$0xf]
        %v4688 = vld [vmem:[#allocation3 + $0x84] sm:$0xff]
        %v4689 = vld [vmem:[#allocation3 + $0x8c] sm:$0xf]
        %v4690 = vld [vmem:[#allocation3 + $0x90] sm:$0xff]
        %v4691 = vld [vmem:[#allocation3 + $0x98] sm:$0xf]
        %v4692 = vld [vmem:[#allocation3 + $0x9c] sm:$0xff]
        %v4693 = vld [vmem:[#allocation3 + $0xa4] sm:$0xf]
        %v4694 = vld [vmem:[#allocation3 + $0xa8] sm:$0xff]
        %v4695 = vld [vmem:[#allocation3 + $0xb0] sm:$0xf]
        %v4696 = vld [vmem:[#allocation3 + $0xb4] sm:$0xff]
        %v4697 = vld [vmem:[#allocation3 + $0xbc] sm:$0xf]
        %v4698 = vld [vmem:[#allocation3 + $0xc0] sm:$0xff]
        %v4699 = vld [vmem:[#allocation3 + $0xc8] sm:$0xf]
        %v4700 = vld [vmem:[#allocation3 + $0xcc] sm:$0xff]
        %v4701 = vld [vmem:[#allocation3 + $0xd4] sm:$0xf]
        %v4702 = vld [vmem:[#allocation3 + $0xd8] sm:$0xff]
        %v4703 = vld [vmem:[#allocation3 + $0xe0] sm:$0xf]
        %v4704 = vld [vmem:[#allocation3 + $0xe4] sm:$0xff]
        %v4705 = vld [vmem:[#allocation3 + $0xec] sm:$0xf]
        %v4706 = vld [vmem:[#allocation3 + $0xf0] sm:$0xff]
        %v4707 = vld [vmem:[#allocation3 + $0xf8] sm:$0xf]
        %v4708 = vld [vmem:[#allocation3 + $0xfc] sm:$0xff]
        %v4709 = vld [vmem:[#allocation3 + $0x104] sm:$0xf]
        %v4710 = vld [vmem:[#allocation3 + $0x108] sm:$0xff]
        %v4711 = vld [vmem:[#allocation3 + $0x110] sm:$0xf]
        %v4712 = vld [vmem:[#allocation3 + $0x114] sm:$0xff]
        %v4713 = vld [vmem:[#allocation3 + $0x11c] sm:$0xf]
        %v4714 = vld [vmem:[#allocation3 + $0x120] sm:$0xff]
        %v4715 = vld [vmem:[#allocation3 + $0x128] sm:$0xf]
        %v4716 = vld [vmem:[#allocation3 + $0x12c] sm:$0xff]
        %v4717 = vld [vmem:[#allocation3 + $0x134] sm:$0xf]
        %v4718 = vld [vmem:[#allocation3 + $0x138] sm:$0xff]
        %v4719 = vld [vmem:[#allocation3 + $0x140] sm:$0xf]
        %v4720 = vld [vmem:[#allocation3 + $0x144] sm:$0xff]
        %v4721 = vld [vmem:[#allocation3 + $0x14c] sm:$0xf]
        %v4722 = vld [vmem:[#allocation3 + $0x150] sm:$0xff]
        %v4723 = vld [vmem:[#allocation3 + $0x158] sm:$0xf]
        %v4724 = vld [vmem:[#allocation3 + $0x15c] sm:$0xff]
        %v4725 = vld [vmem:[#allocation3 + $0x164] sm:$0xf]
        %v4726 = vld [vmem:[#allocation3 + $0x168] sm:$0xff]
        %v4727 = vld [vmem:[#allocation3 + $0x170] sm:$0xf]
        %v4728 = vld [vmem:[#allocation3 + $0x174] sm:$0xff]
        %v4729 = vld [vmem:[#allocation3 + $0x17c] sm:$0xf]
        %v4730 = vld [vmem:[%s5] sm:$0xf]
        %v4731 = vld [vmem:[%s5 + $0x4] sm:$0xf]
        %v4732 = vld [vmem:[%s5 + $0x8] sm:$0xf]
        %v4733 = vld [vmem:[%s5 + $0xc] sm:$0xf]
        %v4734 = vld [vmem:[%s5 + $0x10] sm:$0xf]
        %v4735 = vld [vmem:[%s5 + $0x14] sm:$0xf]
        %v4736 = vld [vmem:[%s5 + $0x18] sm:$0xf]
        %v4737 = vld [vmem:[%s5 + $0x1c] sm:$0xf]
        %v4738 = vld [vmem:[%s5 + $0x20] sm:$0xf]
        %v4739 = vld [vmem:[%s5 + $0x24] sm:$0xf]
        %v4740 = vld [vmem:[%s5 + $0x28] sm:$0xf]
        %v4741 = vld [vmem:[%s5 + $0x2c] sm:$0xf]
        %v4742 = vld [vmem:[%s5 + $0x30] sm:$0xf]
        %v4743 = vld [vmem:[%s5 + $0x34] sm:$0xf]
        %v4744 = vld [vmem:[%s5 + $0x38] sm:$0xf]
        %v4745 = vld [vmem:[%s5 + $0x3c] sm:$0xf]
        %v4746 = vld [vmem:[%s5 + $0x40] sm:$0xf]
        %v4747 = vld [vmem:[%s5 + $0x44] sm:$0xf]
        %v4748 = vld [vmem:[%s5 + $0x48] sm:$0xf]
        %v4749 = vld [vmem:[%s5 + $0x4c] sm:$0xf]
        %v4750 = vld [vmem:[%s5 + $0x50] sm:$0xf]
        %v4751 = vld [vmem:[%s5 + $0x54] sm:$0xf]
        %v4752 = vld [vmem:[%s5 + $0x58] sm:$0xf]
        %v4753 = vld [vmem:[%s5 + $0x5c] sm:$0xf]
        %v4754 = vld [vmem:[%s5 + $0x60] sm:$0xf]
        %v4755 = vld [vmem:[%s5 + $0x64] sm:$0xf]
        %v4756 = vld [vmem:[%s5 + $0x68] sm:$0xf]
        %v4757 = vld [vmem:[%s5 + $0x6c] sm:$0xf]
        %v4758 = vld [vmem:[%s5 + $0x70] sm:$0xf]
        %v4759 = vld [vmem:[%s5 + $0x74] sm:$0xf]
        %v4760 = vld [vmem:[%s5 + $0x78] sm:$0xf]
        %v4761 = vld [vmem:[%s5 + $0x7c] sm:$0xf]
        %v4762 = vld [vmem:[%s5 + $0x80] sm:$0xf]
        %v4763 = vld [vmem:[%s5 + $0x84] sm:$0xf]
        %v4764 = vld [vmem:[%s5 + $0x88] sm:$0xf]
        %v4765 = vld [vmem:[%s5 + $0x8c] sm:$0xf]
        %v4766 = vld [vmem:[%s6] sm:$0x1]
        %v4768 = vlaneseq
        %v4769 = vshrl.u32 %v4768, 7
        %v4770 = vsub.s32 0, %v4769
        %v4771 = vrot.slane %v4766, %v4770
        %v4837 = vunpack.c.l.b16 %v4666
        %v4838 = vunpack.c.h.b16 %v4666
        %v4839 = vunpack.c.l.b16 %v4667
        %v4840 = vunpack.c.l.b16 %v4668
        %v4841 = vunpack.c.h.b16 %v4668
        %v4842 = vunpack.c.l.b16 %v4669
        %v4843 = vunpack.c.l.b16 %v4670
        %v4844 = vunpack.c.h.b16 %v4670
        %v4845 = vunpack.c.l.b16 %v4671
        %v4846 = vunpack.c.l.b16 %v4672
        %v4847 = vunpack.c.h.b16 %v4672
        %v4848 = vunpack.c.l.b16 %v4673
        %v4849 = vunpack.c.l.b16 %v4674
        %v4850 = vunpack.c.h.b16 %v4674
        %v4851 = vunpack.c.l.b16 %v4675
        %v4852 = vunpack.c.l.b16 %v4676
        %v4853 = vunpack.c.h.b16 %v4676
        %v4854 = vunpack.c.l.b16 %v4677
        %v4855 = vunpack.c.l.b16 %v4678
        %v4856 = vunpack.c.h.b16 %v4678
        %v4857 = vunpack.c.l.b16 %v4679
        %v4858 = vunpack.c.l.b16 %v4680
        %v4859 = vunpack.c.h.b16 %v4680
        %v4860 = vunpack.c.l.b16 %v4681
        %v4861 = vunpack.c.l.b16 %v4682
        %v4862 = vunpack.c.h.b16 %v4682
        %v4863 = vunpack.c.l.b16 %v4683
        %v4864 = vunpack.c.l.b16 %v4684
        %v4865 = vunpack.c.h.b16 %v4684
        %v4866 = vunpack.c.l.b16 %v4685
        %v4867 = vunpack.c.l.b16 %v4686
        %v4868 = vunpack.c.h.b16 %v4686
        %v4869 = vunpack.c.l.b16 %v4687
        %v4870 = vunpack.c.l.b16 %v4688
        %v4871 = vunpack.c.h.b16 %v4688
        %v4872 = vunpack.c.l.b16 %v4689
        %v4873 = vunpack.c.l.b16 %v4690
        %v4874 = vunpack.c.h.b16 %v4690
        %v4875 = vunpack.c.l.b16 %v4691
        %v4876 = vunpack.c.l.b16 %v4692
        %v4877 = vunpack.c.h.b16 %v4692
        %v4878 = vunpack.c.l.b16 %v4693
        %v4879 = vunpack.c.l.b16 %v4694
        %v4880 = vunpack.c.h.b16 %v4694
        %v4881 = vunpack.c.l.b16 %v4695
        %v4882 = vunpack.c.l.b16 %v4696
        %v4883 = vunpack.c.h.b16 %v4696
        %v4884 = vunpack.c.l.b16 %v4697
        %v4885 = vunpack.c.l.b16 %v4698
        %v4886 = vunpack.c.h.b16 %v4698
        %v4887 = vunpack.c.l.b16 %v4699
        %v4888 = vunpack.c.l.b16 %v4700
        %v4889 = vunpack.c.h.b16 %v4700
        %v4890 = vunpack.c.l.b16 %v4701
        %v4891 = vunpack.c.l.b16 %v4702
        %v4892 = vunpack.c.h.b16 %v4702
        %v4893 = vunpack.c.l.b16 %v4703
        %v4894 = vunpack.c.l.b16 %v4704
        %v4895 = vunpack.c.h.b16 %v4704
        %v4896 = vunpack.c.l.b16 %v4705
        %v4897 = vunpack.c.l.b16 %v4706
        %v4898 = vunpack.c.h.b16 %v4706
        %v4899 = vunpack.c.l.b16 %v4707
        %v4900 = vunpack.c.l.b16 %v4708
        %v4901 = vunpack.c.h.b16 %v4708
        %v4902 = vunpack.c.l.b16 %v4709
        %v4903 = vunpack.c.l.b16 %v4710
        %v4904 = vunpack.c.h.b16 %v4710
        %v4905 = vunpack.c.l.b16 %v4711
        %v4906 = vunpack.c.l.b16 %v4712
        %v4907 = vunpack.c.h.b16 %v4712
        %v4908 = vunpack.c.l.b16 %v4713
        %v4909 = vunpack.c.l.b16 %v4714
        %v4910 = vunpack.c.h.b16 %v4714
        %v4911 = vunpack.c.l.b16 %v4715
        %v4912 = vunpack.c.l.b16 %v4716
        %v4913 = vunpack.c.h.b16 %v4716
        %v4914 = vunpack.c.l.b16 %v4717
        %v4915 = vunpack.c.l.b16 %v4718
        %v4916 = vunpack.c.h.b16 %v4718
        %v4917 = vunpack.c.l.b16 %v4719
        %v4918 = vunpack.c.l.b16 %v4720
        %v4919 = vunpack.c.h.b16 %v4720
        %v4920 = vunpack.c.l.b16 %v4721
        %v4921 = vunpack.c.l.b16 %v4722
        %v4922 = vunpack.c.h.b16 %v4722
        %v4923 = vunpack.c.l.b16 %v4723
        %v4924 = vunpack.c.l.b16 %v4724
        %v4925 = vunpack.c.h.b16 %v4724
        %v4926 = vunpack.c.l.b16 %v4725
        %v4927 = vunpack.c.l.b16 %v4726
        %v4928 = vunpack.c.h.b16 %v4726
        %v4929 = vunpack.c.l.b16 %v4727
        %v4930 = vunpack.c.l.b16 %v4728
        %v4931 = vunpack.c.h.b16 %v4728
        %v4932 = vunpack.c.l.b16 %v4729
        %v4933 = vpack.c.b16 %v4840, %v4837
        %v4934 = vpack.c.b16 %v4841, %v4838
        %v4935 = vpack.c.b16 %v4842, %v4839
        %v4936 = vpack.c.b16 %v4846, %v4843
        %v4937 = vpack.c.b16 %v4847, %v4844
        %v4938 = vpack.c.b16 %v4848, %v4845
        %v4939 = vpack.c.b16 %v4852, %v4849
        %v4940 = vpack.c.b16 %v4853, %v4850
        %v4941 = vpack.c.b16 %v4854, %v4851
        %v4942 = vpack.c.b16 %v4858, %v4855
        %v4943 = vpack.c.b16 %v4859, %v4856
        %v4944 = vpack.c.b16 %v4860, %v4857
        %v4945 = vpack.c.b16 %v4864, %v4861
        %v4946 = vpack.c.b16 %v4865, %v4862
        %v4947 = vpack.c.b16 %v4866, %v4863
        %v4948 = vpack.c.b16 %v4870, %v4867
        %v4949 = vpack.c.b16 %v4871, %v4868
        %v4950 = vpack.c.b16 %v4872, %v4869
        %v4951 = vpack.c.b16 %v4876, %v4873
        %v4952 = vpack.c.b16 %v4877, %v4874
        %v4953 = vpack.c.b16 %v4878, %v4875
        %v4954 = vpack.c.b16 %v4882, %v4879
        %v4955 = vpack.c.b16 %v4883, %v4880
        %v4956 = vpack.c.b16 %v4884, %v4881
        %v4957 = vpack.c.b16 %v4888, %v4885
        %v4958 = vpack.c.b16 %v4889, %v4886
        %v4959 = vpack.c.b16 %v4890, %v4887
        %v4960 = vpack.c.b16 %v4894, %v4891
        %v4961 = vpack.c.b16 %v4895, %v4892
        %v4962 = vpack.c.b16 %v4896, %v4893
        %v4963 = vpack.c.b16 %v4900, %v4897
        %v4964 = vpack.c.b16 %v4901, %v4898
        %v4965 = vpack.c.b16 %v4902, %v4899
        %v4966 = vpack.c.b16 %v4906, %v4903
        %v4967 = vpack.c.b16 %v4907, %v4904
        %v4968 = vpack.c.b16 %v4908, %v4905
        %v4969 = vpack.c.b16 %v4912, %v4909
        %v4970 = vpack.c.b16 %v4913, %v4910
        %v4971 = vpack.c.b16 %v4914, %v4911
        %v4972 = vpack.c.b16 %v4918, %v4915
        %v4973 = vpack.c.b16 %v4919, %v4916
        %v4974 = vpack.c.b16 %v4920, %v4917
        %v4975 = vpack.c.b16 %v4924, %v4921
        %v4976 = vpack.c.b16 %v4925, %v4922
        %v4977 = vpack.c.b16 %v4926, %v4923
        %v4978 = vpack.c.b16 %v4930, %v4927
        %v4979 = vpack.c.b16 %v4931, %v4928
        %v4980 = vpack.c.b16 %v4932, %v4929
        %v5049 = vunpack.c.l.b16 %v4730
        %v5050 = vunpack.c.l.b16 %v4731
        %v5051 = vunpack.c.l.b16 %v4732
        %v5052 = vunpack.c.l.b16 %v4733
        %v5053 = vunpack.c.l.b16 %v4734
        %v5054 = vunpack.c.l.b16 %v4735
        %v5055 = vunpack.c.l.b16 %v4736
        %v5056 = vunpack.c.l.b16 %v4737
        %v5057 = vunpack.c.l.b16 %v4738
        %v5058 = vunpack.c.l.b16 %v4739
        %v5059 = vunpack.c.l.b16 %v4740
        %v5060 = vunpack.c.l.b16 %v4741
        %v5061 = vunpack.c.l.b16 %v4742
        %v5062 = vunpack.c.l.b16 %v4743
        %v5063 = vunpack.c.l.b16 %v4744
        %v5064 = vunpack.c.l.b16 %v4745
        %v5065 = vunpack.c.l.b16 %v4746
        %v5066 = vunpack.c.l.b16 %v4747
        %v5067 = vunpack.c.l.b16 %v4748
        %v5068 = vunpack.c.l.b16 %v4749
        %v5069 = vunpack.c.l.b16 %v4750
        %v5070 = vunpack.c.l.b16 %v4751
        %v5071 = vunpack.c.l.b16 %v4752
        %v5072 = vunpack.c.l.b16 %v4753
        %v5073 = vunpack.c.l.b16 %v4754
        %v5074 = vunpack.c.l.b16 %v4755
        %v5075 = vunpack.c.l.b16 %v4756
        %v5076 = vunpack.c.l.b16 %v4757
        %v5077 = vunpack.c.l.b16 %v4758
        %v5078 = vunpack.c.l.b16 %v4759
        %v5079 = vunpack.c.l.b16 %v4760
        %v5080 = vunpack.c.l.b16 %v4761
        %v5081 = vunpack.c.l.b16 %v4762
        %v5082 = vunpack.c.l.b16 %v4763
        %v5083 = vunpack.c.l.b16 %v4764
        %v5084 = vunpack.c.l.b16 %v4765
        %v5085 = vpack.c.b16 %v5050, %v5049
        %v5086 = vpack.c.b16 %v5052, %v5051
        %v5087 = vpack.c.b16 %v5054, %v5053
        %v5088 = vpack.c.b16 %v5056, %v5055
        %v5089 = vpack.c.b16 %v5058, %v5057
        %v5090 = vpack.c.b16 %v5060, %v5059
        %v5091 = vpack.c.b16 %v5062, %v5061
        %v5092 = vpack.c.b16 %v5064, %v5063
        %v5093 = vpack.c.b16 %v5066, %v5065
        %v5094 = vpack.c.b16 %v5068, %v5067
        %v5095 = vpack.c.b16 %v5070, %v5069
        %v5096 = vpack.c.b16 %v5072, %v5071
        %v5097 = vpack.c.b16 %v5074, %v5073
        %v5098 = vpack.c.b16 %v5076, %v5075
        %v5099 = vpack.c.b16 %v5078, %v5077
        %v5100 = vpack.c.b16 %v5080, %v5079
        %v5101 = vpack.c.b16 %v5082, %v5081
        %v5102 = vpack.c.b16 %v5084, %v5083
        %vm5121 = vcmask 261120
        %v5123 = vsel %vm5121, %v4935, 0
        %v5126 = vsel %vm5121, %v4938, 0
        %v5129 = vsel %vm5121, %v4941, 0
        %v5132 = vsel %vm5121, %v4944, 0
        %v5135 = vsel %vm5121, %v4947, 0
        %v5138 = vsel %vm5121, %v4950, 0
        %v5141 = vsel %vm5121, %v4953, 0
        %v5144 = vsel %vm5121, %v4956, 0
        %v5147 = vsel %vm5121, %v4959, 0
        %v5150 = vsel %vm5121, %v4962, 0
        %v5153 = vsel %vm5121, %v4965, 0
        %v5156 = vsel %vm5121, %v4968, 0
        %v5159 = vsel %vm5121, %v4971, 0
        %v5162 = vsel %vm5121, %v4974, 0
        %v5165 = vsel %vm5121, %v4977, 0
        %v5168 = vsel %vm5121, %v4980, 0
        %5170 = vmatprep.subr.bf16.mxu0 0
        %5171 = vmatpush1.bf16.msra.mxu0 %v5092
        %5172 = vmatprep.subr.bf16.mxu0 0
        %5173 = vmatpush1.bf16.msra.mxu0 %v5091
        %5174 = vmatprep.subr.bf16.mxu0 0
        %5175 = vmatpush1.bf16.msra.mxu0 %v5090
        %5176 = vmatprep.subr.bf16.mxu0 0
        %5177 = vmatpush1.bf16.msra.mxu0 %v5089
        %5178 = vmatprep.subr.bf16.mxu0 0
        %5179 = vmatpush1.bf16.msra.mxu0 %v5088
        %5180 = vmatprep.subr.bf16.mxu0 0
        %5181 = vmatpush1.bf16.msra.mxu0 %v5087
        %5182 = vmatprep.subr.bf16.mxu0 0
        %5183 = vmatpush1.bf16.msra.mxu0 %v5086
        %5184 = vmatprep.subr.bf16.mxu0 0
        %5185 = vmatpush1.bf16.msra.mxu0 %v5085
        %5186 = vmatprep.subr.bf16.mxu0 0
        %5187 = vmatpush2.bf16.msra.mxu0 %v5100
        %5188 = vmatprep.subr.bf16.mxu0 0
        %5189 = vmatpush2.bf16.msra.mxu0 %v5099
        %5190 = vmatprep.subr.bf16.mxu0 0
        %5191 = vmatpush2.bf16.msra.mxu0 %v5098
        %5192 = vmatprep.subr.bf16.mxu0 0
        %5193 = vmatpush2.bf16.msra.mxu0 %v5097
        %5194 = vmatprep.subr.bf16.mxu0 0
        %5195 = vmatpush2.bf16.msra.mxu0 %v5096
        %5196 = vmatprep.subr.bf16.mxu0 0
        %5197 = vmatpush2.bf16.msra.mxu0 %v5095
        %5198 = vmatprep.subr.bf16.mxu0 0
        %5199 = vmatpush2.bf16.msra.mxu0 %v5094
        %5200 = vmatprep.subr.bf16.mxu0 0
        %5201 = vmatpush2.bf16.msra.mxu0 %v5093
        %5202 = vmatprep.mubr.bf16.mxu0 %v4934
        %5203 = vmatmul.mubr.bf16.gmra.mxu0 %v4933
        %v5204 = vpop.f32.mrf.mxu0
        %v5205 = vadd.f32 %v4771, %v5204
        %v5206 = vpop.f32.mrf.mxu0
        %v5207 = vpop.f32.mrf.mxu0
        %v5208 = vadd.f32 %v4771, %v5207
        %v5209 = vpop.f32.mrf.mxu0
        %5210 = vmatprep.mubr.bf16.mxu0 %v4937
        %5211 = vmatmul.mubr.bf16.gmra.mxu0 %v4936
        %v5212 = vpop.f32.mrf.mxu0
        %v5213 = vadd.f32 %v4771, %v5212
        %v5214 = vpop.f32.mrf.mxu0
        %v5215 = vpop.f32.mrf.mxu0
        %v5216 = vadd.f32 %v4771, %v5215
        %v5217 = vpop.f32.mrf.mxu0
        %5218 = vmatprep.mubr.bf16.mxu0 %v4940
        %5219 = vmatmul.mubr.bf16.gmra.mxu0 %v4939
        %v5220 = vpop.f32.mrf.mxu0
        %v5221 = vadd.f32 %v4771, %v5220
        %v5222 = vpop.f32.mrf.mxu0
        %v5223 = vpop.f32.mrf.mxu0
        %v5224 = vadd.f32 %v4771, %v5223
        %v5225 = vpop.f32.mrf.mxu0
        %5226 = vmatprep.mubr.bf16.mxu0 %v4943
        %5227 = vmatmul.mubr.bf16.gmra.mxu0 %v4942
        %v5228 = vpop.f32.mrf.mxu0
        %v5229 = vadd.f32 %v4771, %v5228
        %v5230 = vpop.f32.mrf.mxu0
        %v5231 = vpop.f32.mrf.mxu0
        %v5232 = vadd.f32 %v4771, %v5231
        %v5233 = vpop.f32.mrf.mxu0
        %5234 = vmatprep.mubr.bf16.mxu0 %v4946
        %5235 = vmatmul.mubr.bf16.gmra.mxu0 %v4945
        %v5236 = vpop.f32.mrf.mxu0
        %v5237 = vadd.f32 %v4771, %v5236
        %v5238 = vpop.f32.mrf.mxu0
        %v5239 = vpop.f32.mrf.mxu0
        %v5240 = vadd.f32 %v4771, %v5239
        %v5241 = vpop.f32.mrf.mxu0
        %5242 = vmatprep.mubr.bf16.mxu0 %v4949
        %5243 = vmatmul.mubr.bf16.gmra.mxu0 %v4948
        %v5244 = vpop.f32.mrf.mxu0
        %v5245 = vadd.f32 %v4771, %v5244
        %v5246 = vpop.f32.mrf.mxu0
        %v5247 = vpop.f32.mrf.mxu0
        %v5248 = vadd.f32 %v4771, %v5247
        %v5249 = vpop.f32.mrf.mxu0
        %5250 = vmatprep.mubr.bf16.mxu0 %v4952
        %5251 = vmatmul.mubr.bf16.gmra.mxu0 %v4951
        %v5252 = vpop.f32.mrf.mxu0
        %v5253 = vadd.f32 %v4771, %v5252
        %v5254 = vpop.f32.mrf.mxu0
        %v5255 = vpop.f32.mrf.mxu0
        %v5256 = vadd.f32 %v4771, %v5255
        %v5257 = vpop.f32.mrf.mxu0
        %5258 = vmatprep.mubr.bf16.mxu0 %v4955
        %5259 = vmatmul.mubr.bf16.gmra.mxu0 %v4954
        %v5260 = vpop.f32.mrf.mxu0
        %v5261 = vadd.f32 %v4771, %v5260
        %v5262 = vpop.f32.mrf.mxu0
        %v5263 = vpop.f32.mrf.mxu0
        %v5264 = vadd.f32 %v4771, %v5263
        %v5265 = vpop.f32.mrf.mxu0
        %5266 = vmatprep.mubr.bf16.mxu0 %v4958
        %5267 = vmatmul.mubr.bf16.gmra.mxu0 %v4957
        %v5268 = vpop.f32.mrf.mxu0
        %v5269 = vadd.f32 %v4771, %v5268
        %v5270 = vpop.f32.mrf.mxu0
        %v5271 = vpop.f32.mrf.mxu0
        %v5272 = vadd.f32 %v4771, %v5271
        %v5273 = vpop.f32.mrf.mxu0
        %5274 = vmatprep.mubr.bf16.mxu0 %v4961
        %5275 = vmatmul.mubr.bf16.gmra.mxu0 %v4960
        %v5276 = vpop.f32.mrf.mxu0
        %v5277 = vadd.f32 %v4771, %v5276
        %v5278 = vpop.f32.mrf.mxu0
        %v5279 = vpop.f32.mrf.mxu0
        %v5280 = vadd.f32 %v4771, %v5279
        %v5281 = vpop.f32.mrf.mxu0
        %5282 = vmatprep.mubr.bf16.mxu0 %v4964
        %5283 = vmatmul.mubr.bf16.gmra.mxu0 %v4963
        %v5284 = vpop.f32.mrf.mxu0
        %v5285 = vadd.f32 %v4771, %v5284
        %v5286 = vpop.f32.mrf.mxu0
        %v5287 = vpop.f32.mrf.mxu0
        %v5288 = vadd.f32 %v4771, %v5287
        %v5289 = vpop.f32.mrf.mxu0
        %5290 = vmatprep.mubr.bf16.mxu0 %v4967
        %5291 = vmatmul.mubr.bf16.gmra.mxu0 %v4966
        %v5292 = vpop.f32.mrf.mxu0
        %v5293 = vadd.f32 %v4771, %v5292
        %v5294 = vpop.f32.mrf.mxu0
        %v5295 = vpop.f32.mrf.mxu0
        %v5296 = vadd.f32 %v4771, %v5295
        %v5297 = vpop.f32.mrf.mxu0
        %5298 = vmatprep.mubr.bf16.mxu0 %v4970
        %5299 = vmatmul.mubr.bf16.gmra.mxu0 %v4969
        %v5300 = vpop.f32.mrf.mxu0
        %v5301 = vadd.f32 %v4771, %v5300
        %v5302 = vpop.f32.mrf.mxu0
        %v5303 = vpop.f32.mrf.mxu0
        %v5304 = vadd.f32 %v4771, %v5303
        %v5305 = vpop.f32.mrf.mxu0
        %5306 = vmatprep.mubr.bf16.mxu0 %v4973
        %5307 = vmatmul.mubr.bf16.gmra.mxu0 %v4972
        %v5308 = vpop.f32.mrf.mxu0
        %v5309 = vadd.f32 %v4771, %v5308
        %v5310 = vpop.f32.mrf.mxu0
        %v5311 = vpop.f32.mrf.mxu0
        %v5312 = vadd.f32 %v4771, %v5311
        %v5313 = vpop.f32.mrf.mxu0
        %5314 = vmatprep.mubr.bf16.mxu0 %v4976
        %5315 = vmatmul.mubr.bf16.gmra.mxu0 %v4975
        %v5316 = vpop.f32.mrf.mxu0
        %v5317 = vadd.f32 %v4771, %v5316
        %v5318 = vpop.f32.mrf.mxu0
        %v5319 = vpop.f32.mrf.mxu0
        %v5320 = vadd.f32 %v4771, %v5319
        %v5321 = vpop.f32.mrf.mxu0
        %5322 = vmatprep.mubr.bf16.mxu0 %v4979
        %5323 = vmatmul.mubr.bf16.gmra.mxu0 %v4978
        %v5324 = vpop.f32.mrf.mxu0
        %v5325 = vadd.f32 %v4771, %v5324
        %v5326 = vpop.f32.mrf.mxu0
        %v5327 = vpop.f32.mrf.mxu0
        %v5328 = vadd.f32 %v4771, %v5327
        %v5329 = vpop.f32.mrf.mxu0
        %5330 = vdwg.mxu0
        %5331 = vmatprep.subr.bf16.mxu0 0
        %5332 = vmatpush1.bf16.msra.mxu0 0
        %5333 = vmatprep.subr.bf16.mxu0 0
        %5334 = vmatpush1.bf16.msra.mxu0 0
        %5335 = vmatprep.subr.bf16.mxu0 0
        %5336 = vmatpush1.bf16.msra.mxu0 0
        %5337 = vmatprep.subr.bf16.mxu0 0
        %5338 = vmatpush1.bf16.msra.mxu0 0
        %5339 = vmatprep.subr.bf16.mxu0 0
        %5340 = vmatpush1.bf16.msra.mxu0 0
        %5341 = vmatprep.subr.bf16.mxu0 0
        %5342 = vmatpush1.bf16.msra.mxu0 0
        %5343 = vmatprep.subr.bf16.mxu0 0
        %5344 = vmatpush1.bf16.msra.mxu0 %v5102
        %5345 = vmatprep.subr.bf16.mxu0 0
        %5346 = vmatpush1.bf16.msra.mxu0 %v5101
        %5347 = vmatprep.subr.bf16.mxu0 0
        %5348 = vmatpush2.bf16.msra.mxu0 0
        %5349 = vmatprep.subr.bf16.mxu0 0
        %5350 = vmatpush2.bf16.msra.mxu0 0
        %5351 = vmatprep.subr.bf16.mxu0 0
        %5352 = vmatpush2.bf16.msra.mxu0 0
        %5353 = vmatprep.subr.bf16.mxu0 0
        %5354 = vmatpush2.bf16.msra.mxu0 0
        %5355 = vmatprep.subr.bf16.mxu0 0
        %5356 = vmatpush2.bf16.msra.mxu0 0
        %5357 = vmatprep.subr.bf16.mxu0 0
        %5358 = vmatpush2.bf16.msra.mxu0 0
        %5359 = vmatprep.subr.bf16.mxu0 0
        %5360 = vmatpush2.bf16.msra.mxu0 0
        %5361 = vmatprep.subr.bf16.mxu0 0
        %5362 = vmatpush2.bf16.msra.mxu0 0
        %5363 = vmatprep.mubr.bf16.mxu0 0
        %5364 = vmatmul.mubr.bf16.gmra.mxu0 %v5123
        %v5365 = vpop.f32.mrf.mxu0
        %v5366 = vadd.f32 %v5205, %v5365
        %v5367 = vpop.f32.mrf.mxu0
        %v5368 = vpop.f32.mrf.mxu0
        %v5369 = vadd.f32 %v5208, %v5368
        %v5370 = vpop.f32.mrf.mxu0
        %5371 = vmatprep.mubr.bf16.mxu0 0
        %5372 = vmatmul.mubr.bf16.gmra.mxu0 %v5126
        %v5373 = vpop.f32.mrf.mxu0
        %v5374 = vadd.f32 %v5213, %v5373
        %v5375 = vpop.f32.mrf.mxu0
        %v5376 = vpop.f32.mrf.mxu0
        %v5377 = vadd.f32 %v5216, %v5376
        %v5378 = vpop.f32.mrf.mxu0
        %5379 = vmatprep.mubr.bf16.mxu0 0
        %5380 = vmatmul.mubr.bf16.gmra.mxu0 %v5129
        %v5381 = vpop.f32.mrf.mxu0
        %v5382 = vadd.f32 %v5221, %v5381
        %v5383 = vpop.f32.mrf.mxu0
        %v5384 = vpop.f32.mrf.mxu0
        %v5385 = vadd.f32 %v5224, %v5384
        %v5386 = vpop.f32.mrf.mxu0
        %5387 = vmatprep.mubr.bf16.mxu0 0
        %5388 = vmatmul.mubr.bf16.gmra.mxu0 %v5132
        %v5389 = vpop.f32.mrf.mxu0
        %v5390 = vadd.f32 %v5229, %v5389
        %v5391 = vpop.f32.mrf.mxu0
        %v5392 = vpop.f32.mrf.mxu0
        %v5393 = vadd.f32 %v5232, %v5392
        %v5394 = vpop.f32.mrf.mxu0
        %5395 = vmatprep.mubr.bf16.mxu0 0
        %5396 = vmatmul.mubr.bf16.gmra.mxu0 %v5135
        %v5397 = vpop.f32.mrf.mxu0
        %v5398 = vadd.f32 %v5237, %v5397
        %v5399 = vpop.f32.mrf.mxu0
        %v5400 = vpop.f32.mrf.mxu0
        %v5401 = vadd.f32 %v5240, %v5400
        %v5402 = vpop.f32.mrf.mxu0
        %5403 = vmatprep.mubr.bf16.mxu0 0
        %5404 = vmatmul.mubr.bf16.gmra.mxu0 %v5138
        %v5405 = vpop.f32.mrf.mxu0
        %v5406 = vadd.f32 %v5245, %v5405
        %v5407 = vpop.f32.mrf.mxu0
        %v5408 = vpop.f32.mrf.mxu0
        %v5409 = vadd.f32 %v5248, %v5408
        %v5410 = vpop.f32.mrf.mxu0
        %5411 = vmatprep.mubr.bf16.mxu0 0
        %5412 = vmatmul.mubr.bf16.gmra.mxu0 %v5141
        %v5413 = vpop.f32.mrf.mxu0
        %v5414 = vadd.f32 %v5253, %v5413
        %v5415 = vpop.f32.mrf.mxu0
        %v5416 = vpop.f32.mrf.mxu0
        %v5417 = vadd.f32 %v5256, %v5416
        %v5418 = vpop.f32.mrf.mxu0
        %5419 = vmatprep.mubr.bf16.mxu0 0
        %5420 = vmatmul.mubr.bf16.gmra.mxu0 %v5144
        %v5421 = vpop.f32.mrf.mxu0
        %v5422 = vadd.f32 %v5261, %v5421
        %v5423 = vpop.f32.mrf.mxu0
        %v5424 = vpop.f32.mrf.mxu0
        %v5425 = vadd.f32 %v5264, %v5424
        %v5426 = vpop.f32.mrf.mxu0
        %5427 = vmatprep.mubr.bf16.mxu0 0
        %5428 = vmatmul.mubr.bf16.gmra.mxu0 %v5147
        %v5429 = vpop.f32.mrf.mxu0
        %v5430 = vadd.f32 %v5269, %v5429
        %v5431 = vpop.f32.mrf.mxu0
        %v5432 = vpop.f32.mrf.mxu0
        %v5433 = vadd.f32 %v5272, %v5432
        %v5434 = vpop.f32.mrf.mxu0
        %5435 = vmatprep.mubr.bf16.mxu0 0
        %5436 = vmatmul.mubr.bf16.gmra.mxu0 %v5150
        %v5437 = vpop.f32.mrf.mxu0
        %v5438 = vadd.f32 %v5277, %v5437
        %v5439 = vpop.f32.mrf.mxu0
        %v5440 = vpop.f32.mrf.mxu0
        %v5441 = vadd.f32 %v5280, %v5440
        %v5442 = vpop.f32.mrf.mxu0
        %5443 = vmatprep.mubr.bf16.mxu0 0
        %5444 = vmatmul.mubr.bf16.gmra.mxu0 %v5153
        %v5445 = vpop.f32.mrf.mxu0
        %v5446 = vadd.f32 %v5285, %v5445
        %v5447 = vpop.f32.mrf.mxu0
        %v5448 = vpop.f32.mrf.mxu0
        %v5449 = vadd.f32 %v5288, %v5448
        %v5450 = vpop.f32.mrf.mxu0
        %5451 = vmatprep.mubr.bf16.mxu0 0
        %5452 = vmatmul.mubr.bf16.gmra.mxu0 %v5156
        %v5453 = vpop.f32.mrf.mxu0
        %v5454 = vadd.f32 %v5293, %v5453
        %v5455 = vpop.f32.mrf.mxu0
        %v5456 = vpop.f32.mrf.mxu0
        %v5457 = vadd.f32 %v5296, %v5456
        %v5458 = vpop.f32.mrf.mxu0
        %5459 = vmatprep.mubr.bf16.mxu0 0
        %5460 = vmatmul.mubr.bf16.gmra.mxu0 %v5159
        %v5461 = vpop.f32.mrf.mxu0
        %v5462 = vadd.f32 %v5301, %v5461
        %v5463 = vpop.f32.mrf.mxu0
        %v5464 = vpop.f32.mrf.mxu0
        %v5465 = vadd.f32 %v5304, %v5464
        %v5466 = vpop.f32.mrf.mxu0
        %5467 = vmatprep.mubr.bf16.mxu0 0
        %5468 = vmatmul.mubr.bf16.gmra.mxu0 %v5162
        %v5469 = vpop.f32.mrf.mxu0
        %v5470 = vadd.f32 %v5309, %v5469
        %v5471 = vpop.f32.mrf.mxu0
        %v5472 = vpop.f32.mrf.mxu0
        %v5473 = vadd.f32 %v5312, %v5472
        %v5474 = vpop.f32.mrf.mxu0
        %5475 = vmatprep.mubr.bf16.mxu0 0
        %5476 = vmatmul.mubr.bf16.gmra.mxu0 %v5165
        %v5477 = vpop.f32.mrf.mxu0
        %v5478 = vadd.f32 %v5317, %v5477
        %v5479 = vpop.f32.mrf.mxu0
        %v5480 = vpop.f32.mrf.mxu0
        %v5481 = vadd.f32 %v5320, %v5480
        %v5482 = vpop.f32.mrf.mxu0
        %5483 = vmatprep.mubr.bf16.mxu0 0
        %5484 = vmatmul.mubr.bf16.gmra.mxu0 %v5168
        %v5485 = vpop.f32.mrf.mxu0
        %v5486 = vadd.f32 %v5325, %v5485
        %v5487 = vpop.f32.mrf.mxu0
        %v5488 = vpop.f32.mrf.mxu0
        %v5489 = vadd.f32 %v5328, %v5488
        %v5490 = vpop.f32.mrf.mxu0
        %5491 = vdwg.mxu0
        %v5492 = vmax.f32 %v5366, 0.0
        %v5493 = vmax.f32 %v5369, 0.0
        %v5494 = vmax.f32 %v5374, 0.0
        %v5495 = vmax.f32 %v5377, 0.0
        %v5496 = vmax.f32 %v5382, 0.0
        %v5497 = vmax.f32 %v5385, 0.0
        %v5498 = vmax.f32 %v5390, 0.0
        %v5499 = vmax.f32 %v5393, 0.0
        %v5500 = vmax.f32 %v5398, 0.0
        %v5501 = vmax.f32 %v5401, 0.0
        %v5502 = vmax.f32 %v5406, 0.0
        %v5503 = vmax.f32 %v5409, 0.0
        %v5504 = vmax.f32 %v5414, 0.0
        %v5505 = vmax.f32 %v5417, 0.0
        %v5506 = vmax.f32 %v5422, 0.0
        %v5507 = vmax.f32 %v5425, 0.0
        %v5508 = vmax.f32 %v5430, 0.0
        %v5509 = vmax.f32 %v5433, 0.0
        %v5510 = vmax.f32 %v5438, 0.0
        %v5511 = vmax.f32 %v5441, 0.0
        %v5512 = vmax.f32 %v5446, 0.0
        %v5513 = vmax.f32 %v5449, 0.0
        %v5514 = vmax.f32 %v5454, 0.0
        %v5515 = vmax.f32 %v5457, 0.0
        %v5516 = vmax.f32 %v5462, 0.0
        %v5517 = vmax.f32 %v5465, 0.0
        %v5518 = vmax.f32 %v5470, 0.0
        %v5519 = vmax.f32 %v5473, 0.0
        %v5520 = vmax.f32 %v5478, 0.0
        %v5521 = vmax.f32 %v5481, 0.0
        %v5522 = vmax.f32 %v5486, 0.0
        %v5523 = vmax.f32 %v5489, 0.0
        %v5524 = vpack.c.bf16 %v5493, %v5492
        %v5525 = vpack.c.bf16 %v5495, %v5494
        %v5526 = vpack.c.bf16 %v5497, %v5496
        %v5527 = vpack.c.bf16 %v5499, %v5498
        %v5528 = vpack.c.bf16 %v5501, %v5500
        %v5529 = vpack.c.bf16 %v5503, %v5502
        %v5530 = vpack.c.bf16 %v5505, %v5504
        %v5531 = vpack.c.bf16 %v5507, %v5506
        %v5532 = vpack.c.bf16 %v5509, %v5508
        %v5533 = vpack.c.bf16 %v5511, %v5510
        %v5534 = vpack.c.bf16 %v5513, %v5512
        %v5535 = vpack.c.bf16 %v5515, %v5514
        %v5536 = vpack.c.bf16 %v5517, %v5516
        %v5537 = vpack.c.bf16 %v5519, %v5518
        %v5538 = vpack.c.bf16 %v5521, %v5520
        %v5539 = vpack.c.bf16 %v5523, %v5522
        %v5540 = vld [vmem:[%s7] sm:$0xf]
        %v5541 = vld [vmem:[%s7 + $0x4] sm:$0xf]
        %v5542 = vld [vmem:[%s7 + $0x8] sm:$0xf]
        %v5543 = vld [vmem:[%s7 + $0xc] sm:$0xf]
        %v5544 = vld [vmem:[%s8] sm:$0x1]
        %v5546 = vlaneseq
        %v5547 = vshrl.u32 %v5546, 7
        %v5548 = vsub.s32 0, %v5547
        %v5549 = vrot.slane %v5544, %v5548
        %v5555 = vunpack.c.l.b16 %v5540
        %v5556 = vunpack.c.l.b16 %v5541
        %v5557 = vunpack.c.l.b16 %v5542
        %v5558 = vunpack.c.l.b16 %v5543
        %v5559 = vpack.c.b16 %v5556, %v5555
        %v5560 = vpack.c.b16 %v5558, %v5557
        %v5564 = vsel %vm5121, %v5524, 0
        %v5567 = vsel %vm5121, %v5525, 0
        %v5570 = vsel %vm5121, %v5526, 0
        %v5573 = vsel %vm5121, %v5527, 0
        %v5576 = vsel %vm5121, %v5528, 0
        %v5579 = vsel %vm5121, %v5529, 0
        %v5582 = vsel %vm5121, %v5530, 0
        %v5585 = vsel %vm5121, %v5531, 0
        %v5588 = vsel %vm5121, %v5532, 0
        %v5591 = vsel %vm5121, %v5533, 0
        %v5594 = vsel %vm5121, %v5534, 0
        %v5597 = vsel %vm5121, %v5535, 0
        %v5600 = vsel %vm5121, %v5536, 0
        %v5603 = vsel %vm5121, %v5537, 0
        %v5606 = vsel %vm5121, %v5538, 0
        %v5609 = vsel %vm5121, %v5539, 0
        %5611 = vmatprep.subr.bf16.mxu0 0
        %5612 = vmatpush1.bf16.msra.mxu0 0
        %5613 = vmatprep.subr.bf16.mxu0 0
        %5614 = vmatpush1.bf16.msra.mxu0 0
        %5615 = vmatprep.subr.bf16.mxu0 0
        %5616 = vmatpush1.bf16.msra.mxu0 0
        %5617 = vmatprep.subr.bf16.mxu0 0
        %5618 = vmatpush1.bf16.msra.mxu0 0
        %5619 = vmatprep.subr.bf16.mxu0 0
        %5620 = vmatpush1.bf16.msra.mxu0 0
        %5621 = vmatprep.subr.bf16.mxu0 0
        %5622 = vmatpush1.bf16.msra.mxu0 0
        %5623 = vmatprep.subr.bf16.mxu0 0
        %5624 = vmatpush1.bf16.msra.mxu0 %v5560
        %5625 = vmatprep.subr.bf16.mxu0 0
        %5626 = vmatpush1.bf16.msra.mxu0 %v5559
        %5627 = vmatprep.subr.bf16.mxu0 0
        %5628 = vmatpush2.bf16.msra.mxu0 0
        %5629 = vmatprep.subr.bf16.mxu0 0
        %5630 = vmatpush2.bf16.msra.mxu0 0
        %5631 = vmatprep.subr.bf16.mxu0 0
        %5632 = vmatpush2.bf16.msra.mxu0 0
        %5633 = vmatprep.subr.bf16.mxu0 0
        %5634 = vmatpush2.bf16.msra.mxu0 0
        %5635 = vmatprep.subr.bf16.mxu0 0
        %5636 = vmatpush2.bf16.msra.mxu0 0
        %5637 = vmatprep.subr.bf16.mxu0 0
        %5638 = vmatpush2.bf16.msra.mxu0 0
        %5639 = vmatprep.subr.bf16.mxu0 0
        %5640 = vmatpush2.bf16.msra.mxu0 0
        %5641 = vmatprep.subr.bf16.mxu0 0
        %5642 = vmatpush2.bf16.msra.mxu0 0
        %5643 = vmatprep.mubr.bf16.mxu0 0
        %5644 = vmatmul.mubr.bf16.gmra.mxu0 %v5564
        %v5645 = vpop.f32.mrf.mxu0
        %v5646 = vadd.f32 %v5549, %v5645
        %v5647 = vpop.f32.mrf.mxu0
        %v5648 = vpop.f32.mrf.mxu0
        %v5649 = vadd.f32 %v5549, %v5648
        %v5650 = vpop.f32.mrf.mxu0
        %5651 = vmatprep.mubr.bf16.mxu0 0
        %5652 = vmatmul.mubr.bf16.gmra.mxu0 %v5567
        %v5653 = vpop.f32.mrf.mxu0
        %v5654 = vadd.f32 %v5549, %v5653
        %v5655 = vpop.f32.mrf.mxu0
        %v5656 = vpop.f32.mrf.mxu0
        %v5657 = vadd.f32 %v5549, %v5656
        %v5658 = vpop.f32.mrf.mxu0
        %5659 = vmatprep.mubr.bf16.mxu0 0
        %5660 = vmatmul.mubr.bf16.gmra.mxu0 %v5570
        %v5661 = vpop.f32.mrf.mxu0
        %v5662 = vadd.f32 %v5549, %v5661
        %v5663 = vpop.f32.mrf.mxu0
        %v5664 = vpop.f32.mrf.mxu0
        %v5665 = vadd.f32 %v5549, %v5664
        %v5666 = vpop.f32.mrf.mxu0
        %5667 = vmatprep.mubr.bf16.mxu0 0
        %5668 = vmatmul.mubr.bf16.gmra.mxu0 %v5573
        %v5669 = vpop.f32.mrf.mxu0
        %v5670 = vadd.f32 %v5549, %v5669
        %v5671 = vpop.f32.mrf.mxu0
        %v5672 = vpop.f32.mrf.mxu0
        %v5673 = vadd.f32 %v5549, %v5672
        %v5674 = vpop.f32.mrf.mxu0
        %5675 = vmatprep.mubr.bf16.mxu0 0
        %5676 = vmatmul.mubr.bf16.gmra.mxu0 %v5576
        %v5677 = vpop.f32.mrf.mxu0
        %v5678 = vadd.f32 %v5549, %v5677
        %v5679 = vpop.f32.mrf.mxu0
        %v5680 = vpop.f32.mrf.mxu0
        %v5681 = vadd.f32 %v5549, %v5680
        %v5682 = vpop.f32.mrf.mxu0
        %5683 = vmatprep.mubr.bf16.mxu0 0
        %5684 = vmatmul.mubr.bf16.gmra.mxu0 %v5579
        %v5685 = vpop.f32.mrf.mxu0
        %v5686 = vadd.f32 %v5549, %v5685
        %v5687 = vpop.f32.mrf.mxu0
        %v5688 = vpop.f32.mrf.mxu0
        %v5689 = vadd.f32 %v5549, %v5688
        %v5690 = vpop.f32.mrf.mxu0
        %5691 = vmatprep.mubr.bf16.mxu0 0
        %5692 = vmatmul.mubr.bf16.gmra.mxu0 %v5582
        %v5693 = vpop.f32.mrf.mxu0
        %v5694 = vadd.f32 %v5549, %v5693
        %v5695 = vpop.f32.mrf.mxu0
        %v5696 = vpop.f32.mrf.mxu0
        %v5697 = vadd.f32 %v5549, %v5696
        %v5698 = vpop.f32.mrf.mxu0
        %5699 = vmatprep.mubr.bf16.mxu0 0
        %5700 = vmatmul.mubr.bf16.gmra.mxu0 %v5585
        %v5701 = vpop.f32.mrf.mxu0
        %v5702 = vadd.f32 %v5549, %v5701
        %v5703 = vpop.f32.mrf.mxu0
        %v5704 = vpop.f32.mrf.mxu0
        %v5705 = vadd.f32 %v5549, %v5704
        %v5706 = vpop.f32.mrf.mxu0
        %5707 = vmatprep.mubr.bf16.mxu0 0
        %5708 = vmatmul.mubr.bf16.gmra.mxu0 %v5588
        %v5709 = vpop.f32.mrf.mxu0
        %v5710 = vadd.f32 %v5549, %v5709
        %v5711 = vpop.f32.mrf.mxu0
        %v5712 = vpop.f32.mrf.mxu0
        %v5713 = vadd.f32 %v5549, %v5712
        %v5714 = vpop.f32.mrf.mxu0
        %5715 = vmatprep.mubr.bf16.mxu0 0
        %5716 = vmatmul.mubr.bf16.gmra.mxu0 %v5591
        %v5717 = vpop.f32.mrf.mxu0
        %v5718 = vadd.f32 %v5549, %v5717
        %v5719 = vpop.f32.mrf.mxu0
        %v5720 = vpop.f32.mrf.mxu0
        %v5721 = vadd.f32 %v5549, %v5720
        %v5722 = vpop.f32.mrf.mxu0
        %5723 = vmatprep.mubr.bf16.mxu0 0
        %5724 = vmatmul.mubr.bf16.gmra.mxu0 %v5594
        %v5725 = vpop.f32.mrf.mxu0
        %v5726 = vadd.f32 %v5549, %v5725
        %v5727 = vpop.f32.mrf.mxu0
        %v5728 = vpop.f32.mrf.mxu0
        %v5729 = vadd.f32 %v5549, %v5728
        %v5730 = vpop.f32.mrf.mxu0
        %5731 = vmatprep.mubr.bf16.mxu0 0
        %5732 = vmatmul.mubr.bf16.gmra.mxu0 %v5597
        %v5733 = vpop.f32.mrf.mxu0
        %v5734 = vadd.f32 %v5549, %v5733
        %v5735 = vpop.f32.mrf.mxu0
        %v5736 = vpop.f32.mrf.mxu0
        %v5737 = vadd.f32 %v5549, %v5736
        %v5738 = vpop.f32.mrf.mxu0
        %5739 = vmatprep.mubr.bf16.mxu0 0
        %5740 = vmatmul.mubr.bf16.gmra.mxu0 %v5600
        %v5741 = vpop.f32.mrf.mxu0
        %v5742 = vadd.f32 %v5549, %v5741
        %v5743 = vpop.f32.mrf.mxu0
        %v5744 = vpop.f32.mrf.mxu0
        %v5745 = vadd.f32 %v5549, %v5744
        %v5746 = vpop.f32.mrf.mxu0
        %5747 = vmatprep.mubr.bf16.mxu0 0
        %5748 = vmatmul.mubr.bf16.gmra.mxu0 %v5603
        %v5749 = vpop.f32.mrf.mxu0
        %v5750 = vadd.f32 %v5549, %v5749
        %v5751 = vpop.f32.mrf.mxu0
        %v5752 = vpop.f32.mrf.mxu0
        %v5753 = vadd.f32 %v5549, %v5752
        %v5754 = vpop.f32.mrf.mxu0
        %5755 = vmatprep.mubr.bf16.mxu0 0
        %5756 = vmatmul.mubr.bf16.gmra.mxu0 %v5606
        %v5757 = vpop.f32.mrf.mxu0
        %v5758 = vadd.f32 %v5549, %v5757
        %v5759 = vpop.f32.mrf.mxu0
        %v5760 = vpop.f32.mrf.mxu0
        %v5761 = vadd.f32 %v5549, %v5760
        %v5762 = vpop.f32.mrf.mxu0
        %5763 = vmatprep.mubr.bf16.mxu0 0
        %5764 = vmatmul.mubr.bf16.gmra.mxu0 %v5609
        %v5765 = vpop.f32.mrf.mxu0
        %v5766 = vadd.f32 %v5549, %v5765
        %v5767 = vpop.f32.mrf.mxu0
        %v5768 = vpop.f32.mrf.mxu0
        %v5769 = vadd.f32 %v5549, %v5768
        %v5770 = vpop.f32.mrf.mxu0
        %5771 = vdwg.mxu0
        %vm5772 = vcmp.gt.f32.partialorder %v5646, 0.0
        %vm5773 = vcmp.gt.f32.partialorder %v5649, 0.0
        %vm5774 = vcmp.gt.f32.partialorder %v5654, 0.0
        %vm5775 = vcmp.gt.f32.partialorder %v5657, 0.0
        %vm5776 = vcmp.gt.f32.partialorder %v5662, 0.0
        %vm5777 = vcmp.gt.f32.partialorder %v5665, 0.0
        %vm5778 = vcmp.gt.f32.partialorder %v5670, 0.0
        %vm5779 = vcmp.gt.f32.partialorder %v5673, 0.0
        %vm5780 = vcmp.gt.f32.partialorder %v5678, 0.0
        %vm5781 = vcmp.gt.f32.partialorder %v5681, 0.0
        %vm5782 = vcmp.gt.f32.partialorder %v5686, 0.0
        %vm5783 = vcmp.gt.f32.partialorder %v5689, 0.0
        %vm5784 = vcmp.gt.f32.partialorder %v5694, 0.0
        %vm5785 = vcmp.gt.f32.partialorder %v5697, 0.0
        %vm5786 = vcmp.gt.f32.partialorder %v5702, 0.0
        %vm5787 = vcmp.gt.f32.partialorder %v5705, 0.0
        %vm5788 = vcmp.gt.f32.partialorder %v5710, 0.0
        %vm5789 = vcmp.gt.f32.partialorder %v5713, 0.0
        %vm5790 = vcmp.gt.f32.partialorder %v5718, 0.0
        %vm5791 = vcmp.gt.f32.partialorder %v5721, 0.0
        %vm5792 = vcmp.gt.f32.partialorder %v5726, 0.0
        %vm5793 = vcmp.gt.f32.partialorder %v5729, 0.0
        %vm5794 = vcmp.gt.f32.partialorder %v5734, 0.0
        %vm5795 = vcmp.gt.f32.partialorder %v5737, 0.0
        %vm5796 = vcmp.gt.f32.partialorder %v5742, 0.0
        %vm5797 = vcmp.gt.f32.partialorder %v5745, 0.0
        %vm5798 = vcmp.gt.f32.partialorder %v5750, 0.0
        %vm5799 = vcmp.gt.f32.partialorder %v5753, 0.0
        %vm5800 = vcmp.gt.f32.partialorder %v5758, 0.0
        %vm5801 = vcmp.gt.f32.partialorder %v5761, 0.0
        %vm5802 = vcmp.gt.f32.partialorder %v5766, 0.0
        %vm5803 = vcmp.gt.f32.partialorder %v5769, 0.0
        %v5804 = vmul.f32 %v5646, 0.01
        %v5805 = vmul.f32 %v5649, 0.01
        %v5806 = vmul.f32 %v5654, 0.01
        %v5807 = vmul.f32 %v5657, 0.01
        %v5808 = vmul.f32 %v5662, 0.01
        %v5809 = vmul.f32 %v5665, 0.01
        %v5810 = vmul.f32 %v5670, 0.01
        %v5811 = vmul.f32 %v5673, 0.01
        %v5812 = vmul.f32 %v5678, 0.01
        %v5813 = vmul.f32 %v5681, 0.01
        %v5814 = vmul.f32 %v5686, 0.01
        %v5815 = vmul.f32 %v5689, 0.01
        %v5816 = vmul.f32 %v5694, 0.01
        %v5817 = vmul.f32 %v5697, 0.01
        %v5818 = vmul.f32 %v5702, 0.01
        %v5819 = vmul.f32 %v5705, 0.01
        %v5820 = vmul.f32 %v5710, 0.01
        %v5821 = vmul.f32 %v5713, 0.01
        %v5822 = vmul.f32 %v5718, 0.01
        %v5823 = vmul.f32 %v5721, 0.01
        %v5824 = vmul.f32 %v5726, 0.01
        %v5825 = vmul.f32 %v5729, 0.01
        %v5826 = vmul.f32 %v5734, 0.01
        %v5827 = vmul.f32 %v5737, 0.01
        %v5828 = vmul.f32 %v5742, 0.01
        %v5829 = vmul.f32 %v5745, 0.01
        %v5830 = vmul.f32 %v5750, 0.01
        %v5831 = vmul.f32 %v5753, 0.01
        %v5832 = vmul.f32 %v5758, 0.01
        %v5833 = vmul.f32 %v5761, 0.01
        %v5834 = vmul.f32 %v5766, 0.01
        %v5835 = vmul.f32 %v5769, 0.01
        %v5836 = vsel %vm5772, %v5646, %v5804
        %v5837 = vsel %vm5773, %v5649, %v5805
        %v5838 = vsel %vm5774, %v5654, %v5806
        %v5839 = vsel %vm5775, %v5657, %v5807
        %v5840 = vsel %vm5776, %v5662, %v5808
        %v5841 = vsel %vm5777, %v5665, %v5809
        %v5842 = vsel %vm5778, %v5670, %v5810
        %v5843 = vsel %vm5779, %v5673, %v5811
        %v5844 = vsel %vm5780, %v5678, %v5812
        %v5845 = vsel %vm5781, %v5681, %v5813
        %v5846 = vsel %vm5782, %v5686, %v5814
        %v5847 = vsel %vm5783, %v5689, %v5815
        %v5848 = vsel %vm5784, %v5694, %v5816
        %v5849 = vsel %vm5785, %v5697, %v5817
        %v5850 = vsel %vm5786, %v5702, %v5818
        %v5851 = vsel %vm5787, %v5705, %v5819
        %v5852 = vsel %vm5788, %v5710, %v5820
        %v5853 = vsel %vm5789, %v5713, %v5821
        %v5854 = vsel %vm5790, %v5718, %v5822
        %v5855 = vsel %vm5791, %v5721, %v5823
        %v5856 = vsel %vm5792, %v5726, %v5824
        %v5857 = vsel %vm5793, %v5729, %v5825
        %v5858 = vsel %vm5794, %v5734, %v5826
        %v5859 = vsel %vm5795, %v5737, %v5827
        %v5860 = vsel %vm5796, %v5742, %v5828
        %v5861 = vsel %vm5797, %v5745, %v5829
        %v5862 = vsel %vm5798, %v5750, %v5830
        %v5863 = vsel %vm5799, %v5753, %v5831
        %v5864 = vsel %vm5800, %v5758, %v5832
        %v5865 = vsel %vm5801, %v5761, %v5833
        %v5866 = vsel %vm5802, %v5766, %v5834
        %v5867 = vsel %vm5803, %v5769, %v5835
        %v5868 = vld [vmem:[%s409] sm:$0xf]
        %v5869 = vld [vmem:[%s409 + $0x4] sm:$0xf]
        %v5870 = vld [vmem:[%s409 + $0x8] sm:$0xf]
        %v5871 = vld [vmem:[%s409 + $0xc] sm:$0xf]
        %v5872 = vld [vmem:[%s409 + $0x10] sm:$0xf]
        %v5873 = vld [vmem:[%s409 + $0x14] sm:$0xf]
        %v5874 = vld [vmem:[%s409 + $0x18] sm:$0xf]
        %v5875 = vld [vmem:[%s409 + $0x1c] sm:$0xf]
        %v5876 = vld [vmem:[%s409 + $0x20] sm:$0xf]
        %v5877 = vld [vmem:[%s409 + $0x24] sm:$0xf]
        %v5878 = vld [vmem:[%s409 + $0x28] sm:$0xf]
        %v5879 = vld [vmem:[%s409 + $0x2c] sm:$0xf]
        %v5880 = vld [vmem:[%s409 + $0x30] sm:$0xf]
        %v5881 = vld [vmem:[%s409 + $0x34] sm:$0xf]
        %v5882 = vld [vmem:[%s409 + $0x38] sm:$0xf]
        %v5883 = vld [vmem:[%s409 + $0x3c] sm:$0xf]
        %v5884 = vld [vmem:[%s409 + $0x40] sm:$0xf]
        %v5885 = vld [vmem:[%s409 + $0x44] sm:$0xf]
        %v5886 = vld [vmem:[%s409 + $0x48] sm:$0xf]
        %v5887 = vld [vmem:[%s409 + $0x4c] sm:$0xf]
        %v5888 = vld [vmem:[%s409 + $0x50] sm:$0xf]
        %v5889 = vld [vmem:[%s409 + $0x54] sm:$0xf]
        %v5890 = vld [vmem:[%s409 + $0x58] sm:$0xf]
        %v5891 = vld [vmem:[%s409 + $0x5c] sm:$0xf]
        %v5892 = vld [vmem:[%s409 + $0x60] sm:$0xf]
        %v5893 = vld [vmem:[%s409 + $0x64] sm:$0xf]
        %v5894 = vld [vmem:[%s409 + $0x68] sm:$0xf]
        %v5895 = vld [vmem:[%s409 + $0x6c] sm:$0xf]
        %v5896 = vld [vmem:[%s409 + $0x70] sm:$0xf]
        %v5897 = vld [vmem:[%s409 + $0x74] sm:$0xf]
        %v5898 = vld [vmem:[%s409 + $0x78] sm:$0xf]
        %v5899 = vld [vmem:[%s409 + $0x7c] sm:$0xf]
        %v5900 = vunpack.c.l.bf16 %v5868
        %v5901 = vunpack.c.l.bf16 %v5869
        %v5902 = vunpack.c.l.bf16 %v5870
        %v5903 = vunpack.c.l.bf16 %v5871
        %v5904 = vunpack.c.l.bf16 %v5872
        %v5905 = vunpack.c.l.bf16 %v5873
        %v5906 = vunpack.c.l.bf16 %v5874
        %v5907 = vunpack.c.l.bf16 %v5875
        %v5908 = vunpack.c.l.bf16 %v5876
        %v5909 = vunpack.c.l.bf16 %v5877
        %v5910 = vunpack.c.l.bf16 %v5878
        %v5911 = vunpack.c.l.bf16 %v5879
        %v5912 = vunpack.c.l.bf16 %v5880
        %v5913 = vunpack.c.l.bf16 %v5881
        %v5914 = vunpack.c.l.bf16 %v5882
        %v5915 = vunpack.c.l.bf16 %v5883
        %v5916 = vunpack.c.l.bf16 %v5884
        %v5917 = vunpack.c.l.bf16 %v5885
        %v5918 = vunpack.c.l.bf16 %v5886
        %v5919 = vunpack.c.l.bf16 %v5887
        %v5920 = vunpack.c.l.bf16 %v5888
        %v5921 = vunpack.c.l.bf16 %v5889
        %v5922 = vunpack.c.l.bf16 %v5890
        %v5923 = vunpack.c.l.bf16 %v5891
        %v5924 = vunpack.c.l.bf16 %v5892
        %v5925 = vunpack.c.l.bf16 %v5893
        %v5926 = vunpack.c.l.bf16 %v5894
        %v5927 = vunpack.c.l.bf16 %v5895
        %v5928 = vunpack.c.l.bf16 %v5896
        %v5929 = vunpack.c.l.bf16 %v5897
        %v5930 = vunpack.c.l.bf16 %v5898
        %v5931 = vunpack.c.l.bf16 %v5899
        %v5932 = vadd.f32 %v5836, %v5900
        %v5933 = vadd.f32 %v5837, %v5901
        %v5934 = vadd.f32 %v5838, %v5902
        %v5935 = vadd.f32 %v5839, %v5903
        %v5936 = vadd.f32 %v5840, %v5904
        %v5937 = vadd.f32 %v5841, %v5905
        %v5938 = vadd.f32 %v5842, %v5906
        %v5939 = vadd.f32 %v5843, %v5907
        %v5940 = vadd.f32 %v5844, %v5908
        %v5941 = vadd.f32 %v5845, %v5909
        %v5942 = vadd.f32 %v5846, %v5910
        %v5943 = vadd.f32 %v5847, %v5911
        %v5944 = vadd.f32 %v5848, %v5912
        %v5945 = vadd.f32 %v5849, %v5913
        %v5946 = vadd.f32 %v5850, %v5914
        %v5947 = vadd.f32 %v5851, %v5915
        %v5948 = vadd.f32 %v5852, %v5916
        %v5949 = vadd.f32 %v5853, %v5917
        %v5950 = vadd.f32 %v5854, %v5918
        %v5951 = vadd.f32 %v5855, %v5919
        %v5952 = vadd.f32 %v5856, %v5920
        %v5953 = vadd.f32 %v5857, %v5921
        %v5954 = vadd.f32 %v5858, %v5922
        %v5955 = vadd.f32 %v5859, %v5923
        %v5956 = vadd.f32 %v5860, %v5924
        %v5957 = vadd.f32 %v5861, %v5925
        %v5958 = vadd.f32 %v5862, %v5926
        %v5959 = vadd.f32 %v5863, %v5927
        %v5960 = vadd.f32 %v5864, %v5928
        %v5961 = vadd.f32 %v5865, %v5929
        %v5962 = vadd.f32 %v5866, %v5930
        %v5963 = vadd.f32 %v5867, %v5931
        %v5964 = vmax.f32 %v5932, 0.0
        %v5965 = vmax.f32 %v5933, 0.0
        %v5966 = vmax.f32 %v5934, 0.0
        %v5967 = vmax.f32 %v5935, 0.0
        %v5968 = vmax.f32 %v5936, 0.0
        %v5969 = vmax.f32 %v5937, 0.0
        %v5970 = vmax.f32 %v5938, 0.0
        %v5971 = vmax.f32 %v5939, 0.0
        %v5972 = vmax.f32 %v5940, 0.0
        %v5973 = vmax.f32 %v5941, 0.0
        %v5974 = vmax.f32 %v5942, 0.0
        %v5975 = vmax.f32 %v5943, 0.0
        %v5976 = vmax.f32 %v5944, 0.0
        %v5977 = vmax.f32 %v5945, 0.0
        %v5978 = vmax.f32 %v5946, 0.0
        %v5979 = vmax.f32 %v5947, 0.0
        %v5980 = vmax.f32 %v5948, 0.0
        %v5981 = vmax.f32 %v5949, 0.0
        %v5982 = vmax.f32 %v5950, 0.0
        %v5983 = vmax.f32 %v5951, 0.0
        %v5984 = vmax.f32 %v5952, 0.0
        %v5985 = vmax.f32 %v5953, 0.0
        %v5986 = vmax.f32 %v5954, 0.0
        %v5987 = vmax.f32 %v5955, 0.0
        %v5988 = vmax.f32 %v5956, 0.0
        %v5989 = vmax.f32 %v5957, 0.0
        %v5990 = vmax.f32 %v5958, 0.0
        %v5991 = vmax.f32 %v5959, 0.0
        %v5992 = vmax.f32 %v5960, 0.0
        %v5993 = vmax.f32 %v5961, 0.0
        %v5994 = vmax.f32 %v5962, 0.0
        %v5995 = vmax.f32 %v5963, 0.0
        %v5996 = vpack.c.bf16 %v5965, %v5964
        %v5997 = vpack.c.bf16 %v5967, %v5966
        %v5998 = vpack.c.bf16 %v5969, %v5968
        %v5999 = vpack.c.bf16 %v5971, %v5970
        %v6000 = vpack.c.bf16 %v5973, %v5972
        %v6001 = vpack.c.bf16 %v5975, %v5974
        %v6002 = vpack.c.bf16 %v5977, %v5976
        %v6003 = vpack.c.bf16 %v5979, %v5978
        %v6004 = vpack.c.bf16 %v5981, %v5980
        %v6005 = vpack.c.bf16 %v5983, %v5982
        %v6006 = vpack.c.bf16 %v5985, %v5984
        %v6007 = vpack.c.bf16 %v5987, %v5986
        %v6008 = vpack.c.bf16 %v5989, %v5988
        %v6009 = vpack.c.bf16 %v5991, %v5990
        %v6010 = vpack.c.bf16 %v5993, %v5992
        %v6011 = vpack.c.bf16 %v5995, %v5994
        %v6028 = vunpack.c.l.b16 %v5996
        %v6029 = vunpack.c.h.b16 %v5996
        %v6030 = vunpack.c.l.b16 %v5997
        %v6031 = vunpack.c.h.b16 %v5997
        %v6032 = vunpack.c.l.b16 %v5998
        %v6033 = vunpack.c.h.b16 %v5998
        %v6034 = vunpack.c.l.b16 %v5999
        %v6035 = vunpack.c.h.b16 %v5999
        %v6036 = vunpack.c.l.b16 %v6000
        %v6037 = vunpack.c.h.b16 %v6000
        %v6038 = vunpack.c.l.b16 %v6001
        %v6039 = vunpack.c.h.b16 %v6001
        %v6040 = vunpack.c.l.b16 %v6002
        %v6041 = vunpack.c.h.b16 %v6002
        %v6042 = vunpack.c.l.b16 %v6003
        %v6043 = vunpack.c.h.b16 %v6003
        %v6044 = vunpack.c.l.b16 %v6004
        %v6045 = vunpack.c.h.b16 %v6004
        %v6046 = vunpack.c.l.b16 %v6005
        %v6047 = vunpack.c.h.b16 %v6005
        %v6048 = vunpack.c.l.b16 %v6006
        %v6049 = vunpack.c.h.b16 %v6006
        %v6050 = vunpack.c.l.b16 %v6007
        %v6051 = vunpack.c.h.b16 %v6007
        %v6052 = vunpack.c.l.b16 %v6008
        %v6053 = vunpack.c.h.b16 %v6008
        %v6054 = vunpack.c.l.b16 %v6009
        %v6055 = vunpack.c.h.b16 %v6009
        %v6056 = vunpack.c.l.b16 %v6010
        %v6057 = vunpack.c.h.b16 %v6010
        %v6058 = vunpack.c.l.b16 %v6011
        %v6059 = vunpack.c.h.b16 %v6011
        %v6060 = vpack.c.b16 %v6028, %v6028
        %v6061 = vpack.c.b16 %v6029, %v6029
        %v6062 = vpack.c.b16 %v6030, %v6030
        %v6063 = vpack.c.b16 %v6031, %v6031
        %v6064 = vpack.c.b16 %v6032, %v6032
        %v6065 = vpack.c.b16 %v6033, %v6033
        %v6066 = vpack.c.b16 %v6034, %v6034
        %v6067 = vpack.c.b16 %v6035, %v6035
        %v6068 = vpack.c.b16 %v6036, %v6036
        %v6069 = vpack.c.b16 %v6037, %v6037
        %v6070 = vpack.c.b16 %v6038, %v6038
        %v6071 = vpack.c.b16 %v6039, %v6039
        %v6072 = vpack.c.b16 %v6040, %v6040
        %v6073 = vpack.c.b16 %v6041, %v6041
        %v6074 = vpack.c.b16 %v6042, %v6042
        %v6075 = vpack.c.b16 %v6043, %v6043
        %v6076 = vpack.c.b16 %v6044, %v6044
        %v6077 = vpack.c.b16 %v6045, %v6045
        %v6078 = vpack.c.b16 %v6046, %v6046
        %v6079 = vpack.c.b16 %v6047, %v6047
        %v6080 = vpack.c.b16 %v6048, %v6048
        %v6081 = vpack.c.b16 %v6049, %v6049
        %v6082 = vpack.c.b16 %v6050, %v6050
        %v6083 = vpack.c.b16 %v6051, %v6051
        %v6084 = vpack.c.b16 %v6052, %v6052
        %v6085 = vpack.c.b16 %v6053, %v6053
        %v6086 = vpack.c.b16 %v6054, %v6054
        %v6087 = vpack.c.b16 %v6055, %v6055
        %v6088 = vpack.c.b16 %v6056, %v6056
        %v6089 = vpack.c.b16 %v6057, %v6057
        %v6090 = vpack.c.b16 %v6058, %v6058
        %v6091 = vpack.c.b16 %v6059, %v6059
        %6124 = vst [vmem:[%s470] sm:$0xf] %v6060
        %6125 = vst [vmem:[%s470 + $0x4] sm:$0xf] %v6061
        %6126 = vst [vmem:[%s470 + $0x8] sm:$0xf] %v6062
        %6127 = vst [vmem:[%s470 + $0xc] sm:$0xf] %v6063
        %6128 = vst [vmem:[%s470 + $0x10] sm:$0xf] %v6064
        %6129 = vst [vmem:[%s470 + $0x14] sm:$0xf] %v6065
        %6130 = vst [vmem:[%s470 + $0x18] sm:$0xf] %v6066
        %6131 = vst [vmem:[%s470 + $0x1c] sm:$0xf] %v6067
        %6132 = vst [vmem:[%s470 + $0x20] sm:$0xf] %v6068
        %6133 = vst [vmem:[%s470 + $0x24] sm:$0xf] %v6069
        %6134 = vst [vmem:[%s470 + $0x28] sm:$0xf] %v6070
        %6135 = vst [vmem:[%s470 + $0x2c] sm:$0xf] %v6071
        %6136 = vst [vmem:[%s470 + $0x30] sm:$0xf] %v6072
        %6137 = vst [vmem:[%s470 + $0x34] sm:$0xf] %v6073
        %6138 = vst [vmem:[%s470 + $0x38] sm:$0xf] %v6074
        %6139 = vst [vmem:[%s470 + $0x3c] sm:$0xf] %v6075
        %6140 = vst [vmem:[%s470 + $0x40] sm:$0xf] %v6076
        %6141 = vst [vmem:[%s470 + $0x44] sm:$0xf] %v6077
        %6142 = vst [vmem:[%s470 + $0x48] sm:$0xf] %v6078
        %6143 = vst [vmem:[%s470 + $0x4c] sm:$0xf] %v6079
        %6144 = vst [vmem:[%s470 + $0x50] sm:$0xf] %v6080
        %6145 = vst [vmem:[%s470 + $0x54] sm:$0xf] %v6081
        %6146 = vst [vmem:[%s470 + $0x58] sm:$0xf] %v6082
        %6147 = vst [vmem:[%s470 + $0x5c] sm:$0xf] %v6083
        %6148 = vst [vmem:[%s470 + $0x60] sm:$0xf] %v6084
        %6149 = vst [vmem:[%s470 + $0x64] sm:$0xf] %v6085
        %6150 = vst [vmem:[%s470 + $0x68] sm:$0xf] %v6086
        %6151 = vst [vmem:[%s470 + $0x6c] sm:$0xf] %v6087
        %6152 = vst [vmem:[%s470 + $0x70] sm:$0xf] %v6088
        %6153 = vst [vmem:[%s470 + $0x74] sm:$0xf] %v6089
        %6154 = vst [vmem:[%s470 + $0x78] sm:$0xf] %v6090
        %6155 = vst [vmem:[%s470 + $0x7c] sm:$0xf] %v6091
        %s6156 = sand.u32 %s277, 1
        %s6157 = scalar_lea.sflag [#allocation6], %s6156
        %s6158 = sand.u32 %s277, 1
        %s6159 = smul.addr %s6158, 128
        %s6160 = scalar_lea.vmem [#allocation9], %s6159
        // Predicated region
        $region69: #{tpu_custom_call.1} parent=55 // pred_check
          %p6161 = pneg %p287
        $region70: #{tpu_custom_call.1} parent=55 // pred_check_branch
          %6163 = sbr.rel (%p6161) target = $region72
        $region71: #{tpu_custom_call.1} parent=55 // pred_region
          %s6164 = smul.u32 16, %s34
          %s6166 = ssub.s32 2048, 2048
          %6167 = vsyncadd %s6157, %s6166
          %s6168 = smul.addr %s6164, 2
          %s6169 = smul.addr %s33, 32
          %s6170 = sadd.s32 %s6168, %s6169
          %s6171 = smul.addr %s6170, 64
          %s6172 = scalar_lea.hbm %s9, %s6171
          %s6173 = sshll.u32 %s6160, 4
          %s6174 = int_to_ptr.vmem [resolvable:$true] %s6173
          %6179 = dma.vmem_to_hbm [thread:$0]  %s6174, 2048, %s6172, %s6157, 64, 64, 4
        $region72: #{tpu_custom_call.1} parent=55 // pred_fallthru
          _
      $region56: #{tpu_custom_call.1} parent=5 // pred_fallthru
        _
      %p6180 = scmp.le.s32.totalorder 2, %s24
      // Predicated region
      $region73: #{tpu_custom_call.1} parent=5 // pred_check
        %p6181 = pneg %p6180
      $region74: #{tpu_custom_call.1} parent=5 // pred_check_branch
        %6183 = sbr.rel (%p6181) target = $region76
      $region75: #{tpu_custom_call.1} parent=5 // pred_region
        %s6184 = ssub.s32 %s24, 2
        // Predicated region
        $region77: #{tpu_custom_call.1} parent=75 // pred_check
          %p6185 = pneg %p293
        $region78: #{tpu_custom_call.1} parent=75 // pred_check_branch
          %6187 = sbr.rel (%p6185) target = $region80
        $region79: #{tpu_custom_call.1} parent=75 // pred_region
          %s6188 = sand.u32 %s278, 1
          %s6189 = scalar_lea.sflag [#allocation6], %s6188
          %s6190 = sand.u32 %s278, 1
          %s6191 = smul.addr %s6190, 128
          %s6192 = scalar_lea.vmem [#allocation9], %s6191
          %6193 = dma.done %s6189, 2048
        $region80: #{tpu_custom_call.1} parent=75 // pred_fallthru
          _
      $region76: #{tpu_custom_call.1} parent=5 // pred_fallthru
        _
    $region6: #{tpu_custom_call.1} parent=1 // loop_footer
      %s28 = sadd.s32 1, %s24
    $region7: #{tpu_custom_call.1} parent=1 // loop_footer_branch
      %23 = sbr.rel target = $region3
    $region8: #{tpu_custom_call.1} parent=1 // loop_exit
      _
    %6194 = vsyncpa [#allocation5], 1
    %s6195 = scalar_lea.sflag [#allocation5], 1
    %6196 = vsyncpa %s6195, 1
    %6197 = vsyncpa [#allocation8], 1
    %s6198 = scalar_lea.sflag [#allocation8], 1
    %6199 = vsyncpa %s6198, 1
    %6200 = vsyncpa [#allocation6], 1
    %s6201 = scalar_lea.sflag [#allocation6], 1
    %6202 = vsyncpa %s6201, 1

</llo_original>
